<compile_context>
chip_gen: v7x
topology: tpu7x:2x2x1
jax: 0.10.0
libtpu: 0.0.40
codegen_flags: <defaults>
</compile_context>

<pallas_src>
import functools

import jax
import jax.numpy as jnp
from jax.experimental import pallas as pl
from jax.experimental.pallas import tpu as pltpu

LANE = 128
DIM = 128  # MXMNet default hidden dim (lane-dense)


def _round_up(x, m):
    return ((x + m - 1) // m) * m


@functools.lru_cache(maxsize=1)
def _vmem_limit_bytes():
    # Generation-aware scoped-VMEM budget (v7x: 64 MiB physical, v5e/v6e: 128 MiB).
    cap = 64 * 1024 * 1024
    try:
        cap = int(getattr(pltpu.get_tpu_info(), "vmem_capacity_bytes", cap))
    except Exception:
        pass
    return int(min(cap * 0.6, 100 * 1024 * 1024))


def _pick_tile_m(n):
    # Largest row tile that still leaves >=2 grid steps on the parallel axis.
    for t in (512, 256, 128):
        if n % t == 0 and n // t >= 2:
            return t
    return 128


def _pick_tile_k(n):
    # Reduction (adjacency-column) axis: as large as divides n.
    for t in (2048, 1024, 512, 256, 128):
        if n % t == 0:
            return t
    return 128


# -----------------------------------------------------------------------------
# Kernel 1: fused linear   Y = relu?(X @ W + b) [+ res]
# -----------------------------------------------------------------------------
def _linear_kernel(*refs, apply_relu, has_res):
    if has_res:
        x_ref, w_ref, b_ref, res_ref, o_ref = refs
    else:
        x_ref, w_ref, b_ref, o_ref = refs
        res_ref = None
    acc = jnp.dot(x_ref[...], w_ref[...], preferred_element_type=jnp.float32)
    acc = acc + b_ref[...].astype(jnp.float32)
    if apply_relu:
        acc = jnp.maximum(acc, 0.0)
    if res_ref is not None:
        acc = acc + res_ref[...].astype(jnp.float32)
    o_ref[...] = acc.astype(o_ref.dtype)


def linear(x, w, b, *, apply_relu, res=None):
    n, c_in = x.shape
    c_out = w.shape[1]
    tile_m = _pick_tile_m(n)
    assert n % tile_m == 0 and c_out % LANE == 0
    in_specs = [
        pl.BlockSpec((tile_m, c_in), lambda i: (i, 0)),   # row tile of X
        pl.BlockSpec((c_in, c_out), lambda i: (0, 0)),    # full W (resident)
        pl.BlockSpec((1, c_out), lambda i: (0, 0)),       # bias
    ]
    args = [x, w, b]
    if res is not None:
        in_specs.append(pl.BlockSpec((tile_m, c_out), lambda i: (i, 0)))
        args.append(res)
    kernel = functools.partial(_linear_kernel, apply_relu=apply_relu,
                               has_res=res is not None)
    return pl.pallas_call(
        kernel,
        out_shape=jax.ShapeDtypeStruct((n, c_out), jnp.bfloat16),
        grid=(n // tile_m,),
        in_specs=in_specs,
        out_specs=pl.BlockSpec((tile_m, c_out), lambda i: (i, 0)),
        compiler_params=pltpu.CompilerParams(
            dimension_semantics=("parallel",),
            vmem_limit_bytes=_vmem_limit_bytes(),
        ),
    )(*args)


# -----------------------------------------------------------------------------
# Kernel 2: fused gated aggregation
#   Y = (mask * gate [+ I]) @ (X @ W_msg + b_msg) + skip
#   - grid (row-tiles, K-tiles); K (adjacency columns) reduces into an f32
#     VMEM accumulator (@pl.when init / finalize)
#   - adjacency is built in-register from mask/gate; message projection is
#     done per K tile with W_msg resident in VMEM
# -----------------------------------------------------------------------------
def _aggregate_kernel(mask_ref, gate_ref, x_ref, wmsg_ref, bmsg_ref, skip_ref,
                      o_ref, acc_ref, *, add_eye):
    k = pl.program_id(1)

    @pl.when(k == 0)
    def _():
        acc_ref[...] = jnp.zeros_like(acc_ref)

    # Message projection for this K tile.
    m = jnp.dot(x_ref[...], wmsg_ref[...], preferred_element_type=jnp.float32)
    m = (m + bmsg_ref[...].astype(jnp.float32)).astype(jnp.bfloat16)

    # Gated adjacency tile in-register.
    a = mask_ref[...] * gate_ref[...]
    if add_eye:
        tm, tk = mask_ref.shape
        row = jax.lax.broadcasted_iota(jnp.int32, (tm, tk), 0) + pl.program_id(0) * tm
        col = jax.lax.broadcasted_iota(jnp.int32, (tm, tk), 1) + k * tk
        a = a + (row == col).astype(a.dtype)     # self-loop passes h_i through

    acc_ref[...] += jnp.dot(a, m, preferred_element_type=jnp.float32)

    @pl.when(k == pl.num_programs(1) - 1)
    def _():
        o_ref[...] = (acc_ref[...] + skip_ref[...].astype(jnp.float32)).astype(o_ref.dtype)


def aggregate(mask, gate, x, w_msg, b_msg, skip, *, add_eye):
    n = mask.shape[0]
    c = w_msg.shape[1]
    tile_m = _pick_tile_m(n)
    tile_k = _pick_tile_k(n)
    assert n % tile_m == 0 and n % tile_k == 0 and c % LANE == 0
    return pl.pallas_call(
        functools.partial(_aggregate_kernel, add_eye=add_eye),
        out_shape=jax.ShapeDtypeStruct((n, c), jnp.bfloat16),
        grid=(n // tile_m, n // tile_k),
        in_specs=[
            pl.BlockSpec((tile_m, tile_k), lambda i, k: (i, k)),  # mask tile
            pl.BlockSpec((tile_m, tile_k), lambda i, k: (i, k)),  # gate tile
            pl.BlockSpec((tile_k, c), lambda i, k: (k, 0)),       # msg input K tile
            pl.BlockSpec((c, c), lambda i, k: (0, 0)),            # W_msg (resident)
            pl.BlockSpec((1, c), lambda i, k: (0, 0)),            # b_msg
            pl.BlockSpec((tile_m, c), lambda i, k: (i, 0)),       # skip
        ],
        out_specs=pl.BlockSpec((tile_m, c), lambda i, k: (i, 0)),
        scratch_shapes=[pltpu.VMEM((tile_m, c), jnp.float32)],
        compiler_params=pltpu.CompilerParams(
            dimension_semantics=("parallel", "arbitrary"),
            vmem_limit_bytes=_vmem_limit_bytes(),
        ),
    )(mask, gate, x, w_msg, b_msg, skip)


# -----------------------------------------------------------------------------
# Kernel 3: fused per-layer scalar head
#   node_out += relu(h @ W_o1 + b_o1) @ w_o2        (w_o2 as a lane reduce)
#   accumulated in place via input_output_aliases
# -----------------------------------------------------------------------------
def _head_kernel(h_ref, w1_ref, b1_ref, w2_ref, acc_ref, o_ref):
    t1 = jnp.dot(h_ref[...], w1_ref[...], preferred_element_type=jnp.float32)
    t1 = jnp.maximum(t1 + b1_ref[...].astype(jnp.float32), 0.0)
    s = jnp.sum(t1 * w2_ref[...].astype(jnp.float32), axis=-1, keepdims=True)
    o_ref[...] = acc_ref[...] + s


def output_head(h, w1, b1, w2_row, node_out):
    n, c = h.shape
    tile_m = _pick_tile_m(n)
    return pl.pallas_call(
        _head_kernel,
        out_shape=jax.ShapeDtypeStruct((n, 1), jnp.float32),
        grid=(n // tile_m,),
        in_specs=[
            pl.BlockSpec((tile_m, c), lambda i: (i, 0)),
            pl.BlockSpec((c, c), lambda i: (0, 0)),
            pl.BlockSpec((1, c), lambda i: (0, 0)),
            pl.BlockSpec((1, c), lambda i: (0, 0)),
            pl.BlockSpec((tile_m, 1), lambda i: (i, 0)),
        ],
        out_specs=pl.BlockSpec((tile_m, 1), lambda i: (i, 0)),
        input_output_aliases={4: 0},
        compiler_params=pltpu.CompilerParams(
            dimension_semantics=("parallel",),
            vmem_limit_bytes=_vmem_limit_bytes(),
        ),
    )(h, w1, b1, w2_row, node_out)


# -----------------------------------------------------------------------------
# Plain-JAX graph preprocessing (radius graph, bond graph, Bessel RBF)
# -----------------------------------------------------------------------------
def bessel_rbf(dist, cutoff, num_radial):
    k = jnp.arange(1, num_radial + 1, dtype=jnp.float32)
    d = jnp.maximum(dist, 1e-6)[..., None]
    return jnp.sqrt(2.0 / cutoff) * jnp.sin(k * jnp.pi * d / cutoff) / d


def build_dense_graphs(pos, batch, edge_index, n_pad, cutoff):
    n = pos.shape[0]
    pos_p = jnp.pad(pos, ((0, n_pad - n), (0, 0)))
    batch_p = jnp.pad(batch, (0, n_pad - n), constant_values=-1)

    diff = pos_p[:, None, :] - pos_p[None, :, :]
    dist = jnp.sqrt(jnp.sum(diff * diff, axis=-1) + 1e-12)
    same = (batch_p[:, None] == batch_p[None, :]) & (batch_p[:, None] >= 0)
    eye = jnp.eye(n_pad, dtype=bool)

    mask_g = (same & (dist <= cutoff) & (~eye)).astype(jnp.bfloat16)   # radius graph
    src, dst = edge_index[0], edge_index[1]                            # bond graph (aggregate at dst)
    mask_l = jnp.zeros((n_pad, n_pad), jnp.bfloat16).at[dst, src].set(1.0)
    return mask_g, mask_l, dist


# -----------------------------------------------------------------------------
# Parameters
# -----------------------------------------------------------------------------
def glorot(key, shape):
    limit = jnp.sqrt(6.0 / (shape[0] + shape[1]))
    return jax.random.uniform(key, shape, jnp.float32, -limit, limit)


def init_params(key, num_atom_types, dim, n_layer, num_radial):
    keys = jax.random.split(key, 1 + n_layer)
    emb = jax.random.uniform(keys[0], (num_atom_types, dim), jnp.float32,
                             -jnp.sqrt(3.0), jnp.sqrt(3.0))
    layers = []
    for l in range(n_layer):
        lk = jax.random.split(keys[1 + l], 9)
        layers.append(dict(
            w_h=glorot(lk[0], (dim, dim)),     b_h=jnp.zeros((1, dim), jnp.float32),
            w_msg_g=glorot(lk[1], (dim, dim)), b_msg_g=jnp.zeros((1, dim), jnp.float32),
            w_rbf_g=glorot(lk[2], (num_radial, 1)),
            w_upd_g=glorot(lk[3], (dim, dim)), b_upd_g=jnp.zeros((1, dim), jnp.float32),
            w_msg_l=glorot(lk[4], (dim, dim)), b_msg_l=jnp.zeros((1, dim), jnp.float32),
            w_rbf_l=glorot(lk[5], (num_radial, 1)),
            w_upd_l=glorot(lk[6], (dim, dim)), b_upd_l=jnp.zeros((1, dim), jnp.float32),
            w_o1=glorot(lk[7], (dim, dim)),    b_o1=jnp.zeros((1, dim), jnp.float32),
            w_o2=glorot(lk[8], (dim, 1)),
        ))
    return dict(emb=emb, layers=layers)


# -----------------------------------------------------------------------------
# MXMNet-style forward
# -----------------------------------------------------------------------------
def mxmnet_forward(z, pos, edge_index, batch, params, *, num_graphs,
                   cutoff=5.0, num_radial=16):
    n = z.shape[0]
    # >= 2*LANE so every kernel's parallel grid axis has >=2 steps (feeds both
    # v7x TensorCores, amortizes launch overhead elsewhere).
    n_pad = max(_round_up(n, LANE), 2 * LANE)

    mask_g, mask_l, dist = build_dense_graphs(pos, batch, edge_index, n_pad, cutoff)

    # All layers' RBF edge gates in a single matmul over the rbf tensor;
    # rbf ([n_pad, n_pad, K], the 16x larger tensor) is then freed.
    rbf = bessel_rbf(dist, cutoff, num_radial)
    w_rbf_all = jnp.concatenate(
        [jnp.concatenate([p["w_rbf_g"], p["w_rbf_l"]], axis=1)
         for p in params["layers"]], axis=1)                     # [K, 2*n_layer]
    gates = jnp.moveaxis(rbf @ w_rbf_all, -1, 0).astype(jnp.bfloat16)
    del rbf, dist

    z_p = jnp.pad(z, (0, n_pad - n))                             # padded atoms -> type 0
    h = params["emb"][z_p].astype(jnp.bfloat16)                  # [n_pad, dim]
    node_out = jnp.zeros((n_pad, 1), jnp.float32)
    bf = lambda w: w.astype(jnp.bfloat16)

    for l, p in enumerate(params["layers"]):
        gate_g, gate_l = gates[2 * l], gates[2 * l + 1]

        # ---- Global message passing (simplified MXMNet Global_MP) ----
        res = h
        h1 = linear(h, bf(p["w_h"]), p["b_h"], apply_relu=True)
        # h2 = (mask_g*gate_g + I) @ (h1 @ W_msg_g + b) + h1  (one fused kernel)
        h2 = aggregate(mask_g, gate_g, h1, bf(p["w_msg_g"]), p["b_msg_g"], h1,
                       add_eye=True)
        h = linear(h2, bf(p["w_upd_g"]), p["b_upd_g"], apply_relu=True, res=res)

        # ---- Local message passing over the bond graph ----
        # TODO(synk): spherical-basis (angle) two-hop messages of Local_MP are omitted.
        res = h
        h2 = aggregate(mask_l, gate_l, h, bf(p["w_msg_l"]), p["b_msg_l"], h,
                       add_eye=False)
        h = linear(h2, bf(p["w_upd_l"]), p["b_upd_l"], apply_relu=True, res=res)

        # ---- per-layer scalar output head, accumulated in place ----
        node_out = output_head(h, bf(p["w_o1"]), p["b_o1"], p["w_o2"].T, node_out)

    # Global add-pool over molecules -> one scalar per graph.
    y = jnp.zeros((num_graphs,), jnp.float32).at[batch].add(node_out[:n, 0])
    return y


# -----------------------------------------------------------------------------
if __name__ == "__main__":
    key = jax.random.PRNGKey(0)

    num_graphs = 2
    atoms_per_graph = 16
    n = num_graphs * atoms_per_graph
    bonds_per_graph = 20
    dim = DIM            # 128, MXMNet default hidden dim (lane-dense)
    n_layer = 2
    num_radial = 16
    cutoff = 5.0
    num_atom_types = 5   # e.g. H, C, N, O, F

    k_z, k_pos, k_e, k_p = jax.random.split(key, 4)
    z = jax.random.randint(k_z, (n,), 0, num_atom_types, jnp.int32)
    pos = jax.random.normal(k_pos, (n, 3), jnp.float32) * 2.0
    batch = jnp.repeat(jnp.arange(num_graphs, dtype=jnp.int32), atoms_per_graph)

    # Random intra-molecule bonds, made bidirectional.
    k_s, k_d = jax.random.split(k_e)
    src_local = jax.random.randint(k_s, (num_graphs, bonds_per_graph), 0,
                                   atoms_per_graph, jnp.int32)
    dst_local = jax.random.randint(k_d, (num_graphs, bonds_per_graph), 0,
                                   atoms_per_graph, jnp.int32)
    offset = (jnp.arange(num_graphs, dtype=jnp.int32) * atoms_per_graph)[:, None]
    src = (src_local + offset).reshape(-1)
    dst = (dst_local + offset).reshape(-1)
    edge_index = jnp.stack([jnp.concatenate([src, dst]),
                            jnp.concatenate([dst, src])], axis=0)   # [2, E]

    params = init_params(k_p, num_atom_types, dim, n_layer, num_radial)

    fwd = jax.jit(functools.partial(mxmnet_forward, num_graphs=num_graphs,
                                    cutoff=cutoff, num_radial=num_radial))
    y = fwd(z, pos, edge_index, batch, params)
    jax.block_until_ready(y)
    assert y.shape == (num_graphs,)
    assert bool(jnp.all(jnp.isfinite(y)))
    print("KERNEL_OK")
</pallas_src>

<mosaic_0001>
module attributes {stable_mosaic.version = 11 : i64} {
  func.func private @main(%arg0: i32) attributes {dimension_semantics = [#tpu.dimension_semantics<core_parallel>], iteration_bounds = array<i64: 2>, tpu.core_type = #tpu.core_type<sc_scalar_subcore>, window_params = []} {
    return
  }
}

module attributes {stable_mosaic.version = 11 : i64} {
  func.func private @main(%arg0: i32) attributes {dimension_semantics = [#tpu.dimension_semantics<core_parallel>], iteration_bounds = array<i64: 2>, tpu.core_type = #tpu.core_type<sc_scalar_subcore>, window_params = []} {
    return
  }
}

module attributes {stable_mosaic.version = 11 : i64} {
  func.func @_linear_kernel(%arg0: i32, %arg1: memref<128x128xbf16, #tpu.memory_space<vmem>>, %arg2: memref<128x128xbf16, #tpu.memory_space<vmem>>, %arg3: memref<1x128xf32, #tpu.memory_space<vmem>>, %arg4: memref<128x128xbf16, #tpu.memory_space<vmem>>) attributes {dimension_semantics = [#tpu.dimension_semantics<parallel>], iteration_bounds = array<i64: 2>, scalar_prefetch = 0 : i64, scratch_operands = 0 : i64, tpu.core_type = #tpu.core_type<tc>, window_params = [{transform_indices = @transform_0, window_bounds = array<i64: 128, 128>}, {pipeline_mode = #tpu.pipeline_mode<synchronous>, transform_indices = @transform_1, window_bounds = array<i64: 128, 128>}, {pipeline_mode = #tpu.pipeline_mode<synchronous>, transform_indices = @transform_2, window_bounds = array<i64: 1, 128>}, {transform_indices = @transform_3, window_bounds = array<i64: 128, 128>}]} {
    %c0 = arith.constant 0 : index
    %c0_0 = arith.constant 0 : index
    %0 = vector.load %arg1[%c0, %c0_0] : memref<128x128xbf16, #tpu.memory_space<vmem>>, vector<128x128xbf16>
    %c0_1 = arith.constant 0 : index
    %c0_2 = arith.constant 0 : index
    %1 = vector.load %arg2[%c0_1, %c0_2] : memref<128x128xbf16, #tpu.memory_space<vmem>>, vector<128x128xbf16>
    %cst = arith.constant dense<0.000000e+00> : vector<128x128xf32>
    %2 = tpu.matmul %0, %1, %cst {dimension_numbers = #tpu.dot_dimension_numbers<[1], [0], [0], [1], [0, 0, 1, 1], [], []>} : vector<128x128xbf16>, vector<128x128xbf16>, vector<128x128xf32> -> vector<128x128xf32>
    %c0_3 = arith.constant 0 : index
    %c0_4 = arith.constant 0 : index
    %3 = vector.load %arg3[%c0_3, %c0_4] : memref<1x128xf32, #tpu.memory_space<vmem>>, vector<1x128xf32>
    %4 = vector.broadcast %3 : vector<1x128xf32> to vector<128x128xf32>
    %5 = arith.addf %2, %4 : vector<128x128xf32>
    %cst_5 = arith.constant 0.000000e+00 : f32
    %6 = vector.broadcast %cst_5 : f32 to vector<128x128xf32>
    %7 = arith.maximumf %5, %6 : vector<128x128xf32>
    %8 = arith.truncf %7 : vector<128x128xf32> to vector<128x128xbf16>
    %c0_6 = arith.constant 0 : index
    %c0_7 = arith.constant 0 : index
    %9 = vector.load %arg4[%c0_6, %c0_7] : memref<128x128xbf16, #tpu.memory_space<vmem>>, vector<128x128xbf16>
    tpu.vector_store %arg4[%c0_6, %c0_7], %8 {strides = array<i32>} : memref<128x128xbf16, #tpu.memory_space<vmem>>, vector<128x128xbf16>,
    return
  }
  func.func @transform_0(%arg0: i32) -> (i32, i32) {
    %c0_i32 = arith.constant 0 : i32
    %c0_i32_0 = arith.constant 0 : i32
    return %arg0, %c0_i32 : i32, i32
  }
  func.func @transform_1(%arg0: i32) -> (i32, i32) {
    %c0_i32 = arith.constant 0 : i32
    %c0_i32_0 = arith.constant 0 : i32
    %c0_i32_1 = arith.constant 0 : i32
    return %c0_i32, %c0_i32_0 : i32, i32
  }
  func.func @transform_2(%arg0: i32) -> (i32, i32) {
    %c0_i32 = arith.constant 0 : i32
    %c0_i32_0 = arith.constant 0 : i32
    %c0_i32_1 = arith.constant 0 : i32
    return %c0_i32, %c0_i32_0 : i32, i32
  }
  func.func @transform_3(%arg0: i32) -> (i32, i32) {
    %c0_i32 = arith.constant 0 : i32
    %c0_i32_0 = arith.constant 0 : i32
    return %arg0, %c0_i32 : i32, i32
  }
}

module attributes {stable_mosaic.version = 11 : i64} {
  func.func @_aggregate_kernel(%arg0: i32, %arg1: i32, %arg2: memref<128x256xbf16, #tpu.memory_space<vmem>>, %arg3: memref<128x256xbf16, #tpu.memory_space<vmem>>, %arg4: memref<256x128xbf16, #tpu.memory_space<vmem>>, %arg5: memref<128x128xbf16, #tpu.memory_space<vmem>>, %arg6: memref<1x128xf32, #tpu.memory_space<vmem>>, %arg7: memref<128x128xbf16, #tpu.memory_space<vmem>>, %arg8: memref<128x128xbf16, #tpu.memory_space<vmem>>, %arg9: memref<128x128xf32, #tpu.memory_space<vmem>>) attributes {dimension_semantics = [#tpu.dimension_semantics<parallel>, #tpu.dimension_semantics<arbitrary>], iteration_bounds = array<i64: 2, 1>, scalar_prefetch = 0 : i64, scratch_operands = 1 : i64, tpu.core_type = #tpu.core_type<tc>, window_params = [{transform_indices = @transform_0, window_bounds = array<i64: 128, 256>}, {transform_indices = @transform_1, window_bounds = array<i64: 128, 256>}, {transform_indices = @transform_2, window_bounds = array<i64: 256, 128>}, {pipeline_mode = #tpu.pipeline_mode<synchronous>, transform_indices = @transform_3, window_bounds = array<i64: 128, 128>}, {pipeline_mode = #tpu.pipeline_mode<synchronous>, transform_indices = @transform_4, window_bounds = array<i64: 1, 128>}, {transform_indices = @transform_5, window_bounds = array<i64: 128, 128>}, {transform_indices = @transform_6, window_bounds = array<i64: 128, 128>}]} {
    %c0_i32 = arith.constant 0 : i32
    %0 = arith.cmpi eq, %arg1, %c0_i32 : i32
    %1 = arith.extui %0 : i1 to i32
    %c0_i32_0 = arith.constant 0 : i32
    %2 = arith.cmpi ne, %1, %c0_i32_0 : i32
    scf.if %2 {
      %cst_17 = arith.constant 0.000000e+00 : f32
      %33 = vector.broadcast %cst_17 : f32 to vector<128x128xf32>
      %c0_18 = arith.constant 0 : index
      %c0_19 = arith.constant 0 : index
      %34 = vector.load %arg9[%c0_18, %c0_19] : memref<128x128xf32, #tpu.memory_space<vmem>>, vector<128x128xf32>
      tpu.vector_store %arg9[%c0_18, %c0_19], %33 {strides = array<i32>} : memref<128x128xf32, #tpu.memory_space<vmem>>, vector<128x128xf32>,
    } else {
    }
    %c0 = arith.constant 0 : index
    %c0_1 = arith.constant 0 : index
    %3 = vector.load %arg4[%c0, %c0_1] : memref<256x128xbf16, #tpu.memory_space<vmem>>, vector<256x128xbf16>
    %c0_2 = arith.constant 0 : index
    %c0_3 = arith.constant 0 : index
    %4 = vector.load %arg5[%c0_2, %c0_3] : memref<128x128xbf16, #tpu.memory_space<vmem>>, vector<128x128xbf16>
    %cst = arith.constant dense<0.000000e+00> : vector<256x128xf32>
    %5 = tpu.matmul %3, %4, %cst {dimension_numbers = #tpu.dot_dimension_numbers<[1], [0], [0], [1], [0, 0, 1, 1], [], []>} : vector<256x128xbf16>, vector<128x128xbf16>, vector<256x128xf32> -> vector<256x128xf32>
    %c0_4 = arith.constant 0 : index
    %c0_5 = arith.constant 0 : index
    %6 = vector.load %arg6[%c0_4, %c0_5] : memref<1x128xf32, #tpu.memory_space<vmem>>, vector<1x128xf32>
    %7 = vector.broadcast %6 : vector<1x128xf32> to vector<256x128xf32>
    %8 = arith.addf %5, %7 : vector<256x128xf32>
    %9 = arith.truncf %8 : vector<256x128xf32> to vector<256x128xbf16>
    %c0_6 = arith.constant 0 : index
    %c0_7 = arith.constant 0 : index
    %10 = vector.load %arg2[%c0_6, %c0_7] : memref<128x256xbf16, #tpu.memory_space<vmem>>, vector<128x256xbf16>
    %c0_8 = arith.constant 0 : index
    %c0_9 = arith.constant 0 : index
    %11 = vector.load %arg3[%c0_8, %c0_9] : memref<128x256xbf16, #tpu.memory_space<vmem>>, vector<128x256xbf16>
    %12 = arith.mulf %10, %11 : vector<128x256xbf16>
    %13 = tpu.iota {dimensions = array<i32: 0>} : vector<128x256xi32>
    %c128_i32 = arith.constant 128 : i32
    %14 = arith.muli %arg0, %c128_i32 : i32
    %15 = vector.broadcast %14 : i32 to vector<128x256xi32>
    %16 = arith.addi %13, %15 : vector<128x256xi32>
    %17 = tpu.iota {dimensions = array<i32: 1>} : vector<128x256xi32>
    %c256_i32 = arith.constant 256 : i32
    %18 = arith.muli %arg1, %c256_i32 : i32
    %19 = vector.broadcast %18 : i32 to vector<128x256xi32>
    %20 = arith.addi %17, %19 : vector<128x256xi32>
    %21 = arith.cmpi eq, %16, %20 : vector<128x256xi32>
    %22 = arith.extui %21 : vector<128x256xi1> to vector<128x256xi32>
    %23 = arith.sitofp %22 : vector<128x256xi32> to vector<128x256xf32>
    %24 = arith.truncf %23 : vector<128x256xf32> to vector<128x256xbf16>
    %25 = arith.addf %12, %24 : vector<128x256xbf16>
    %c0_10 = arith.constant 0 : index
    %c0_11 = arith.constant 0 : index
    %26 = vector.load %arg9[%c0_10, %c0_11] : memref<128x128xf32, #tpu.memory_space<vmem>>, vector<128x128xf32>
    %cst_12 = arith.constant dense<0.000000e+00> : vector<128x128xf32>
    %27 = tpu.matmul %25, %9, %cst_12 {dimension_numbers = #tpu.dot_dimension_numbers<[1], [0], [0], [1], [0, 0, 1, 1], [], []>} : vector<128x256xbf16>, vector<256x128xbf16>, vector<128x128xf32> -> vector<128x128xf32>
    %28 = arith.addf %26, %27 : vector<128x128xf32>
    %c0_13 = arith.constant 0 : index
    %c0_14 = arith.constant 0 : index
    %29 = vector.load %arg9[%c0_13, %c0_14] : memref<128x128xf32, #tpu.memory_space<vmem>>, vector<128x128xf32>
    tpu.vector_store %arg9[%c0_13, %c0_14], %28 {strides = array<i32>} : memref<128x128xf32, #tpu.memory_space<vmem>>, vector<128x128xf32>,
    %c0_i32_15 = arith.constant 0 : i32
    %30 = arith.cmpi eq, %arg1, %c0_i32_15 : i32
    %31 = arith.extui %30 : i1 to i32
    %c0_i32_16 = arith.constant 0 : i32
    %32 = arith.cmpi ne, %31, %c0_i32_16 : i32
    scf.if %32 {
      %c0_17 = arith.constant 0 : index
      %c0_18 = arith.constant 0 : index
      %33 = vector.load %arg9[%c0_17, %c0_18] : memref<128x128xf32, #tpu.memory_space<vmem>>, vector<128x128xf32>
      %c0_19 = arith.constant 0 : index
      %c0_20 = arith.constant 0 : index
      %34 = vector.load %arg7[%c0_19, %c0_20] : memref<128x128xbf16, #tpu.memory_space<vmem>>, vector<128x128xbf16>
      %35 = arith.extf %34 : vector<128x128xbf16> to vector<128x128xf32>
      %36 = arith.addf %33, %35 : vector<128x128xf32>
      %37 = arith.truncf %36 : vector<128x128xf32> to vector<128x128xbf16>
      %c0_21 = arith.constant 0 : index
      %c0_22 = arith.constant 0 : index
      %38 = vector.load %arg8[%c0_21, %c0_22] : memref<128x128xbf16, #tpu.memory_space<vmem>>, vector<128x128xbf16>
      tpu.vector_store %arg8[%c0_21, %c0_22], %37 {strides = array<i32>} : memref<128x128xbf16, #tpu.memory_space<vmem>>, vector<128x128xbf16>,
    } else {
    }
    return
  }
  func.func @transform_0(%arg0: i32, %arg1: i32) -> (i32, i32) {
    %c0_i32 = arith.constant 0 : i32
    return %arg0, %arg1 : i32, i32
  }
  func.func @transform_1(%arg0: i32, %arg1: i32) -> (i32, i32) {
    %c0_i32 = arith.constant 0 : i32
    return %arg0, %arg1 : i32, i32
  }
  func.func @transform_2(%arg0: i32, %arg1: i32) -> (i32, i32) {
    %c0_i32 = arith.constant 0 : i32
    %c0_i32_0 = arith.constant 0 : i32
    return %arg1, %c0_i32 : i32, i32
  }
  func.func @transform_3(%arg0: i32, %arg1: i32) -> (i32, i32) {
    %c0_i32 = arith.constant 0 : i32
    %c0_i32_0 = arith.constant 0 : i32
    %c0_i32_1 = arith.constant 0 : i32
    return %c0_i32, %c0_i32_0 : i32, i32
  }
  func.func @transform_4(%arg0: i32, %arg1: i32) -> (i32, i32) {
    %c0_i32 = arith.constant 0 : i32
    %c0_i32_0 = arith.constant 0 : i32
    %c0_i32_1 = arith.constant 0 : i32
    return %c0_i32, %c0_i32_0 : i32, i32
  }
  func.func @transform_5(%arg0: i32, %arg1: i32) -> (i32, i32) {
    %c0_i32 = arith.constant 0 : i32
    %c0_i32_0 = arith.constant 0 : i32
    return %arg0, %c0_i32 : i32, i32
  }
  func.func @transform_6(%arg0: i32, %arg1: i32) -> (i32, i32) {
    %c0_i32 = arith.constant 0 : i32
    %c0_i32_0 = arith.constant 0 : i32
    return %arg0, %c0_i32 : i32, i32
  }
}

module attributes {stable_mosaic.version = 11 : i64} {
  func.func @_linear_kernel(%arg0: i32, %arg1: memref<128x128xbf16, #tpu.memory_space<vmem>>, %arg2: memref<128x128xbf16, #tpu.memory_space<vmem>>, %arg3: memref<1x128xf32, #tpu.memory_space<vmem>>, %arg4: memref<128x128xbf16, #tpu.memory_space<vmem>>, %arg5: memref<128x128xbf16, #tpu.memory_space<vmem>>) attributes {dimension_semantics = [#tpu.dimension_semantics<parallel>], iteration_bounds = array<i64: 2>, scalar_prefetch = 0 : i64, scratch_operands = 0 : i64, tpu.core_type = #tpu.core_type<tc>, window_params = [{transform_indices = @transform_0, window_bounds = array<i64: 128, 128>}, {pipeline_mode = #tpu.pipeline_mode<synchronous>, transform_indices = @transform_1, window_bounds = array<i64: 128, 128>}, {pipeline_mode = #tpu.pipeline_mode<synchronous>, transform_indices = @transform_2, window_bounds = array<i64: 1, 128>}, {transform_indices = @transform_3, window_bounds = array<i64: 128, 128>}, {transform_indices = @transform_4, window_bounds = array<i64: 128, 128>}]} {
    %c0 = arith.constant 0 : index
    %c0_0 = arith.constant 0 : index
    %0 = vector.load %arg1[%c0, %c0_0] : memref<128x128xbf16, #tpu.memory_space<vmem>>, vector<128x128xbf16>
    %c0_1 = arith.constant 0 : index
    %c0_2 = arith.constant 0 : index
    %1 = vector.load %arg2[%c0_1, %c0_2] : memref<128x128xbf16, #tpu.memory_space<vmem>>, vector<128x128xbf16>
    %cst = arith.constant dense<0.000000e+00> : vector<128x128xf32>
    %2 = tpu.matmul %0, %1, %cst {dimension_numbers = #tpu.dot_dimension_numbers<[1], [0], [0], [1], [0, 0, 1, 1], [], []>} : vector<128x128xbf16>, vector<128x128xbf16>, vector<128x128xf32> -> vector<128x128xf32>
    %c0_3 = arith.constant 0 : index
    %c0_4 = arith.constant 0 : index
    %3 = vector.load %arg3[%c0_3, %c0_4] : memref<1x128xf32, #tpu.memory_space<vmem>>, vector<1x128xf32>
    %4 = vector.broadcast %3 : vector<1x128xf32> to vector<128x128xf32>
    %5 = arith.addf %2, %4 : vector<128x128xf32>
    %cst_5 = arith.constant 0.000000e+00 : f32
    %6 = vector.broadcast %cst_5 : f32 to vector<128x128xf32>
    %7 = arith.maximumf %5, %6 : vector<128x128xf32>
    %c0_6 = arith.constant 0 : index
    %c0_7 = arith.constant 0 : index
    %8 = vector.load %arg4[%c0_6, %c0_7] : memref<128x128xbf16, #tpu.memory_space<vmem>>, vector<128x128xbf16>
    %9 = arith.extf %8 : vector<128x128xbf16> to vector<128x128xf32>
    %10 = arith.addf %7, %9 : vector<128x128xf32>
    %11 = arith.truncf %10 : vector<128x128xf32> to vector<128x128xbf16>
    %c0_8 = arith.constant 0 : index
    %c0_9 = arith.constant 0 : index
    %12 = vector.load %arg5[%c0_8, %c0_9] : memref<128x128xbf16, #tpu.memory_space<vmem>>, vector<128x128xbf16>
    tpu.vector_store %arg5[%c0_8, %c0_9], %11 {strides = array<i32>} : memref<128x128xbf16, #tpu.memory_space<vmem>>, vector<128x128xbf16>,
    return
  }
  func.func @transform_0(%arg0: i32) -> (i32, i32) {
    %c0_i32 = arith.constant 0 : i32
    %c0_i32_0 = arith.constant 0 : i32
    return %arg0, %c0_i32 : i32, i32
  }
  func.func @transform_1(%arg0: i32) -> (i32, i32) {
    %c0_i32 = arith.constant 0 : i32
    %c0_i32_0 = arith.constant 0 : i32
    %c0_i32_1 = arith.constant 0 : i32
    return %c0_i32, %c0_i32_0 : i32, i32
  }
  func.func @transform_2(%arg0: i32) -> (i32, i32) {
    %c0_i32 = arith.constant 0 : i32
    %c0_i32_0 = arith.constant 0 : i32
    %c0_i32_1 = arith.constant 0 : i32
    return %c0_i32, %c0_i32_0 : i32, i32
  }
  func.func @transform_3(%arg0: i32) -> (i32, i32) {
    %c0_i32 = arith.constant 0 : i32
    %c0_i32_0 = arith.constant 0 : i32
    return %arg0, %c0_i32 : i32, i32
  }
  func.func @transform_4(%arg0: i32) -> (i32, i32) {
    %c0_i32 = arith.constant 0 : i32
    %c0_i32_0 = arith.constant 0 : i32
    return %arg0, %c0_i32 : i32, i32
  }
}

module attributes {stable_mosaic.version = 11 : i64} {
  func.func @_aggregate_kernel(%arg0: i32, %arg1: i32, %arg2: memref<128x256xbf16, #tpu.memory_space<vmem>>, %arg3: memref<128x256xbf16, #tpu.memory_space<vmem>>, %arg4: memref<256x128xbf16, #tpu.memory_space<vmem>>, %arg5: memref<128x128xbf16, #tpu.memory_space<vmem>>, %arg6: memref<1x128xf32, #tpu.memory_space<vmem>>, %arg7: memref<128x128xbf16, #tpu.memory_space<vmem>>, %arg8: memref<128x128xbf16, #tpu.memory_space<vmem>>, %arg9: memref<128x128xf32, #tpu.memory_space<vmem>>) attributes {dimension_semantics = [#tpu.dimension_semantics<parallel>, #tpu.dimension_semantics<arbitrary>], iteration_bounds = array<i64: 2, 1>, scalar_prefetch = 0 : i64, scratch_operands = 1 : i64, tpu.core_type = #tpu.core_type<tc>, window_params = [{transform_indices = @transform_0, window_bounds = array<i64: 128, 256>}, {transform_indices = @transform_1, window_bounds = array<i64: 128, 256>}, {transform_indices = @transform_2, window_bounds = array<i64: 256, 128>}, {pipeline_mode = #tpu.pipeline_mode<synchronous>, transform_indices = @transform_3, window_bounds = array<i64: 128, 128>}, {pipeline_mode = #tpu.pipeline_mode<synchronous>, transform_indices = @transform_4, window_bounds = array<i64: 1, 128>}, {transform_indices = @transform_5, window_bounds = array<i64: 128, 128>}, {transform_indices = @transform_6, window_bounds = array<i64: 128, 128>}]} {
    %c0_i32 = arith.constant 0 : i32
    %0 = arith.cmpi eq, %arg1, %c0_i32 : i32
    %1 = arith.extui %0 : i1 to i32
    %c0_i32_0 = arith.constant 0 : i32
    %2 = arith.cmpi ne, %1, %c0_i32_0 : i32
    scf.if %2 {
      %cst_17 = arith.constant 0.000000e+00 : f32
      %20 = vector.broadcast %cst_17 : f32 to vector<128x128xf32>
      %c0_18 = arith.constant 0 : index
      %c0_19 = arith.constant 0 : index
      %21 = vector.load %arg9[%c0_18, %c0_19] : memref<128x128xf32, #tpu.memory_space<vmem>>, vector<128x128xf32>
      tpu.vector_store %arg9[%c0_18, %c0_19], %20 {strides = array<i32>} : memref<128x128xf32, #tpu.memory_space<vmem>>, vector<128x128xf32>,
    } else {
    }
    %c0 = arith.constant 0 : index
    %c0_1 = arith.constant 0 : index
    %3 = vector.load %arg4[%c0, %c0_1] : memref<256x128xbf16, #tpu.memory_space<vmem>>, vector<256x128xbf16>
    %c0_2 = arith.constant 0 : index
    %c0_3 = arith.constant 0 : index
    %4 = vector.load %arg5[%c0_2, %c0_3] : memref<128x128xbf16, #tpu.memory_space<vmem>>, vector<128x128xbf16>
    %cst = arith.constant dense<0.000000e+00> : vector<256x128xf32>
    %5 = tpu.matmul %3, %4, %cst {dimension_numbers = #tpu.dot_dimension_numbers<[1], [0], [0], [1], [0, 0, 1, 1], [], []>} : vector<256x128xbf16>, vector<128x128xbf16>, vector<256x128xf32> -> vector<256x128xf32>
    %c0_4 = arith.constant 0 : index
    %c0_5 = arith.constant 0 : index
    %6 = vector.load %arg6[%c0_4, %c0_5] : memref<1x128xf32, #tpu.memory_space<vmem>>, vector<1x128xf32>
    %7 = vector.broadcast %6 : vector<1x128xf32> to vector<256x128xf32>
    %8 = arith.addf %5, %7 : vector<256x128xf32>
    %9 = arith.truncf %8 : vector<256x128xf32> to vector<256x128xbf16>
    %c0_6 = arith.constant 0 : index
    %c0_7 = arith.constant 0 : index
    %10 = vector.load %arg2[%c0_6, %c0_7] : memref<128x256xbf16, #tpu.memory_space<vmem>>, vector<128x256xbf16>
    %c0_8 = arith.constant 0 : index
    %c0_9 = arith.constant 0 : index
    %11 = vector.load %arg3[%c0_8, %c0_9] : memref<128x256xbf16, #tpu.memory_space<vmem>>, vector<128x256xbf16>
    %12 = arith.mulf %10, %11 : vector<128x256xbf16>
    %c0_10 = arith.constant 0 : index
    %c0_11 = arith.constant 0 : index
    %13 = vector.load %arg9[%c0_10, %c0_11] : memref<128x128xf32, #tpu.memory_space<vmem>>, vector<128x128xf32>
    %cst_12 = arith.constant dense<0.000000e+00> : vector<128x128xf32>
    %14 = tpu.matmul %12, %9, %cst_12 {dimension_numbers = #tpu.dot_dimension_numbers<[1], [0], [0], [1], [0, 0, 1, 1], [], []>} : vector<128x256xbf16>, vector<256x128xbf16>, vector<128x128xf32> -> vector<128x128xf32>
    %15 = arith.addf %13, %14 : vector<128x128xf32>
    %c0_13 = arith.constant 0 : index
    %c0_14 = arith.constant 0 : index
    %16 = vector.load %arg9[%c0_13, %c0_14] : memref<128x128xf32, #tpu.memory_space<vmem>>, vector<128x128xf32>
    tpu.vector_store %arg9[%c0_13, %c0_14], %15 {strides = array<i32>} : memref<128x128xf32, #tpu.memory_space<vmem>>, vector<128x128xf32>,
    %c0_i32_15 = arith.constant 0 : i32
    %17 = arith.cmpi eq, %arg1, %c0_i32_15 : i32
    %18 = arith.extui %17 : i1 to i32
    %c0_i32_16 = arith.constant 0 : i32
    %19 = arith.cmpi ne, %18, %c0_i32_16 : i32
    scf.if %19 {
      %c0_17 = arith.constant 0 : index
      %c0_18 = arith.constant 0 : index
      %20 = vector.load %arg9[%c0_17, %c0_18] : memref<128x128xf32, #tpu.memory_space<vmem>>, vector<128x128xf32>
      %c0_19 = arith.constant 0 : index
      %c0_20 = arith.constant 0 : index
      %21 = vector.load %arg7[%c0_19, %c0_20] : memref<128x128xbf16, #tpu.memory_space<vmem>>, vector<128x128xbf16>
      %22 = arith.extf %21 : vector<128x128xbf16> to vector<128x128xf32>
      %23 = arith.addf %20, %22 : vector<128x128xf32>
      %24 = arith.truncf %23 : vector<128x128xf32> to vector<128x128xbf16>
      %c0_21 = arith.constant 0 : index
      %c0_22 = arith.constant 0 : index
      %25 = vector.load %arg8[%c0_21, %c0_22] : memref<128x128xbf16, #tpu.memory_space<vmem>>, vector<128x128xbf16>
      tpu.vector_store %arg8[%c0_21, %c0_22], %24 {strides = array<i32>} : memref<128x128xbf16, #tpu.memory_space<vmem>>, vector<128x128xbf16>,
    } else {
    }
    return
  }
  func.func @transform_0(%arg0: i32, %arg1: i32) -> (i32, i32) {
    %c0_i32 = arith.constant 0 : i32
    return %arg0, %arg1 : i32, i32
  }
  func.func @transform_1(%arg0: i32, %arg1: i32) -> (i32, i32) {
    %c0_i32 = arith.constant 0 : i32
    return %arg0, %arg1 : i32, i32
  }
  func.func @transform_2(%arg0: i32, %arg1: i32) -> (i32, i32) {
    %c0_i32 = arith.constant 0 : i32
    %c0_i32_0 = arith.constant 0 : i32
    return %arg1, %c0_i32 : i32, i32
  }
  func.func @transform_3(%arg0: i32, %arg1: i32) -> (i32, i32) {
    %c0_i32 = arith.constant 0 : i32
    %c0_i32_0 = arith.constant 0 : i32
    %c0_i32_1 = arith.constant 0 : i32
    return %c0_i32, %c0_i32_0 : i32, i32
  }
  func.func @transform_4(%arg0: i32, %arg1: i32) -> (i32, i32) {
    %c0_i32 = arith.constant 0 : i32
    %c0_i32_0 = arith.constant 0 : i32
    %c0_i32_1 = arith.constant 0 : i32
    return %c0_i32, %c0_i32_0 : i32, i32
  }
  func.func @transform_5(%arg0: i32, %arg1: i32) -> (i32, i32) {
    %c0_i32 = arith.constant 0 : i32
    %c0_i32_0 = arith.constant 0 : i32
    return %arg0, %c0_i32 : i32, i32
  }
  func.func @transform_6(%arg0: i32, %arg1: i32) -> (i32, i32) {
    %c0_i32 = arith.constant 0 : i32
    %c0_i32_0 = arith.constant 0 : i32
    return %arg0, %c0_i32 : i32, i32
  }
}

module attributes {stable_mosaic.version = 11 : i64} {
  func.func @_head_kernel(%arg0: i32, %arg1: memref<128x128xbf16, #tpu.memory_space<vmem>>, %arg2: memref<128x128xbf16, #tpu.memory_space<vmem>>, %arg3: memref<1x128xf32, #tpu.memory_space<vmem>>, %arg4: memref<1x128xf32, #tpu.memory_space<vmem>>, %arg5: memref<128x1xf32, #tpu.memory_space<vmem>>, %arg6: memref<128x1xf32, #tpu.memory_space<vmem>>) attributes {dimension_semantics = [#tpu.dimension_semantics<parallel>], iteration_bounds = array<i64: 2>, scalar_prefetch = 0 : i64, scratch_operands = 0 : i64, tpu.core_type = #tpu.core_type<tc>, window_params = [{transform_indices = @transform_0, window_bounds = array<i64: 128, 128>}, {pipeline_mode = #tpu.pipeline_mode<synchronous>, transform_indices = @transform_1, window_bounds = array<i64: 128, 128>}, {pipeline_mode = #tpu.pipeline_mode<synchronous>, transform_indices = @transform_2, window_bounds = array<i64: 1, 128>}, {pipeline_mode = #tpu.pipeline_mode<synchronous>, transform_indices = @transform_3, window_bounds = array<i64: 1, 128>}, {transform_indices = @transform_4, window_bounds = array<i64: 128, 1>}, {transform_indices = @transform_5, window_bounds = array<i64: 128, 1>}]} {
    %c0 = arith.constant 0 : index
    %c0_0 = arith.constant 0 : index
    %0 = vector.load %arg1[%c0, %c0_0] : memref<128x128xbf16, #tpu.memory_space<vmem>>, vector<128x128xbf16>
    %c0_1 = arith.constant 0 : index
    %c0_2 = arith.constant 0 : index
    %1 = vector.load %arg2[%c0_1, %c0_2] : memref<128x128xbf16, #tpu.memory_space<vmem>>, vector<128x128xbf16>
    %cst = arith.constant dense<0.000000e+00> : vector<128x128xf32>
    %2 = tpu.matmul %0, %1, %cst {dimension_numbers = #tpu.dot_dimension_numbers<[1], [0], [0], [1], [0, 0, 1, 1], [], []>} : vector<128x128xbf16>, vector<128x128xbf16>, vector<128x128xf32> -> vector<128x128xf32>
    %c0_3 = arith.constant 0 : index
    %c0_4 = arith.constant 0 : index
    %3 = vector.load %arg3[%c0_3, %c0_4] : memref<1x128xf32, #tpu.memory_space<vmem>>, vector<1x128xf32>
    %4 = vector.broadcast %3 : vector<1x128xf32> to vector<128x128xf32>
    %5 = arith.addf %2, %4 : vector<128x128xf32>
    %cst_5 = arith.constant 0.000000e+00 : f32
    %6 = vector.broadcast %cst_5 : f32 to vector<128x128xf32>
    %7 = arith.maximumf %5, %6 : vector<128x128xf32>
    %c0_6 = arith.constant 0 : index
    %c0_7 = arith.constant 0 : index
    %8 = vector.load %arg4[%c0_6, %c0_7] : memref<1x128xf32, #tpu.memory_space<vmem>>, vector<1x128xf32>
    %9 = vector.broadcast %8 : vector<1x128xf32> to vector<128x128xf32>
    %10 = arith.mulf %7, %9 : vector<128x128xf32>
    %cst_8 = arith.constant dense<0.000000e+00> : vector<128xf32>
    %11 = vector.multi_reduction <add>, %10, %cst_8 [1] : vector<128x128xf32> to vector<128xf32>
    %12 = vector.shape_cast %11 : vector<128xf32> to vector<128x1xf32>
    %c0_9 = arith.constant 0 : index
    %c0_10 = arith.constant 0 : index
    %13 = vector.load %arg5[%c0_9, %c0_10] : memref<128x1xf32, #tpu.memory_space<vmem>>, vector<128x1xf32>
    %14 = arith.addf %13, %12 : vector<128x1xf32>
    %c0_11 = arith.constant 0 : index
    %c0_12 = arith.constant 0 : index
    %15 = vector.load %arg6[%c0_11, %c0_12] : memref<128x1xf32, #tpu.memory_space<vmem>>, vector<128x1xf32>
    tpu.vector_store %arg6[%c0_11, %c0_12], %14 {strides = array<i32>} : memref<128x1xf32, #tpu.memory_space<vmem>>, vector<128x1xf32>,
    return
  }
  func.func @transform_0(%arg0: i32) -> (i32, i32) {
    %c0_i32 = arith.constant 0 : i32
    %c0_i32_0 = arith.constant 0 : i32
    return %arg0, %c0_i32 : i32, i32
  }
  func.func @transform_1(%arg0: i32) -> (i32, i32) {
    %c0_i32 = arith.constant 0 : i32
    %c0_i32_0 = arith.constant 0 : i32
    %c0_i32_1 = arith.constant 0 : i32
    return %c0_i32, %c0_i32_0 : i32, i32
  }
  func.func @transform_2(%arg0: i32) -> (i32, i32) {
    %c0_i32 = arith.constant 0 : i32
    %c0_i32_0 = arith.constant 0 : i32
    %c0_i32_1 = arith.constant 0 : i32
    return %c0_i32, %c0_i32_0 : i32, i32
  }
  func.func @transform_3(%arg0: i32) -> (i32, i32) {
    %c0_i32 = arith.constant 0 : i32
    %c0_i32_0 = arith.constant 0 : i32
    %c0_i32_1 = arith.constant 0 : i32
    return %c0_i32, %c0_i32_0 : i32, i32
  }
  func.func @transform_4(%arg0: i32) -> (i32, i32) {
    %c0_i32 = arith.constant 0 : i32
    %c0_i32_0 = arith.constant 0 : i32
    return %arg0, %c0_i32 : i32, i32
  }
  func.func @transform_5(%arg0: i32) -> (i32, i32) {
    %c0_i32 = arith.constant 0 : i32
    %c0_i32_0 = arith.constant 0 : i32
    return %arg0, %c0_i32 : i32, i32
  }
}

</mosaic_0001>

<llo_original>
// kernel: mxmnet_forward.12
$region0: #{mxmnet_forward.12}
  #allocation0 [shape = 'u32[]', space=smem, size = 0x4, offset = 0x4, fixed_abs, tag = 'smem constant byte address 0x4 - core index']
  #allocation1 [shape = 'u32[144,128]{1,0:T(1,128)}', space=vmem, size = 0x12000, scoped, tag = 'internal scratch']
  %s0 = inlined_call_operand.vmem [shape: bf16[256,128], index: 0, kind: input, shape index: {}]
  %s1 = inlined_call_operand.vmem [shape: bf16[128,128], index: 1, kind: input, shape index: {}]
  %s2 = inlined_call_operand.vmem [shape: f32[1,128], index: 2, kind: input, shape index: {}]
  %s3 = inlined_call_operand.vmem [shape: bf16[256,128], index: 3, kind: output, shape index: {}]
  %s4 = sld [smem:[#allocation0]]
  $region45: #{mxmnet_forward.12} parent=0
    _
  %s6 = ssub.s32 1, %s4
  %s7 = scalar_select 0, %s6, %s4
  loop: start=0, step=1, limit=4
  $region2: #{mxmnet_forward.12} parent=0 // loop_pre_header
    _
  $region3: #{mxmnet_forward.12} parent=0 // loop_header
    %s9 = sphi 0, %s13
    %p10 = scmp.ge.s32.totalorder %s9, 4
    %s19 = sphi 0, %s21
    %s22 = sphi 0, %s19
    %s23 = sphi 0, %s22
    %s39 = sphi 0, %s23
    %s43 = sphi 0, %s43
    %s45 = sphi 0, %s43
    %s46 = sphi 0, %s45
    %s60 = sphi 0, %s46
    %s64 = sphi 0, %s64
    %s66 = sphi 0, %s64
    %s67 = sphi 0, %s66
    %s81 = sphi 0, %s67
    %s87 = sphi 0, %s89
    %s90 = sphi 0, %s87
    %s91 = sphi 0, %s90
    %s107 = sphi 0, %s91
  $region4: #{mxmnet_forward.12} parent=0 // loop_header_branch
    %12 = sbr.rel (%p10) target = $region8
  $region5: #{mxmnet_forward.12} parent=0 // loop_body
    %s14 = ssub.s32 %s9, 1
    %s15 = ssub.s32 %s9, 2
    %s16 = sadd.s32 %s9, 1
    %s17 = ssub.s32 %s9, %s16
    %p18 = scmp.eq.s32.totalorder %s17, 0
    %s20 = sadd.s32 %s19, 1
    %s21 = scalar_select %p18, %s19, %s20
    %p24 = pneg %p18
    %p25 = scmp.eq.s32.totalorder %s9, 1
    %p26 = por %p24, %p25
    %p27 = scmp.ne.s32.totalorder %s19, %s22
    %p28 = scmp.eq.s32.totalorder %s9, 0
    %p29 = por %p27, %p28
    %p30 = scmp.ne.s32.totalorder %s19, %s22
    %p31 = scmp.eq.s32.totalorder %s14, 1
    %p32 = por %p30, %p31
    %p33 = scmp.ne.s32.totalorder %s22, %s23
    %p34 = scmp.eq.s32.totalorder %s14, 0
    %p35 = por %p33, %p34
    %p36 = scmp.ne.s32.totalorder %s22, %s23
    %p37 = scmp.eq.s32.totalorder %s15, 1
    %p38 = por %p36, %p37
    %p40 = scmp.ne.s32.totalorder %s23, %s39
    %p41 = scmp.eq.s32.totalorder %s15, 0
    %p42 = por %p40, %p41
    %s44 = sadd.s32 %s43, 1
    %p47 = scmp.eq.s32.totalorder %s9, 1
    %p48 = scmp.ne.s32.totalorder %s43, %s45
    %p49 = scmp.eq.s32.totalorder %s9, 0
    %p50 = por %p48, %p49
    %p51 = scmp.ne.s32.totalorder %s43, %s45
    %p52 = scmp.eq.s32.totalorder %s14, 1
    %p53 = por %p51, %p52
    %p54 = scmp.ne.s32.totalorder %s45, %s46
    %p55 = scmp.eq.s32.totalorder %s14, 0
    %p56 = por %p54, %p55
    %p57 = scmp.ne.s32.totalorder %s45, %s46
    %p58 = scmp.eq.s32.totalorder %s15, 1
    %p59 = por %p57, %p58
    %p61 = scmp.ne.s32.totalorder %s46, %s60
    %p62 = scmp.eq.s32.totalorder %s15, 0
    %p63 = por %p61, %p62
    %s65 = sadd.s32 %s64, 1
    %p68 = scmp.eq.s32.totalorder %s9, 1
    %p69 = scmp.ne.s32.totalorder %s64, %s66
    %p70 = scmp.eq.s32.totalorder %s9, 0
    %p71 = por %p69, %p70
    %p72 = scmp.ne.s32.totalorder %s64, %s66
    %p73 = scmp.eq.s32.totalorder %s14, 1
    %p74 = por %p72, %p73
    %p75 = scmp.ne.s32.totalorder %s66, %s67
    %p76 = scmp.eq.s32.totalorder %s14, 0
    %p77 = por %p75, %p76
    %p78 = scmp.ne.s32.totalorder %s66, %s67
    %p79 = scmp.eq.s32.totalorder %s15, 1
    %p80 = por %p78, %p79
    %p82 = scmp.ne.s32.totalorder %s67, %s81
    %p83 = scmp.eq.s32.totalorder %s15, 0
    %p84 = por %p82, %p83
    %s85 = ssub.s32 %s9, %s16
    %p86 = scmp.eq.s32.totalorder %s85, 0
    %s88 = sadd.s32 %s87, 1
    %s89 = scalar_select %p86, %s87, %s88
    %p92 = pneg %p86
    %p93 = scmp.eq.s32.totalorder %s9, 1
    %p94 = por %p92, %p93
    %p95 = scmp.ne.s32.totalorder %s87, %s90
    %p96 = scmp.eq.s32.totalorder %s9, 0
    %p97 = por %p95, %p96
    %p98 = scmp.ne.s32.totalorder %s87, %s90
    %p99 = scmp.eq.s32.totalorder %s14, 1
    %p100 = por %p98, %p99
    %p101 = scmp.ne.s32.totalorder %s90, %s91
    %p102 = scmp.eq.s32.totalorder %s14, 0
    %p103 = por %p101, %p102
    %p104 = scmp.ne.s32.totalorder %s90, %s91
    %p105 = scmp.eq.s32.totalorder %s15, 1
    %p106 = por %p104, %p105
    %p108 = scmp.ne.s32.totalorder %s91, %s107
    %p109 = scmp.eq.s32.totalorder %s15, 0
    %p110 = por %p108, %p109
    %p111 = scmp.le.s32.totalorder 1, %s9
    %p112 = scmp.lt.s32.totalorder %s9, 3
    %p113 = pnand %p111, %p112
    %p114 = pneg %p113
    // Predicated region
    $region9: #{mxmnet_forward.12} parent=5 // pred_check
      _
    $region10: #{mxmnet_forward.12} parent=5 // pred_check_branch
      %116 = sbr.rel (%p113) target = $region12
    $region11: #{mxmnet_forward.12} parent=5 // pred_region
      %s117 = ssub.s32 %s9, 1
      // Predicated region
      $region13: #{mxmnet_forward.12} parent=11 // pred_check
        %p118 = pneg %p56
      $region14: #{mxmnet_forward.12} parent=11 // pred_check_branch
        %120 = sbr.rel (%p118) target = $region16
      $region15: #{mxmnet_forward.12} parent=11 // pred_region
        _
      $region16: #{mxmnet_forward.12} parent=11 // pred_fallthru
        _
      // Predicated region
      $region17: #{mxmnet_forward.12} parent=11 // pred_check
        %p121 = pneg %p77
      $region18: #{mxmnet_forward.12} parent=11 // pred_check_branch
        %123 = sbr.rel (%p121) target = $region20
      $region19: #{mxmnet_forward.12} parent=11 // pred_region
        _
      $region20: #{mxmnet_forward.12} parent=11 // pred_fallthru
        _
    $region12: #{mxmnet_forward.12} parent=5 // pred_fallthru
      _
    %p124 = scmp.lt.s32.totalorder %s9, 2
    // Predicated region
    $region21: #{mxmnet_forward.12} parent=5 // pred_check
      %p125 = pneg %p124
    $region22: #{mxmnet_forward.12} parent=5 // pred_check_branch
      %127 = sbr.rel (%p125) target = $region24
    $region23: #{mxmnet_forward.12} parent=5 // pred_region
      // Predicated region
      $region25: #{mxmnet_forward.12} parent=23 // pred_check
        %p128 = pneg %p29
      $region26: #{mxmnet_forward.12} parent=23 // pred_check_branch
        %130 = sbr.rel (%p128) target = $region28
      $region27: #{mxmnet_forward.12} parent=23 // pred_region
        %s131 = smul.u32 16, %s9
        %p132 = scmp.lt.s32.totalorder %s131, 31
        %s133 = scalar_select %p132, %s131, 31
        %s134 = smul.addr %s133, 4
        %s135 = scalar_lea.vmem %s0, %s134
        %s136 = smul.u32 16, %s9
      $region28: #{mxmnet_forward.12} parent=23 // pred_fallthru
        _
    $region24: #{mxmnet_forward.12} parent=5 // pred_fallthru
      _
    %p137 = scmp.le.s32.totalorder 1, %s9
    %p138 = scmp.lt.s32.totalorder %s9, 3
    %p139 = pnand %p137, %p138
    %p140 = pneg %p139
    // Predicated region
    $region29: #{mxmnet_forward.12} parent=5 // pred_check
      _
    $region30: #{mxmnet_forward.12} parent=5 // pred_check_branch
      %142 = sbr.rel (%p139) target = $region32
    $region31: #{mxmnet_forward.12} parent=5 // pred_region
      %s143 = ssub.s32 %s9, 1
      %s144 = smul.u32 16, %s14
      %p145 = scmp.lt.s32.totalorder %s144, 31
      %s146 = scalar_select %p145, %s144, 31
      %s147 = smul.addr %s146, 4
      %s148 = scalar_lea.vmem %s0, %s147
      %p149 = pneg %p35
      %p150 = pneg %p32
      %p151 = pneg %p56
      %p152 = pneg %p53
      %p153 = pneg %p77
      %p154 = pneg %p74
      %p155 = pneg %p103
      %p156 = pneg %p100
      %s157 = smul.u32 16, %s14
      %p158 = scmp.lt.s32.totalorder %s157, 31
      %s159 = scalar_select %p158, %s157, 31
      %s160 = smul.addr %s159, 4
      %s161 = scalar_lea.vmem %s3, %s160
      %s162 = smul.u32 16, %s14
      %p163 = scmp.lt.s32.totalorder %s162, 31
      %s164 = scalar_select %p163, %s162, 31
      %s165 = smul.addr %s164, 4
      %s166 = scalar_lea.vmem %s0, %s165
      %s167 = smul.u32 16, %s14
      %s168 = smul.u32 16, %s14
      %p169 = scmp.lt.s32.totalorder %s168, 31
      %s170 = scalar_select %p169, %s168, 31
      %s171 = smul.addr %s170, 4
      %s172 = scalar_lea.vmem %s3, %s171
      %s173 = smul.u32 16, %s14
      %v175 = vld [vmem:[%s166] sm:$0xf]
      %v176 = vld [vmem:[%s166 + $0x4] sm:$0xf]
      %v177 = vld [vmem:[%s166 + $0x8] sm:$0xf]
      %v178 = vld [vmem:[%s166 + $0xc] sm:$0xf]
      %v179 = vld [vmem:[%s166 + $0x10] sm:$0xf]
      %v180 = vld [vmem:[%s166 + $0x14] sm:$0xf]
      %v181 = vld [vmem:[%s166 + $0x18] sm:$0xf]
      %v182 = vld [vmem:[%s166 + $0x1c] sm:$0xf]
      %v183 = vld [vmem:[%s166 + $0x20] sm:$0xf]
      %v184 = vld [vmem:[%s166 + $0x24] sm:$0xf]
      %v185 = vld [vmem:[%s166 + $0x28] sm:$0xf]
      %v186 = vld [vmem:[%s166 + $0x2c] sm:$0xf]
      %v187 = vld [vmem:[%s166 + $0x30] sm:$0xf]
      %v188 = vld [vmem:[%s166 + $0x34] sm:$0xf]
      %v189 = vld [vmem:[%s166 + $0x38] sm:$0xf]
      %v190 = vld [vmem:[%s166 + $0x3c] sm:$0xf]
      %v191 = vld [vmem:[%s1] sm:$0xf]
      %v192 = vld [vmem:[%s1 + $0x4] sm:$0xf]
      %v193 = vld [vmem:[%s1 + $0x8] sm:$0xf]
      %v194 = vld [vmem:[%s1 + $0xc] sm:$0xf]
      %v195 = vld [vmem:[%s1 + $0x10] sm:$0xf]
      %v196 = vld [vmem:[%s1 + $0x14] sm:$0xf]
      %v197 = vld [vmem:[%s1 + $0x18] sm:$0xf]
      %v198 = vld [vmem:[%s1 + $0x1c] sm:$0xf]
      %v199 = vld [vmem:[%s1 + $0x20] sm:$0xf]
      %v200 = vld [vmem:[%s1 + $0x24] sm:$0xf]
      %v201 = vld [vmem:[%s1 + $0x28] sm:$0xf]
      %v202 = vld [vmem:[%s1 + $0x2c] sm:$0xf]
      %v203 = vld [vmem:[%s1 + $0x30] sm:$0xf]
      %v204 = vld [vmem:[%s1 + $0x34] sm:$0xf]
      %v205 = vld [vmem:[%s1 + $0x38] sm:$0xf]
      %v206 = vld [vmem:[%s1 + $0x3c] sm:$0xf]
      %v207 = vld [vmem:[%s2] sm:$0x1]
      %v209 = vlaneseq
      %v210 = vshrl.u32 %v209, 7
      %v211 = vsub.s32 0, %v210
      %v212 = vrot.slane %v207, %v211
      %v230 = vunpack.c.l.b16 %v175
      %v231 = vunpack.c.l.b16 %v176
      %v232 = vunpack.c.l.b16 %v177
      %v233 = vunpack.c.l.b16 %v178
      %v234 = vunpack.c.l.b16 %v179
      %v235 = vunpack.c.l.b16 %v180
      %v236 = vunpack.c.l.b16 %v181
      %v237 = vunpack.c.l.b16 %v182
      %v238 = vunpack.c.l.b16 %v183
      %v239 = vunpack.c.l.b16 %v184
      %v240 = vunpack.c.l.b16 %v185
      %v241 = vunpack.c.l.b16 %v186
      %v242 = vunpack.c.l.b16 %v187
      %v243 = vunpack.c.l.b16 %v188
      %v244 = vunpack.c.l.b16 %v189
      %v245 = vunpack.c.l.b16 %v190
      %v246 = vpack.c.b16 %v231, %v230
      %v247 = vpack.c.b16 %v233, %v232
      %v248 = vpack.c.b16 %v235, %v234
      %v249 = vpack.c.b16 %v237, %v236
      %v250 = vpack.c.b16 %v239, %v238
      %v251 = vpack.c.b16 %v241, %v240
      %v252 = vpack.c.b16 %v243, %v242
      %v253 = vpack.c.b16 %v245, %v244
      %v278 = vunpack.c.l.b16 %v191
      %v279 = vunpack.c.l.b16 %v192
      %v280 = vunpack.c.l.b16 %v193
      %v281 = vunpack.c.l.b16 %v194
      %v282 = vunpack.c.l.b16 %v195
      %v283 = vunpack.c.l.b16 %v196
      %v284 = vunpack.c.l.b16 %v197
      %v285 = vunpack.c.l.b16 %v198
      %v286 = vunpack.c.l.b16 %v199
      %v287 = vunpack.c.l.b16 %v200
      %v288 = vunpack.c.l.b16 %v201
      %v289 = vunpack.c.l.b16 %v202
      %v290 = vunpack.c.l.b16 %v203
      %v291 = vunpack.c.l.b16 %v204
      %v292 = vunpack.c.l.b16 %v205
      %v293 = vunpack.c.l.b16 %v206
      %v294 = vpack.c.b16 %v279, %v278
      %v295 = vpack.c.b16 %v281, %v280
      %v296 = vpack.c.b16 %v283, %v282
      %v297 = vpack.c.b16 %v285, %v284
      %v298 = vpack.c.b16 %v287, %v286
      %v299 = vpack.c.b16 %v289, %v288
      %v300 = vpack.c.b16 %v291, %v290
      %v301 = vpack.c.b16 %v293, %v292
      %310 = vmatprep.subr.bf16.mxu0 0
      %311 = vmatpush1.bf16.msra.mxu0 %v294
      %312 = vmatprep.subr.bf16.mxu0 0
      %313 = vmatpush1.bf16.msra.mxu0 %v295
      %314 = vmatprep.subr.bf16.mxu0 0
      %315 = vmatpush1.bf16.msra.mxu0 %v296
      %316 = vmatprep.subr.bf16.mxu0 0
      %317 = vmatpush1.bf16.msra.mxu0 %v297
      %318 = vmatprep.subr.bf16.mxu0 0
      %319 = vmatpush1.bf16.msra.mxu0 %v298
      %320 = vmatprep.subr.bf16.mxu0 0
      %321 = vmatpush1.bf16.msra.mxu0 %v299
      %322 = vmatprep.subr.bf16.mxu0 0
      %323 = vmatpush1.bf16.msra.mxu0 %v300
      %324 = vmatprep.subr.bf16.mxu0 0
      %325 = vmatpush1.bf16.msra.mxu0 %v301
      %326 = vmatprep.subr.bf16.mxu0 0
      %327 = vmatpush1.bf16.msra.mxu0 0
      %328 = vmatprep.subr.bf16.mxu0 0
      %329 = vmatpush1.bf16.msra.mxu0 0
      %330 = vmatprep.subr.bf16.mxu0 0
      %331 = vmatpush1.bf16.msra.mxu0 0
      %332 = vmatprep.subr.bf16.mxu0 0
      %333 = vmatpush1.bf16.msra.mxu0 0
      %334 = vmatprep.subr.bf16.mxu0 0
      %335 = vmatpush1.bf16.msra.mxu0 0
      %336 = vmatprep.subr.bf16.mxu0 0
      %337 = vmatpush1.bf16.msra.mxu0 0
      %338 = vmatprep.subr.bf16.mxu0 0
      %339 = vmatpush1.bf16.msra.mxu0 0
      %340 = vmatprep.subr.bf16.mxu0 0
      %341 = vmatpush1.bf16.msra.mxu0 0
      %342 = vmatprep.mubr.bf16.mxu0 0
      %343 = vmatmul.mubr.bf16.gmra.mrb[0].mxu0 %v246
      %v344 = vpop.f32.mrb[0].mxu0
      %v345 = vadd.f32 %v212, %v344
      %v346 = vpop.f32.mrb[0].mxu0
      %v347 = vpop.f32.mrb[0].mxu0
      %v348 = vadd.f32 %v212, %v347
      %v349 = vpop.f32.mrb[0].mxu0
      %350 = vmatprep.mubr.bf16.mxu0 0
      %351 = vmatmul.mubr.bf16.gmra.mrb[0].mxu0 %v247
      %v352 = vpop.f32.mrb[0].mxu0
      %v353 = vadd.f32 %v212, %v352
      %v354 = vpop.f32.mrb[0].mxu0
      %v355 = vpop.f32.mrb[0].mxu0
      %v356 = vadd.f32 %v212, %v355
      %v357 = vpop.f32.mrb[0].mxu0
      %358 = vmatprep.mubr.bf16.mxu0 0
      %359 = vmatmul.mubr.bf16.gmra.mrb[0].mxu0 %v248
      %v360 = vpop.f32.mrb[0].mxu0
      %v361 = vadd.f32 %v212, %v360
      %v362 = vpop.f32.mrb[0].mxu0
      %v363 = vpop.f32.mrb[0].mxu0
      %v364 = vadd.f32 %v212, %v363
      %v365 = vpop.f32.mrb[0].mxu0
      %366 = vmatprep.mubr.bf16.mxu0 0
      %367 = vmatmul.mubr.bf16.gmra.mrb[0].mxu0 %v249
      %v368 = vpop.f32.mrb[0].mxu0
      %v369 = vadd.f32 %v212, %v368
      %v370 = vpop.f32.mrb[0].mxu0
      %v371 = vpop.f32.mrb[0].mxu0
      %v372 = vadd.f32 %v212, %v371
      %v373 = vpop.f32.mrb[0].mxu0
      %374 = vmatprep.mubr.bf16.mxu0 0
      %375 = vmatmul.mubr.bf16.gmra.mrb[0].mxu0 %v250
      %v376 = vpop.f32.mrb[0].mxu0
      %v377 = vadd.f32 %v212, %v376
      %v378 = vpop.f32.mrb[0].mxu0
      %v379 = vpop.f32.mrb[0].mxu0
      %v380 = vadd.f32 %v212, %v379
      %v381 = vpop.f32.mrb[0].mxu0
      %382 = vmatprep.mubr.bf16.mxu0 0
      %383 = vmatmul.mubr.bf16.gmra.mrb[0].mxu0 %v251
      %v384 = vpop.f32.mrb[0].mxu0
      %v385 = vadd.f32 %v212, %v384
      %v386 = vpop.f32.mrb[0].mxu0
      %v387 = vpop.f32.mrb[0].mxu0
      %v388 = vadd.f32 %v212, %v387
      %v389 = vpop.f32.mrb[0].mxu0
      %390 = vmatprep.mubr.bf16.mxu0 0
      %391 = vmatmul.mubr.bf16.gmra.mrb[0].mxu0 %v252
      %v392 = vpop.f32.mrb[0].mxu0
      %v393 = vadd.f32 %v212, %v392
      %v394 = vpop.f32.mrb[0].mxu0
      %v395 = vpop.f32.mrb[0].mxu0
      %v396 = vadd.f32 %v212, %v395
      %v397 = vpop.f32.mrb[0].mxu0
      %398 = vmatprep.mubr.bf16.mxu0 0
      %399 = vmatmul.mubr.bf16.gmra.mrb[0].mxu0 %v253
      %v400 = vpop.f32.mrb[0].mxu0
      %v401 = vadd.f32 %v212, %v400
      %v402 = vpop.f32.mrb[0].mxu0
      %v403 = vpop.f32.mrb[0].mxu0
      %v404 = vadd.f32 %v212, %v403
      %v405 = vpop.f32.mrb[0].mxu0
      %406 = vdwg.mxu0
      %v407 = vmax.f32 %v345, 0.0
      %v408 = vmax.f32 %v348, 0.0
      %v409 = vmax.f32 %v353, 0.0
      %v410 = vmax.f32 %v356, 0.0
      %v411 = vmax.f32 %v361, 0.0
      %v412 = vmax.f32 %v364, 0.0
      %v413 = vmax.f32 %v369, 0.0
      %v414 = vmax.f32 %v372, 0.0
      %v415 = vmax.f32 %v377, 0.0
      %v416 = vmax.f32 %v380, 0.0
      %v417 = vmax.f32 %v385, 0.0
      %v418 = vmax.f32 %v388, 0.0
      %v419 = vmax.f32 %v393, 0.0
      %v420 = vmax.f32 %v396, 0.0
      %v421 = vmax.f32 %v401, 0.0
      %v422 = vmax.f32 %v404, 0.0
      %v423 = vpack.c.bf16 %v408, %v407
      %v424 = vpack.c.bf16 %v410, %v409
      %v425 = vpack.c.bf16 %v412, %v411
      %v426 = vpack.c.bf16 %v414, %v413
      %v427 = vpack.c.bf16 %v416, %v415
      %v428 = vpack.c.bf16 %v418, %v417
      %v429 = vpack.c.bf16 %v420, %v419
      %v430 = vpack.c.bf16 %v422, %v421
      %v439 = vunpack.c.l.b16 %v423
      %v440 = vunpack.c.h.b16 %v423
      %v441 = vunpack.c.l.b16 %v424
      %v442 = vunpack.c.h.b16 %v424
      %v443 = vunpack.c.l.b16 %v425
      %v444 = vunpack.c.h.b16 %v425
      %v445 = vunpack.c.l.b16 %v426
      %v446 = vunpack.c.h.b16 %v426
      %v447 = vunpack.c.l.b16 %v427
      %v448 = vunpack.c.h.b16 %v427
      %v449 = vunpack.c.l.b16 %v428
      %v450 = vunpack.c.h.b16 %v428
      %v451 = vunpack.c.l.b16 %v429
      %v452 = vunpack.c.h.b16 %v429
      %v453 = vunpack.c.l.b16 %v430
      %v454 = vunpack.c.h.b16 %v430
      %v455 = vpack.c.b16 %v439, %v439
      %v456 = vpack.c.b16 %v440, %v440
      %v457 = vpack.c.b16 %v441, %v441
      %v458 = vpack.c.b16 %v442, %v442
      %v459 = vpack.c.b16 %v443, %v443
      %v460 = vpack.c.b16 %v444, %v444
      %v461 = vpack.c.b16 %v445, %v445
      %v462 = vpack.c.b16 %v446, %v446
      %v463 = vpack.c.b16 %v447, %v447
      %v464 = vpack.c.b16 %v448, %v448
      %v465 = vpack.c.b16 %v449, %v449
      %v466 = vpack.c.b16 %v450, %v450
      %v467 = vpack.c.b16 %v451, %v451
      %v468 = vpack.c.b16 %v452, %v452
      %v469 = vpack.c.b16 %v453, %v453
      %v470 = vpack.c.b16 %v454, %v454
      %487 = vst [vmem:[%s172] sm:$0xf] %v455
      %488 = vst [vmem:[%s172 + $0x4] sm:$0xf] %v456
      %489 = vst [vmem:[%s172 + $0x8] sm:$0xf] %v457
      %490 = vst [vmem:[%s172 + $0xc] sm:$0xf] %v458
      %491 = vst [vmem:[%s172 + $0x10] sm:$0xf] %v459
      %492 = vst [vmem:[%s172 + $0x14] sm:$0xf] %v460
      %493 = vst [vmem:[%s172 + $0x18] sm:$0xf] %v461
      %494 = vst [vmem:[%s172 + $0x1c] sm:$0xf] %v462
      %495 = vst [vmem:[%s172 + $0x20] sm:$0xf] %v463
      %496 = vst [vmem:[%s172 + $0x24] sm:$0xf] %v464
      %497 = vst [vmem:[%s172 + $0x28] sm:$0xf] %v465
      %498 = vst [vmem:[%s172 + $0x2c] sm:$0xf] %v466
      %499 = vst [vmem:[%s172 + $0x30] sm:$0xf] %v467
      %500 = vst [vmem:[%s172 + $0x34] sm:$0xf] %v468
      %501 = vst [vmem:[%s172 + $0x38] sm:$0xf] %v469
      %502 = vst [vmem:[%s172 + $0x3c] sm:$0xf] %v470
      %s503 = smul.u32 16, %s14
      %p504 = scmp.lt.s32.totalorder %s503, 31
      %s505 = scalar_select %p504, %s503, 31
      %s506 = smul.addr %s505, 4
      %s507 = scalar_lea.vmem %s3, %s506
      // Predicated region
      $region33: #{mxmnet_forward.12} parent=31 // pred_check
        %p508 = pneg %p100
      $region34: #{mxmnet_forward.12} parent=31 // pred_check_branch
        %510 = sbr.rel (%p508) target = $region36
      $region35: #{mxmnet_forward.12} parent=31 // pred_region
        %s511 = smul.u32 16, %s14
      $region36: #{mxmnet_forward.12} parent=31 // pred_fallthru
        _
    $region32: #{mxmnet_forward.12} parent=5 // pred_fallthru
      _
    %p512 = scmp.le.s32.totalorder 2, %s9
    // Predicated region
    $region37: #{mxmnet_forward.12} parent=5 // pred_check
      %p513 = pneg %p512
    $region38: #{mxmnet_forward.12} parent=5 // pred_check_branch
      %515 = sbr.rel (%p513) target = $region40
    $region39: #{mxmnet_forward.12} parent=5 // pred_region
      %s516 = ssub.s32 %s9, 2
      // Predicated region
      $region41: #{mxmnet_forward.12} parent=39 // pred_check
        %p517 = pneg %p106
      $region42: #{mxmnet_forward.12} parent=39 // pred_check_branch
        %519 = sbr.rel (%p517) target = $region44
      $region43: #{mxmnet_forward.12} parent=39 // pred_region
        %s520 = smul.u32 16, %s15
        %p521 = scmp.lt.s32.totalorder %s520, 31
        %s522 = scalar_select %p521, %s520, 31
        %s523 = smul.addr %s522, 4
        %s524 = scalar_lea.vmem %s3, %s523
      $region44: #{mxmnet_forward.12} parent=39 // pred_fallthru
        _
    $region40: #{mxmnet_forward.12} parent=5 // pred_fallthru
      _
  $region6: #{mxmnet_forward.12} parent=0 // loop_footer
    %s13 = sadd.s32 1, %s9
  $region7: #{mxmnet_forward.12} parent=0 // loop_footer_branch
    %8 = sbr.rel target = $region3
  $region8: #{mxmnet_forward.12} parent=0 // loop_exit
    _

// kernel: mxmnet_forward.14
$region0: #{mxmnet_forward.14}
  #allocation0 [shape = 'u32[]', space=smem, size = 0x4, offset = 0x4, fixed_abs, tag = 'smem constant byte address 0x4 - core index']
  #allocation1 [shape = 'u32[144,128]{1,0:T(1,128)}', space=vmem, size = 0x12000, scoped, tag = 'internal scratch']
  %s0 = inlined_call_operand.vmem [shape: bf16[256,128], index: 0, kind: input, shape index: {}]
  %s1 = inlined_call_operand.vmem [shape: bf16[128,128], index: 1, kind: input, shape index: {}]
  %s2 = inlined_call_operand.vmem [shape: f32[1,128], index: 2, kind: input, shape index: {}]
  %s3 = inlined_call_operand.vmem [shape: bf16[256,128], index: 3, kind: input, shape index: {}]
  %s4 = inlined_call_operand.vmem [shape: bf16[256,128], index: 4, kind: output, shape index: {}]
  %s5 = sld [smem:[#allocation0]]
  $region49: #{mxmnet_forward.14} parent=0
    _
  %s7 = ssub.s32 1, %s5
  %s8 = scalar_select 0, %s7, %s5
  loop: start=0, step=1, limit=4
  $region2: #{mxmnet_forward.14} parent=0 // loop_pre_header
    _
  $region3: #{mxmnet_forward.14} parent=0 // loop_header
    %s10 = sphi 0, %s14
    %p11 = scmp.ge.s32.totalorder %s10, 4
    %s20 = sphi 0, %s22
    %s23 = sphi 0, %s20
    %s24 = sphi 0, %s23
    %s40 = sphi 0, %s24
    %s44 = sphi 0, %s44
    %s46 = sphi 0, %s44
    %s47 = sphi 0, %s46
    %s61 = sphi 0, %s47
    %s65 = sphi 0, %s65
    %s67 = sphi 0, %s65
    %s68 = sphi 0, %s67
    %s82 = sphi 0, %s68
    %s88 = sphi 0, %s90
    %s91 = sphi 0, %s88
    %s92 = sphi 0, %s91
    %s108 = sphi 0, %s92
    %s114 = sphi 0, %s116
    %s117 = sphi 0, %s114
    %s118 = sphi 0, %s117
    %s134 = sphi 0, %s118
  $region4: #{mxmnet_forward.14} parent=0 // loop_header_branch
    %13 = sbr.rel (%p11) target = $region8
  $region5: #{mxmnet_forward.14} parent=0 // loop_body
    %s15 = ssub.s32 %s10, 1
    %s16 = ssub.s32 %s10, 2
    %s17 = sadd.s32 %s10, 1
    %s18 = ssub.s32 %s10, %s17
    %p19 = scmp.eq.s32.totalorder %s18, 0
    %s21 = sadd.s32 %s20, 1
    %s22 = scalar_select %p19, %s20, %s21
    %p25 = pneg %p19
    %p26 = scmp.eq.s32.totalorder %s10, 1
    %p27 = por %p25, %p26
    %p28 = scmp.ne.s32.totalorder %s20, %s23
    %p29 = scmp.eq.s32.totalorder %s10, 0
    %p30 = por %p28, %p29
    %p31 = scmp.ne.s32.totalorder %s20, %s23
    %p32 = scmp.eq.s32.totalorder %s15, 1
    %p33 = por %p31, %p32
    %p34 = scmp.ne.s32.totalorder %s23, %s24
    %p35 = scmp.eq.s32.totalorder %s15, 0
    %p36 = por %p34, %p35
    %p37 = scmp.ne.s32.totalorder %s23, %s24
    %p38 = scmp.eq.s32.totalorder %s16, 1
    %p39 = por %p37, %p38
    %p41 = scmp.ne.s32.totalorder %s24, %s40
    %p42 = scmp.eq.s32.totalorder %s16, 0
    %p43 = por %p41, %p42
    %s45 = sadd.s32 %s44, 1
    %p48 = scmp.eq.s32.totalorder %s10, 1
    %p49 = scmp.ne.s32.totalorder %s44, %s46
    %p50 = scmp.eq.s32.totalorder %s10, 0
    %p51 = por %p49, %p50
    %p52 = scmp.ne.s32.totalorder %s44, %s46
    %p53 = scmp.eq.s32.totalorder %s15, 1
    %p54 = por %p52, %p53
    %p55 = scmp.ne.s32.totalorder %s46, %s47
    %p56 = scmp.eq.s32.totalorder %s15, 0
    %p57 = por %p55, %p56
    %p58 = scmp.ne.s32.totalorder %s46, %s47
    %p59 = scmp.eq.s32.totalorder %s16, 1
    %p60 = por %p58, %p59
    %p62 = scmp.ne.s32.totalorder %s47, %s61
    %p63 = scmp.eq.s32.totalorder %s16, 0
    %p64 = por %p62, %p63
    %s66 = sadd.s32 %s65, 1
    %p69 = scmp.eq.s32.totalorder %s10, 1
    %p70 = scmp.ne.s32.totalorder %s65, %s67
    %p71 = scmp.eq.s32.totalorder %s10, 0
    %p72 = por %p70, %p71
    %p73 = scmp.ne.s32.totalorder %s65, %s67
    %p74 = scmp.eq.s32.totalorder %s15, 1
    %p75 = por %p73, %p74
    %p76 = scmp.ne.s32.totalorder %s67, %s68
    %p77 = scmp.eq.s32.totalorder %s15, 0
    %p78 = por %p76, %p77
    %p79 = scmp.ne.s32.totalorder %s67, %s68
    %p80 = scmp.eq.s32.totalorder %s16, 1
    %p81 = por %p79, %p80
    %p83 = scmp.ne.s32.totalorder %s68, %s82
    %p84 = scmp.eq.s32.totalorder %s16, 0
    %p85 = por %p83, %p84
    %s86 = ssub.s32 %s10, %s17
    %p87 = scmp.eq.s32.totalorder %s86, 0
    %s89 = sadd.s32 %s88, 1
    %s90 = scalar_select %p87, %s88, %s89
    %p93 = pneg %p87
    %p94 = scmp.eq.s32.totalorder %s10, 1
    %p95 = por %p93, %p94
    %p96 = scmp.ne.s32.totalorder %s88, %s91
    %p97 = scmp.eq.s32.totalorder %s10, 0
    %p98 = por %p96, %p97
    %p99 = scmp.ne.s32.totalorder %s88, %s91
    %p100 = scmp.eq.s32.totalorder %s15, 1
    %p101 = por %p99, %p100
    %p102 = scmp.ne.s32.totalorder %s91, %s92
    %p103 = scmp.eq.s32.totalorder %s15, 0
    %p104 = por %p102, %p103
    %p105 = scmp.ne.s32.totalorder %s91, %s92
    %p106 = scmp.eq.s32.totalorder %s16, 1
    %p107 = por %p105, %p106
    %p109 = scmp.ne.s32.totalorder %s92, %s108
    %p110 = scmp.eq.s32.totalorder %s16, 0
    %p111 = por %p109, %p110
    %s112 = ssub.s32 %s10, %s17
    %p113 = scmp.eq.s32.totalorder %s112, 0
    %s115 = sadd.s32 %s114, 1
    %s116 = scalar_select %p113, %s114, %s115
    %p119 = pneg %p113
    %p120 = scmp.eq.s32.totalorder %s10, 1
    %p121 = por %p119, %p120
    %p122 = scmp.ne.s32.totalorder %s114, %s117
    %p123 = scmp.eq.s32.totalorder %s10, 0
    %p124 = por %p122, %p123
    %p125 = scmp.ne.s32.totalorder %s114, %s117
    %p126 = scmp.eq.s32.totalorder %s15, 1
    %p127 = por %p125, %p126
    %p128 = scmp.ne.s32.totalorder %s117, %s118
    %p129 = scmp.eq.s32.totalorder %s15, 0
    %p130 = por %p128, %p129
    %p131 = scmp.ne.s32.totalorder %s117, %s118
    %p132 = scmp.eq.s32.totalorder %s16, 1
    %p133 = por %p131, %p132
    %p135 = scmp.ne.s32.totalorder %s118, %s134
    %p136 = scmp.eq.s32.totalorder %s16, 0
    %p137 = por %p135, %p136
    %p138 = scmp.le.s32.totalorder 1, %s10
    %p139 = scmp.lt.s32.totalorder %s10, 3
    %p140 = pnand %p138, %p139
    %p141 = pneg %p140
    // Predicated region
    $region9: #{mxmnet_forward.14} parent=5 // pred_check
      _
    $region10: #{mxmnet_forward.14} parent=5 // pred_check_branch
      %143 = sbr.rel (%p140) target = $region12
    $region11: #{mxmnet_forward.14} parent=5 // pred_region
      %s144 = ssub.s32 %s10, 1
      // Predicated region
      $region13: #{mxmnet_forward.14} parent=11 // pred_check
        %p145 = pneg %p57
      $region14: #{mxmnet_forward.14} parent=11 // pred_check_branch
        %147 = sbr.rel (%p145) target = $region16
      $region15: #{mxmnet_forward.14} parent=11 // pred_region
        _
      $region16: #{mxmnet_forward.14} parent=11 // pred_fallthru
        _
      // Predicated region
      $region17: #{mxmnet_forward.14} parent=11 // pred_check
        %p148 = pneg %p78
      $region18: #{mxmnet_forward.14} parent=11 // pred_check_branch
        %150 = sbr.rel (%p148) target = $region20
      $region19: #{mxmnet_forward.14} parent=11 // pred_region
        _
      $region20: #{mxmnet_forward.14} parent=11 // pred_fallthru
        _
    $region12: #{mxmnet_forward.14} parent=5 // pred_fallthru
      _
    %p151 = scmp.lt.s32.totalorder %s10, 2
    // Predicated region
    $region21: #{mxmnet_forward.14} parent=5 // pred_check
      %p152 = pneg %p151
    $region22: #{mxmnet_forward.14} parent=5 // pred_check_branch
      %154 = sbr.rel (%p152) target = $region24
    $region23: #{mxmnet_forward.14} parent=5 // pred_region
      // Predicated region
      $region25: #{mxmnet_forward.14} parent=23 // pred_check
        %p155 = pneg %p30
      $region26: #{mxmnet_forward.14} parent=23 // pred_check_branch
        %157 = sbr.rel (%p155) target = $region28
      $region27: #{mxmnet_forward.14} parent=23 // pred_region
        %s158 = smul.u32 16, %s10
        %p159 = scmp.lt.s32.totalorder %s158, 31
        %s160 = scalar_select %p159, %s158, 31
        %s161 = smul.addr %s160, 4
        %s162 = scalar_lea.vmem %s0, %s161
        %s163 = smul.u32 16, %s10
      $region28: #{mxmnet_forward.14} parent=23 // pred_fallthru
        _
      // Predicated region
      $region29: #{mxmnet_forward.14} parent=23 // pred_check
        %p164 = pneg %p98
      $region30: #{mxmnet_forward.14} parent=23 // pred_check_branch
        %166 = sbr.rel (%p164) target = $region32
      $region31: #{mxmnet_forward.14} parent=23 // pred_region
        %s167 = smul.u32 16, %s10
        %p168 = scmp.lt.s32.totalorder %s167, 31
        %s169 = scalar_select %p168, %s167, 31
        %s170 = smul.addr %s169, 4
        %s171 = scalar_lea.vmem %s3, %s170
        %s172 = smul.u32 16, %s10
      $region32: #{mxmnet_forward.14} parent=23 // pred_fallthru
        _
    $region24: #{mxmnet_forward.14} parent=5 // pred_fallthru
      _
    %p173 = scmp.le.s32.totalorder 1, %s10
    %p174 = scmp.lt.s32.totalorder %s10, 3
    %p175 = pnand %p173, %p174
    %p176 = pneg %p175
    // Predicated region
    $region33: #{mxmnet_forward.14} parent=5 // pred_check
      _
    $region34: #{mxmnet_forward.14} parent=5 // pred_check_branch
      %178 = sbr.rel (%p175) target = $region36
    $region35: #{mxmnet_forward.14} parent=5 // pred_region
      %s179 = ssub.s32 %s10, 1
      %s180 = smul.u32 16, %s15
      %p181 = scmp.lt.s32.totalorder %s180, 31
      %s182 = scalar_select %p181, %s180, 31
      %s183 = smul.addr %s182, 4
      %s184 = scalar_lea.vmem %s0, %s183
      %p185 = pneg %p36
      %p186 = pneg %p33
      %p187 = pneg %p57
      %p188 = pneg %p54
      %p189 = pneg %p78
      %p190 = pneg %p75
      %s191 = smul.u32 16, %s15
      %p192 = scmp.lt.s32.totalorder %s191, 31
      %s193 = scalar_select %p192, %s191, 31
      %s194 = smul.addr %s193, 4
      %s195 = scalar_lea.vmem %s3, %s194
      %p196 = pneg %p104
      %p197 = pneg %p101
      %p198 = pneg %p130
      %p199 = pneg %p127
      %s200 = smul.u32 16, %s15
      %p201 = scmp.lt.s32.totalorder %s200, 31
      %s202 = scalar_select %p201, %s200, 31
      %s203 = smul.addr %s202, 4
      %s204 = scalar_lea.vmem %s4, %s203
      %s205 = smul.u32 16, %s15
      %p206 = scmp.lt.s32.totalorder %s205, 31
      %s207 = scalar_select %p206, %s205, 31
      %s208 = smul.addr %s207, 4
      %s209 = scalar_lea.vmem %s0, %s208
      %s210 = smul.u32 16, %s15
      %s211 = smul.u32 16, %s15
      %p212 = scmp.lt.s32.totalorder %s211, 31
      %s213 = scalar_select %p212, %s211, 31
      %s214 = smul.addr %s213, 4
      %s215 = scalar_lea.vmem %s3, %s214
      %s216 = smul.u32 16, %s15
      %s217 = smul.u32 16, %s15
      %p218 = scmp.lt.s32.totalorder %s217, 31
      %s219 = scalar_select %p218, %s217, 31
      %s220 = smul.addr %s219, 4
      %s221 = scalar_lea.vmem %s4, %s220
      %s222 = smul.u32 16, %s15
      %v224 = vld [vmem:[%s209] sm:$0xf]
      %v225 = vld [vmem:[%s209 + $0x4] sm:$0xf]
      %v226 = vld [vmem:[%s209 + $0x8] sm:$0xf]
      %v227 = vld [vmem:[%s209 + $0xc] sm:$0xf]
      %v228 = vld [vmem:[%s209 + $0x10] sm:$0xf]
      %v229 = vld [vmem:[%s209 + $0x14] sm:$0xf]
      %v230 = vld [vmem:[%s209 + $0x18] sm:$0xf]
      %v231 = vld [vmem:[%s209 + $0x1c] sm:$0xf]
      %v232 = vld [vmem:[%s209 + $0x20] sm:$0xf]
      %v233 = vld [vmem:[%s209 + $0x24] sm:$0xf]
      %v234 = vld [vmem:[%s209 + $0x28] sm:$0xf]
      %v235 = vld [vmem:[%s209 + $0x2c] sm:$0xf]
      %v236 = vld [vmem:[%s209 + $0x30] sm:$0xf]
      %v237 = vld [vmem:[%s209 + $0x34] sm:$0xf]
      %v238 = vld [vmem:[%s209 + $0x38] sm:$0xf]
      %v239 = vld [vmem:[%s209 + $0x3c] sm:$0xf]
      %v240 = vld [vmem:[%s1] sm:$0xf]
      %v241 = vld [vmem:[%s1 + $0x4] sm:$0xf]
      %v242 = vld [vmem:[%s1 + $0x8] sm:$0xf]
      %v243 = vld [vmem:[%s1 + $0xc] sm:$0xf]
      %v244 = vld [vmem:[%s1 + $0x10] sm:$0xf]
      %v245 = vld [vmem:[%s1 + $0x14] sm:$0xf]
      %v246 = vld [vmem:[%s1 + $0x18] sm:$0xf]
      %v247 = vld [vmem:[%s1 + $0x1c] sm:$0xf]
      %v248 = vld [vmem:[%s1 + $0x20] sm:$0xf]
      %v249 = vld [vmem:[%s1 + $0x24] sm:$0xf]
      %v250 = vld [vmem:[%s1 + $0x28] sm:$0xf]
      %v251 = vld [vmem:[%s1 + $0x2c] sm:$0xf]
      %v252 = vld [vmem:[%s1 + $0x30] sm:$0xf]
      %v253 = vld [vmem:[%s1 + $0x34] sm:$0xf]
      %v254 = vld [vmem:[%s1 + $0x38] sm:$0xf]
      %v255 = vld [vmem:[%s1 + $0x3c] sm:$0xf]
      %v256 = vld [vmem:[%s2] sm:$0x1]
      %v258 = vlaneseq
      %v259 = vshrl.u32 %v258, 7
      %v260 = vsub.s32 0, %v259
      %v261 = vrot.slane %v256, %v260
      %v279 = vunpack.c.l.b16 %v224
      %v280 = vunpack.c.l.b16 %v225
      %v281 = vunpack.c.l.b16 %v226
      %v282 = vunpack.c.l.b16 %v227
      %v283 = vunpack.c.l.b16 %v228
      %v284 = vunpack.c.l.b16 %v229
      %v285 = vunpack.c.l.b16 %v230
      %v286 = vunpack.c.l.b16 %v231
      %v287 = vunpack.c.l.b16 %v232
      %v288 = vunpack.c.l.b16 %v233
      %v289 = vunpack.c.l.b16 %v234
      %v290 = vunpack.c.l.b16 %v235
      %v291 = vunpack.c.l.b16 %v236
      %v292 = vunpack.c.l.b16 %v237
      %v293 = vunpack.c.l.b16 %v238
      %v294 = vunpack.c.l.b16 %v239
      %v295 = vpack.c.b16 %v280, %v279
      %v296 = vpack.c.b16 %v282, %v281
      %v297 = vpack.c.b16 %v284, %v283
      %v298 = vpack.c.b16 %v286, %v285
      %v299 = vpack.c.b16 %v288, %v287
      %v300 = vpack.c.b16 %v290, %v289
      %v301 = vpack.c.b16 %v292, %v291
      %v302 = vpack.c.b16 %v294, %v293
      %v327 = vunpack.c.l.b16 %v240
      %v328 = vunpack.c.l.b16 %v241
      %v329 = vunpack.c.l.b16 %v242
      %v330 = vunpack.c.l.b16 %v243
      %v331 = vunpack.c.l.b16 %v244
      %v332 = vunpack.c.l.b16 %v245
      %v333 = vunpack.c.l.b16 %v246
      %v334 = vunpack.c.l.b16 %v247
      %v335 = vunpack.c.l.b16 %v248
      %v336 = vunpack.c.l.b16 %v249
      %v337 = vunpack.c.l.b16 %v250
      %v338 = vunpack.c.l.b16 %v251
      %v339 = vunpack.c.l.b16 %v252
      %v340 = vunpack.c.l.b16 %v253
      %v341 = vunpack.c.l.b16 %v254
      %v342 = vunpack.c.l.b16 %v255
      %v343 = vpack.c.b16 %v328, %v327
      %v344 = vpack.c.b16 %v330, %v329
      %v345 = vpack.c.b16 %v332, %v331
      %v346 = vpack.c.b16 %v334, %v333
      %v347 = vpack.c.b16 %v336, %v335
      %v348 = vpack.c.b16 %v338, %v337
      %v349 = vpack.c.b16 %v340, %v339
      %v350 = vpack.c.b16 %v342, %v341
      %359 = vmatprep.subr.bf16.mxu0 0
      %360 = vmatpush1.bf16.msra.mxu0 %v343
      %361 = vmatprep.subr.bf16.mxu0 0
      %362 = vmatpush1.bf16.msra.mxu0 %v344
      %363 = vmatprep.subr.bf16.mxu0 0
      %364 = vmatpush1.bf16.msra.mxu0 %v345
      %365 = vmatprep.subr.bf16.mxu0 0
      %366 = vmatpush1.bf16.msra.mxu0 %v346
      %367 = vmatprep.subr.bf16.mxu0 0
      %368 = vmatpush1.bf16.msra.mxu0 %v347
      %369 = vmatprep.subr.bf16.mxu0 0
      %370 = vmatpush1.bf16.msra.mxu0 %v348
      %371 = vmatprep.subr.bf16.mxu0 0
      %372 = vmatpush1.bf16.msra.mxu0 %v349
      %373 = vmatprep.subr.bf16.mxu0 0
      %374 = vmatpush1.bf16.msra.mxu0 %v350
      %375 = vmatprep.subr.bf16.mxu0 0
      %376 = vmatpush1.bf16.msra.mxu0 0
      %377 = vmatprep.subr.bf16.mxu0 0
      %378 = vmatpush1.bf16.msra.mxu0 0
      %379 = vmatprep.subr.bf16.mxu0 0
      %380 = vmatpush1.bf16.msra.mxu0 0
      %381 = vmatprep.subr.bf16.mxu0 0
      %382 = vmatpush1.bf16.msra.mxu0 0
      %383 = vmatprep.subr.bf16.mxu0 0
      %384 = vmatpush1.bf16.msra.mxu0 0
      %385 = vmatprep.subr.bf16.mxu0 0
      %386 = vmatpush1.bf16.msra.mxu0 0
      %387 = vmatprep.subr.bf16.mxu0 0
      %388 = vmatpush1.bf16.msra.mxu0 0
      %389 = vmatprep.subr.bf16.mxu0 0
      %390 = vmatpush1.bf16.msra.mxu0 0
      %391 = vmatprep.mubr.bf16.mxu0 0
      %392 = vmatmul.mubr.bf16.gmra.mrb[0].mxu0 %v295
      %v393 = vpop.f32.mrb[0].mxu0
      %v394 = vadd.f32 %v261, %v393
      %v395 = vpop.f32.mrb[0].mxu0
      %v396 = vpop.f32.mrb[0].mxu0
      %v397 = vadd.f32 %v261, %v396
      %v398 = vpop.f32.mrb[0].mxu0
      %399 = vmatprep.mubr.bf16.mxu0 0
      %400 = vmatmul.mubr.bf16.gmra.mrb[0].mxu0 %v296
      %v401 = vpop.f32.mrb[0].mxu0
      %v402 = vadd.f32 %v261, %v401
      %v403 = vpop.f32.mrb[0].mxu0
      %v404 = vpop.f32.mrb[0].mxu0
      %v405 = vadd.f32 %v261, %v404
      %v406 = vpop.f32.mrb[0].mxu0
      %407 = vmatprep.mubr.bf16.mxu0 0
      %408 = vmatmul.mubr.bf16.gmra.mrb[0].mxu0 %v297
      %v409 = vpop.f32.mrb[0].mxu0
      %v410 = vadd.f32 %v261, %v409
      %v411 = vpop.f32.mrb[0].mxu0
      %v412 = vpop.f32.mrb[0].mxu0
      %v413 = vadd.f32 %v261, %v412
      %v414 = vpop.f32.mrb[0].mxu0
      %415 = vmatprep.mubr.bf16.mxu0 0
      %416 = vmatmul.mubr.bf16.gmra.mrb[0].mxu0 %v298
      %v417 = vpop.f32.mrb[0].mxu0
      %v418 = vadd.f32 %v261, %v417
      %v419 = vpop.f32.mrb[0].mxu0
      %v420 = vpop.f32.mrb[0].mxu0
      %v421 = vadd.f32 %v261, %v420
      %v422 = vpop.f32.mrb[0].mxu0
      %423 = vmatprep.mubr.bf16.mxu0 0
      %424 = vmatmul.mubr.bf16.gmra.mrb[0].mxu0 %v299
      %v425 = vpop.f32.mrb[0].mxu0
      %v426 = vadd.f32 %v261, %v425
      %v427 = vpop.f32.mrb[0].mxu0
      %v428 = vpop.f32.mrb[0].mxu0
      %v429 = vadd.f32 %v261, %v428
      %v430 = vpop.f32.mrb[0].mxu0
      %431 = vmatprep.mubr.bf16.mxu0 0
      %432 = vmatmul.mubr.bf16.gmra.mrb[0].mxu0 %v300
      %v433 = vpop.f32.mrb[0].mxu0
      %v434 = vadd.f32 %v261, %v433
      %v435 = vpop.f32.mrb[0].mxu0
      %v436 = vpop.f32.mrb[0].mxu0
      %v437 = vadd.f32 %v261, %v436
      %v438 = vpop.f32.mrb[0].mxu0
      %439 = vmatprep.mubr.bf16.mxu0 0
      %440 = vmatmul.mubr.bf16.gmra.mrb[0].mxu0 %v301
      %v441 = vpop.f32.mrb[0].mxu0
      %v442 = vadd.f32 %v261, %v441
      %v443 = vpop.f32.mrb[0].mxu0
      %v444 = vpop.f32.mrb[0].mxu0
      %v445 = vadd.f32 %v261, %v444
      %v446 = vpop.f32.mrb[0].mxu0
      %447 = vmatprep.mubr.bf16.mxu0 0
      %448 = vmatmul.mubr.bf16.gmra.mrb[0].mxu0 %v302
      %v449 = vpop.f32.mrb[0].mxu0
      %v450 = vadd.f32 %v261, %v449
      %v451 = vpop.f32.mrb[0].mxu0
      %v452 = vpop.f32.mrb[0].mxu0
      %v453 = vadd.f32 %v261, %v452
      %v454 = vpop.f32.mrb[0].mxu0
      %455 = vdwg.mxu0
      %v456 = vmax.f32 %v394, 0.0
      %v457 = vmax.f32 %v397, 0.0
      %v458 = vmax.f32 %v402, 0.0
      %v459 = vmax.f32 %v405, 0.0
      %v460 = vmax.f32 %v410, 0.0
      %v461 = vmax.f32 %v413, 0.0
      %v462 = vmax.f32 %v418, 0.0
      %v463 = vmax.f32 %v421, 0.0
      %v464 = vmax.f32 %v426, 0.0
      %v465 = vmax.f32 %v429, 0.0
      %v466 = vmax.f32 %v434, 0.0
      %v467 = vmax.f32 %v437, 0.0
      %v468 = vmax.f32 %v442, 0.0
      %v469 = vmax.f32 %v445, 0.0
      %v470 = vmax.f32 %v450, 0.0
      %v471 = vmax.f32 %v453, 0.0
      %v472 = vld [vmem:[%s215] sm:$0xf]
      %v473 = vld [vmem:[%s215 + $0x4] sm:$0xf]
      %v474 = vld [vmem:[%s215 + $0x8] sm:$0xf]
      %v475 = vld [vmem:[%s215 + $0xc] sm:$0xf]
      %v476 = vld [vmem:[%s215 + $0x10] sm:$0xf]
      %v477 = vld [vmem:[%s215 + $0x14] sm:$0xf]
      %v478 = vld [vmem:[%s215 + $0x18] sm:$0xf]
      %v479 = vld [vmem:[%s215 + $0x1c] sm:$0xf]
      %v480 = vld [vmem:[%s215 + $0x20] sm:$0xf]
      %v481 = vld [vmem:[%s215 + $0x24] sm:$0xf]
      %v482 = vld [vmem:[%s215 + $0x28] sm:$0xf]
      %v483 = vld [vmem:[%s215 + $0x2c] sm:$0xf]
      %v484 = vld [vmem:[%s215 + $0x30] sm:$0xf]
      %v485 = vld [vmem:[%s215 + $0x34] sm:$0xf]
      %v486 = vld [vmem:[%s215 + $0x38] sm:$0xf]
      %v487 = vld [vmem:[%s215 + $0x3c] sm:$0xf]
      %v488 = vunpack.c.l.bf16 %v472
      %v489 = vunpack.c.l.bf16 %v473
      %v490 = vunpack.c.l.bf16 %v474
      %v491 = vunpack.c.l.bf16 %v475
      %v492 = vunpack.c.l.bf16 %v476
      %v493 = vunpack.c.l.bf16 %v477
      %v494 = vunpack.c.l.bf16 %v478
      %v495 = vunpack.c.l.bf16 %v479
      %v496 = vunpack.c.l.bf16 %v480
      %v497 = vunpack.c.l.bf16 %v481
      %v498 = vunpack.c.l.bf16 %v482
      %v499 = vunpack.c.l.bf16 %v483
      %v500 = vunpack.c.l.bf16 %v484
      %v501 = vunpack.c.l.bf16 %v485
      %v502 = vunpack.c.l.bf16 %v486
      %v503 = vunpack.c.l.bf16 %v487
      %v504 = vadd.f32 %v456, %v488
      %v505 = vadd.f32 %v457, %v489
      %v506 = vadd.f32 %v458, %v490
      %v507 = vadd.f32 %v459, %v491
      %v508 = vadd.f32 %v460, %v492
      %v509 = vadd.f32 %v461, %v493
      %v510 = vadd.f32 %v462, %v494
      %v511 = vadd.f32 %v463, %v495
      %v512 = vadd.f32 %v464, %v496
      %v513 = vadd.f32 %v465, %v497
      %v514 = vadd.f32 %v466, %v498
      %v515 = vadd.f32 %v467, %v499
      %v516 = vadd.f32 %v468, %v500
      %v517 = vadd.f32 %v469, %v501
      %v518 = vadd.f32 %v470, %v502
      %v519 = vadd.f32 %v471, %v503
      %v520 = vpack.c.bf16 %v505, %v504
      %v521 = vpack.c.bf16 %v507, %v506
      %v522 = vpack.c.bf16 %v509, %v508
      %v523 = vpack.c.bf16 %v511, %v510
      %v524 = vpack.c.bf16 %v513, %v512
      %v525 = vpack.c.bf16 %v515, %v514
      %v526 = vpack.c.bf16 %v517, %v516
      %v527 = vpack.c.bf16 %v519, %v518
      %v536 = vunpack.c.l.b16 %v520
      %v537 = vunpack.c.h.b16 %v520
      %v538 = vunpack.c.l.b16 %v521
      %v539 = vunpack.c.h.b16 %v521
      %v540 = vunpack.c.l.b16 %v522
      %v541 = vunpack.c.h.b16 %v522
      %v542 = vunpack.c.l.b16 %v523
      %v543 = vunpack.c.h.b16 %v523
      %v544 = vunpack.c.l.b16 %v524
      %v545 = vunpack.c.h.b16 %v524
      %v546 = vunpack.c.l.b16 %v525
      %v547 = vunpack.c.h.b16 %v525
      %v548 = vunpack.c.l.b16 %v526
      %v549 = vunpack.c.h.b16 %v526
      %v550 = vunpack.c.l.b16 %v527
      %v551 = vunpack.c.h.b16 %v527
      %v552 = vpack.c.b16 %v536, %v536
      %v553 = vpack.c.b16 %v537, %v537
      %v554 = vpack.c.b16 %v538, %v538
      %v555 = vpack.c.b16 %v539, %v539
      %v556 = vpack.c.b16 %v540, %v540
      %v557 = vpack.c.b16 %v541, %v541
      %v558 = vpack.c.b16 %v542, %v542
      %v559 = vpack.c.b16 %v543, %v543
      %v560 = vpack.c.b16 %v544, %v544
      %v561 = vpack.c.b16 %v545, %v545
      %v562 = vpack.c.b16 %v546, %v546
      %v563 = vpack.c.b16 %v547, %v547
      %v564 = vpack.c.b16 %v548, %v548
      %v565 = vpack.c.b16 %v549, %v549
      %v566 = vpack.c.b16 %v550, %v550
      %v567 = vpack.c.b16 %v551, %v551
      %584 = vst [vmem:[%s221] sm:$0xf] %v552
      %585 = vst [vmem:[%s221 + $0x4] sm:$0xf] %v553
      %586 = vst [vmem:[%s221 + $0x8] sm:$0xf] %v554
      %587 = vst [vmem:[%s221 + $0xc] sm:$0xf] %v555
      %588 = vst [vmem:[%s221 + $0x10] sm:$0xf] %v556
      %589 = vst [vmem:[%s221 + $0x14] sm:$0xf] %v557
      %590 = vst [vmem:[%s221 + $0x18] sm:$0xf] %v558
      %591 = vst [vmem:[%s221 + $0x1c] sm:$0xf] %v559
      %592 = vst [vmem:[%s221 + $0x20] sm:$0xf] %v560
      %593 = vst [vmem:[%s221 + $0x24] sm:$0xf] %v561
      %594 = vst [vmem:[%s221 + $0x28] sm:$0xf] %v562
      %595 = vst [vmem:[%s221 + $0x2c] sm:$0xf] %v563
      %596 = vst [vmem:[%s221 + $0x30] sm:$0xf] %v564
      %597 = vst [vmem:[%s221 + $0x34] sm:$0xf] %v565
      %598 = vst [vmem:[%s221 + $0x38] sm:$0xf] %v566
      %599 = vst [vmem:[%s221 + $0x3c] sm:$0xf] %v567
      %s600 = smul.u32 16, %s15
      %p601 = scmp.lt.s32.totalorder %s600, 31
      %s602 = scalar_select %p601, %s600, 31
      %s603 = smul.addr %s602, 4
      %s604 = scalar_lea.vmem %s4, %s603
      // Predicated region
      $region37: #{mxmnet_forward.14} parent=35 // pred_check
        %p605 = pneg %p127
      $region38: #{mxmnet_forward.14} parent=35 // pred_check_branch
        %607 = sbr.rel (%p605) target = $region40
      $region39: #{mxmnet_forward.14} parent=35 // pred_region
        %s608 = smul.u32 16, %s15
      $region40: #{mxmnet_forward.14} parent=35 // pred_fallthru
        _
    $region36: #{mxmnet_forward.14} parent=5 // pred_fallthru
      _
    %p609 = scmp.le.s32.totalorder 2, %s10
    // Predicated region
    $region41: #{mxmnet_forward.14} parent=5 // pred_check
      %p610 = pneg %p609
    $region42: #{mxmnet_forward.14} parent=5 // pred_check_branch
      %612 = sbr.rel (%p610) target = $region44
    $region43: #{mxmnet_forward.14} parent=5 // pred_region
      %s613 = ssub.s32 %s10, 2
      // Predicated region
      $region45: #{mxmnet_forward.14} parent=43 // pred_check
        %p614 = pneg %p133
      $region46: #{mxmnet_forward.14} parent=43 // pred_check_branch
        %616 = sbr.rel (%p614) target = $region48
      $region47: #{mxmnet_forward.14} parent=43 // pred_region
        %s617 = smul.u32 16, %s16
        %p618 = scmp.lt.s32.totalorder %s617, 31
        %s619 = scalar_select %p618, %s617, 31
        %s620 = smul.addr %s619, 4
        %s621 = scalar_lea.vmem %s4, %s620
      $region48: #{mxmnet_forward.14} parent=43 // pred_fallthru
        _
    $region44: #{mxmnet_forward.14} parent=5 // pred_fallthru
      _
  $region6: #{mxmnet_forward.14} parent=0 // loop_footer
    %s14 = sadd.s32 1, %s10
  $region7: #{mxmnet_forward.14} parent=0 // loop_footer_branch
    %9 = sbr.rel target = $region3
  $region8: #{mxmnet_forward.14} parent=0 // loop_exit
    _

// kernel: mxmnet_forward.13
$region0: #{mxmnet_forward.13}
  #allocation0 [shape = 'u32[]', space=smem, size = 0x4, offset = 0x4, fixed_abs, tag = 'smem constant byte address 0x4 - core index']
  #allocation1 [shape = 'u32[144,128]{1,0:T(1,128)}', space=vmem, size = 0x12000, scoped, tag = 'internal scratch']
  #allocation2 [shape = 'f32[128,128]{1,0:T(8,128)}', space=vmem, size = 0x10000, scoped, tag = 'scratch operand']
  %s0 = inlined_call_operand.vmem [shape: bf16[256,256], index: 0, kind: input, shape index: {}]
  %s1 = inlined_call_operand.vmem [shape: bf16[256,256], index: 1, kind: input, shape index: {}]
  %s2 = inlined_call_operand.vmem [shape: bf16[256,128], index: 2, kind: input, shape index: {}, may-alias: {2,5}]
  %s3 = inlined_call_operand.vmem [shape: bf16[128,128], index: 3, kind: input, shape index: {}]
  %s4 = inlined_call_operand.vmem [shape: f32[1,128], index: 4, kind: input, shape index: {}]
  %s5 = inlined_call_operand.vmem [shape: bf16[256,128], index: 5, kind: input, shape index: {}, may-alias: {2,5}]
  %s6 = inlined_call_operand.vmem [shape: bf16[256,128], index: 6, kind: output, shape index: {}]
  %s7 = sld [smem:[#allocation0]]
  $region65: #{mxmnet_forward.13} parent=0
    _
  %s9 = ssub.s32 1, %s7
  %s10 = scalar_select 0, %s9, %s7
  loop: start=0, step=1, limit=4
  $region2: #{mxmnet_forward.13} parent=0 // loop_pre_header
    _
  $region3: #{mxmnet_forward.13} parent=0 // loop_header
    %s12 = sphi 0, %s16
    %p13 = scmp.ge.s32.totalorder %s12, 4
    %s19 = sphi 0, %s31
    %s20 = sphi 0, %s27
    %s21 = sphi 0, %s19
    %s22 = sphi 0, %s20
    %s23 = sphi 0, %s21
    %s24 = sphi 0, %s22
    %s36 = sphi 0, %s38
    %s39 = sphi 0, %s36
    %s40 = sphi 0, %s39
    %s56 = sphi 0, %s40
    %s64 = sphi 0, %s66
    %s67 = sphi 0, %s64
    %s68 = sphi 0, %s67
    %s84 = sphi 0, %s68
    %s90 = sphi 0, %s92
    %s93 = sphi 0, %s90
    %s94 = sphi 0, %s93
    %s110 = sphi 0, %s94
    %s114 = sphi 0, %s114
    %s116 = sphi 0, %s114
    %s117 = sphi 0, %s116
    %s131 = sphi 0, %s117
    %s135 = sphi 0, %s135
    %s137 = sphi 0, %s135
    %s138 = sphi 0, %s137
    %s152 = sphi 0, %s138
    %s158 = sphi 0, %s160
    %s161 = sphi 0, %s158
    %s162 = sphi 0, %s161
    %s178 = sphi 0, %s162
    %s184 = sphi 0, %s186
    %s187 = sphi 0, %s184
    %s188 = sphi 0, %s187
    %s204 = sphi 0, %s188
  $region4: #{mxmnet_forward.13} parent=0 // loop_header_branch
    %15 = sbr.rel (%p13) target = $region8
  $region5: #{mxmnet_forward.13} parent=0 // loop_body
    %s17 = ssub.s32 %s12, 1
    %s18 = ssub.s32 %s12, 2
    %s25 = sadd.s32 1, %s20
    %p26 = scmp.ge.s32.totalorder %s25, 1
    %s27 = scalar_select %p26, 0, %s25
    %s28 = sadd.s32 1, %s19
    %s29 = scalar_select %p26, %s28, %s19
    %p30 = scmp.ge.s32.totalorder %s29, 2
    %s31 = scalar_select %p30, 0, %s29
    %s32 = ssub.s32 %s19, %s31
    %s33 = ssub.s32 %s20, %s27
    %s34 = sor.u32 %s32, %s33
    %p35 = scmp.eq.s32.totalorder %s34, 0
    %s37 = sadd.s32 %s36, 1
    %s38 = scalar_select %p35, %s36, %s37
    %p41 = pneg %p35
    %p42 = scmp.eq.s32.totalorder %s12, 1
    %p43 = por %p41, %p42
    %p44 = scmp.ne.s32.totalorder %s36, %s39
    %p45 = scmp.eq.s32.totalorder %s12, 0
    %p46 = por %p44, %p45
    %p47 = scmp.ne.s32.totalorder %s36, %s39
    %p48 = scmp.eq.s32.totalorder %s17, 1
    %p49 = por %p47, %p48
    %p50 = scmp.ne.s32.totalorder %s39, %s40
    %p51 = scmp.eq.s32.totalorder %s17, 0
    %p52 = por %p50, %p51
    %p53 = scmp.ne.s32.totalorder %s39, %s40
    %p54 = scmp.eq.s32.totalorder %s18, 1
    %p55 = por %p53, %p54
    %p57 = scmp.ne.s32.totalorder %s40, %s56
    %p58 = scmp.eq.s32.totalorder %s18, 0
    %p59 = por %p57, %p58
    %s60 = ssub.s32 %s19, %s31
    %s61 = ssub.s32 %s20, %s27
    %s62 = sor.u32 %s60, %s61
    %p63 = scmp.eq.s32.totalorder %s62, 0
    %s65 = sadd.s32 %s64, 1
    %s66 = scalar_select %p63, %s64, %s65
    %p69 = pneg %p63
    %p70 = scmp.eq.s32.totalorder %s12, 1
    %p71 = por %p69, %p70
    %p72 = scmp.ne.s32.totalorder %s64, %s67
    %p73 = scmp.eq.s32.totalorder %s12, 0
    %p74 = por %p72, %p73
    %p75 = scmp.ne.s32.totalorder %s64, %s67
    %p76 = scmp.eq.s32.totalorder %s17, 1
    %p77 = por %p75, %p76
    %p78 = scmp.ne.s32.totalorder %s67, %s68
    %p79 = scmp.eq.s32.totalorder %s17, 0
    %p80 = por %p78, %p79
    %p81 = scmp.ne.s32.totalorder %s67, %s68
    %p82 = scmp.eq.s32.totalorder %s18, 1
    %p83 = por %p81, %p82
    %p85 = scmp.ne.s32.totalorder %s68, %s84
    %p86 = scmp.eq.s32.totalorder %s18, 0
    %p87 = por %p85, %p86
    %s88 = ssub.s32 %s20, %s27
    %p89 = scmp.eq.s32.totalorder %s88, 0
    %s91 = sadd.s32 %s90, 1
    %s92 = scalar_select %p89, %s90, %s91
    %p95 = pneg %p89
    %p96 = scmp.eq.s32.totalorder %s12, 1
    %p97 = por %p95, %p96
    %p98 = scmp.ne.s32.totalorder %s90, %s93
    %p99 = scmp.eq.s32.totalorder %s12, 0
    %p100 = por %p98, %p99
    %p101 = scmp.ne.s32.totalorder %s90, %s93
    %p102 = scmp.eq.s32.totalorder %s17, 1
    %p103 = por %p101, %p102
    %p104 = scmp.ne.s32.totalorder %s93, %s94
    %p105 = scmp.eq.s32.totalorder %s17, 0
    %p106 = por %p104, %p105
    %p107 = scmp.ne.s32.totalorder %s93, %s94
    %p108 = scmp.eq.s32.totalorder %s18, 1
    %p109 = por %p107, %p108
    %p111 = scmp.ne.s32.totalorder %s94, %s110
    %p112 = scmp.eq.s32.totalorder %s18, 0
    %p113 = por %p111, %p112
    %s115 = sadd.s32 %s114, 1
    %p118 = scmp.eq.s32.totalorder %s12, 1
    %p119 = scmp.ne.s32.totalorder %s114, %s116
    %p120 = scmp.eq.s32.totalorder %s12, 0
    %p121 = por %p119, %p120
    %p122 = scmp.ne.s32.totalorder %s114, %s116
    %p123 = scmp.eq.s32.totalorder %s17, 1
    %p124 = por %p122, %p123
    %p125 = scmp.ne.s32.totalorder %s116, %s117
    %p126 = scmp.eq.s32.totalorder %s17, 0
    %p127 = por %p125, %p126
    %p128 = scmp.ne.s32.totalorder %s116, %s117
    %p129 = scmp.eq.s32.totalorder %s18, 1
    %p130 = por %p128, %p129
    %p132 = scmp.ne.s32.totalorder %s117, %s131
    %p133 = scmp.eq.s32.totalorder %s18, 0
    %p134 = por %p132, %p133
    %s136 = sadd.s32 %s135, 1
    %p139 = scmp.eq.s32.totalorder %s12, 1
    %p140 = scmp.ne.s32.totalorder %s135, %s137
    %p141 = scmp.eq.s32.totalorder %s12, 0
    %p142 = por %p140, %p141
    %p143 = scmp.ne.s32.totalorder %s135, %s137
    %p144 = scmp.eq.s32.totalorder %s17, 1
    %p145 = por %p143, %p144
    %p146 = scmp.ne.s32.totalorder %s137, %s138
    %p147 = scmp.eq.s32.totalorder %s17, 0
    %p148 = por %p146, %p147
    %p149 = scmp.ne.s32.totalorder %s137, %s138
    %p150 = scmp.eq.s32.totalorder %s18, 1
    %p151 = por %p149, %p150
    %p153 = scmp.ne.s32.totalorder %s138, %s152
    %p154 = scmp.eq.s32.totalorder %s18, 0
    %p155 = por %p153, %p154
    %s156 = ssub.s32 %s19, %s31
    %p157 = scmp.eq.s32.totalorder %s156, 0
    %s159 = sadd.s32 %s158, 1
    %s160 = scalar_select %p157, %s158, %s159
    %p163 = pneg %p157
    %p164 = scmp.eq.s32.totalorder %s12, 1
    %p165 = por %p163, %p164
    %p166 = scmp.ne.s32.totalorder %s158, %s161
    %p167 = scmp.eq.s32.totalorder %s12, 0
    %p168 = por %p166, %p167
    %p169 = scmp.ne.s32.totalorder %s158, %s161
    %p170 = scmp.eq.s32.totalorder %s17, 1
    %p171 = por %p169, %p170
    %p172 = scmp.ne.s32.totalorder %s161, %s162
    %p173 = scmp.eq.s32.totalorder %s17, 0
    %p174 = por %p172, %p173
    %p175 = scmp.ne.s32.totalorder %s161, %s162
    %p176 = scmp.eq.s32.totalorder %s18, 1
    %p177 = por %p175, %p176
    %p179 = scmp.ne.s32.totalorder %s162, %s178
    %p180 = scmp.eq.s32.totalorder %s18, 0
    %p181 = por %p179, %p180
    %s182 = ssub.s32 %s19, %s31
    %p183 = scmp.eq.s32.totalorder %s182, 0
    %s185 = sadd.s32 %s184, 1
    %s186 = scalar_select %p183, %s184, %s185
    %p189 = pneg %p183
    %p190 = scmp.eq.s32.totalorder %s12, 1
    %p191 = por %p189, %p190
    %p192 = scmp.ne.s32.totalorder %s184, %s187
    %p193 = scmp.eq.s32.totalorder %s12, 0
    %p194 = por %p192, %p193
    %p195 = scmp.ne.s32.totalorder %s184, %s187
    %p196 = scmp.eq.s32.totalorder %s17, 1
    %p197 = por %p195, %p196
    %p198 = scmp.ne.s32.totalorder %s187, %s188
    %p199 = scmp.eq.s32.totalorder %s17, 0
    %p200 = por %p198, %p199
    %p201 = scmp.ne.s32.totalorder %s187, %s188
    %p202 = scmp.eq.s32.totalorder %s18, 1
    %p203 = por %p201, %p202
    %p205 = scmp.ne.s32.totalorder %s188, %s204
    %p206 = scmp.eq.s32.totalorder %s18, 0
    %p207 = por %p205, %p206
    %p208 = scmp.le.s32.totalorder 1, %s12
    %p209 = scmp.lt.s32.totalorder %s12, 3
    %p210 = pnand %p208, %p209
    %p211 = pneg %p210
    // Predicated region
    $region9: #{mxmnet_forward.13} parent=5 // pred_check
      _
    $region10: #{mxmnet_forward.13} parent=5 // pred_check_branch
      %213 = sbr.rel (%p210) target = $region12
    $region11: #{mxmnet_forward.13} parent=5 // pred_region
      %s214 = ssub.s32 %s12, 1
      // Predicated region
      $region13: #{mxmnet_forward.13} parent=11 // pred_check
        %p215 = pneg %p106
      $region14: #{mxmnet_forward.13} parent=11 // pred_check_branch
        %217 = sbr.rel (%p215) target = $region16
      $region15: #{mxmnet_forward.13} parent=11 // pred_region
        %s218 = smul.u32 32, %s22
        %p219 = scmp.lt.s32.totalorder %s218, 31
        %s220 = scalar_select %p219, %s218, 31
        %s221 = smul.addr %s220, 4
        %s222 = scalar_lea.vmem %s2, %s221
        %s223 = smul.u32 32, %s22
      $region16: #{mxmnet_forward.13} parent=11 // pred_fallthru
        _
      // Predicated region
      $region17: #{mxmnet_forward.13} parent=11 // pred_check
        %p224 = pneg %p127
      $region18: #{mxmnet_forward.13} parent=11 // pred_check_branch
        %226 = sbr.rel (%p224) target = $region20
      $region19: #{mxmnet_forward.13} parent=11 // pred_region
        _
      $region20: #{mxmnet_forward.13} parent=11 // pred_fallthru
        _
      // Predicated region
      $region21: #{mxmnet_forward.13} parent=11 // pred_check
        %p227 = pneg %p148
      $region22: #{mxmnet_forward.13} parent=11 // pred_check_branch
        %229 = sbr.rel (%p227) target = $region24
      $region23: #{mxmnet_forward.13} parent=11 // pred_region
        _
      $region24: #{mxmnet_forward.13} parent=11 // pred_fallthru
        _
    $region12: #{mxmnet_forward.13} parent=5 // pred_fallthru
      _
    %p230 = scmp.lt.s32.totalorder %s12, 2
    // Predicated region
    $region25: #{mxmnet_forward.13} parent=5 // pred_check
      %p231 = pneg %p230
    $region26: #{mxmnet_forward.13} parent=5 // pred_check_branch
      %233 = sbr.rel (%p231) target = $region28
    $region27: #{mxmnet_forward.13} parent=5 // pred_region
      // Predicated region
      $region29: #{mxmnet_forward.13} parent=27 // pred_check
        %p234 = pneg %p46
      $region30: #{mxmnet_forward.13} parent=27 // pred_check_branch
        %236 = sbr.rel (%p234) target = $region32
      $region31: #{mxmnet_forward.13} parent=27 // pred_region
        %s237 = smul.u32 16, %s19
        %s238 = smul.u32 2, %s20
        %p239 = scmp.lt.s32.totalorder %s237, 31
        %s240 = scalar_select %p239, %s237, 31
        %p241 = scmp.lt.s32.totalorder %s238, 1
        %s242 = scalar_select %p241, %s238, 1
        %s243 = smul.addr %s240, 2
        %s244 = sadd.s32 %s242, %s243
        %s245 = smul.addr %s244, 4
        %s246 = scalar_lea.vmem %s0, %s245
        %s247 = smul.u32 16, %s19
        %s248 = smul.u32 2, %s20
      $region32: #{mxmnet_forward.13} parent=27 // pred_fallthru
        _
      // Predicated region
      $region33: #{mxmnet_forward.13} parent=27 // pred_check
        %p249 = pneg %p74
      $region34: #{mxmnet_forward.13} parent=27 // pred_check_branch
        %251 = sbr.rel (%p249) target = $region36
      $region35: #{mxmnet_forward.13} parent=27 // pred_region
        %s252 = smul.u32 16, %s19
        %s253 = smul.u32 2, %s20
        %p254 = scmp.lt.s32.totalorder %s252, 31
        %s255 = scalar_select %p254, %s252, 31
        %p256 = scmp.lt.s32.totalorder %s253, 1
        %s257 = scalar_select %p256, %s253, 1
        %s258 = smul.addr %s255, 2
        %s259 = sadd.s32 %s257, %s258
        %s260 = smul.addr %s259, 4
        %s261 = scalar_lea.vmem %s1, %s260
        %s262 = smul.u32 16, %s19
        %s263 = smul.u32 2, %s20
      $region36: #{mxmnet_forward.13} parent=27 // pred_fallthru
        _
      // Predicated region
      $region37: #{mxmnet_forward.13} parent=27 // pred_check
        %p264 = pneg %p168
      $region38: #{mxmnet_forward.13} parent=27 // pred_check_branch
        %266 = sbr.rel (%p264) target = $region40
      $region39: #{mxmnet_forward.13} parent=27 // pred_region
        %s267 = smul.u32 16, %s19
        %p268 = scmp.lt.s32.totalorder %s267, 31
        %s269 = scalar_select %p268, %s267, 31
        %s270 = smul.addr %s269, 4
        %s271 = scalar_lea.vmem %s5, %s270
        %s272 = smul.u32 16, %s19
      $region40: #{mxmnet_forward.13} parent=27 // pred_fallthru
        _
    $region28: #{mxmnet_forward.13} parent=5 // pred_fallthru
      _
    %p273 = scmp.le.s32.totalorder 1, %s12
    %p274 = scmp.lt.s32.totalorder %s12, 3
    %p275 = pnand %p273, %p274
    %p276 = pneg %p275
    // Predicated region
    $region41: #{mxmnet_forward.13} parent=5 // pred_check
      _
    $region42: #{mxmnet_forward.13} parent=5 // pred_check_branch
      %278 = sbr.rel (%p275) target = $region44
    $region43: #{mxmnet_forward.13} parent=5 // pred_region
      %s279 = ssub.s32 %s12, 1
      %s280 = smul.u32 16, %s21
      %s281 = smul.u32 2, %s22
      %p282 = scmp.lt.s32.totalorder %s280, 31
      %s283 = scalar_select %p282, %s280, 31
      %p284 = scmp.lt.s32.totalorder %s281, 1
      %s285 = scalar_select %p284, %s281, 1
      %s286 = smul.addr %s283, 2
      %s287 = sadd.s32 %s285, %s286
      %s288 = smul.addr %s287, 4
      %s289 = scalar_lea.vmem %s0, %s288
      %p290 = pneg %p52
      %p291 = pneg %p49
      %s292 = smul.u32 16, %s21
      %s293 = smul.u32 2, %s22
      %p294 = scmp.lt.s32.totalorder %s292, 31
      %s295 = scalar_select %p294, %s292, 31
      %p296 = scmp.lt.s32.totalorder %s293, 1
      %s297 = scalar_select %p296, %s293, 1
      %s298 = smul.addr %s295, 2
      %s299 = sadd.s32 %s297, %s298
      %s300 = smul.addr %s299, 4
      %s301 = scalar_lea.vmem %s1, %s300
      %p302 = pneg %p80
      %p303 = pneg %p77
      %s304 = smul.u32 32, %s22
      %p305 = scmp.lt.s32.totalorder %s304, 31
      %s306 = scalar_select %p305, %s304, 31
      %s307 = smul.addr %s306, 4
      %s308 = scalar_lea.vmem %s2, %s307
      %p309 = pneg %p106
      %p310 = pneg %p103
      %p311 = pneg %p127
      %p312 = pneg %p124
      %p313 = pneg %p148
      %p314 = pneg %p145
      %s315 = smul.u32 16, %s21
      %p316 = scmp.lt.s32.totalorder %s315, 31
      %s317 = scalar_select %p316, %s315, 31
      %s318 = smul.addr %s317, 4
      %s319 = scalar_lea.vmem %s5, %s318
      %p320 = pneg %p174
      %p321 = pneg %p171
      %p322 = pneg %p200
      %p323 = pneg %p197
      %s324 = smul.u32 16, %s21
      %p325 = scmp.lt.s32.totalorder %s324, 31
      %s326 = scalar_select %p325, %s324, 31
      %s327 = smul.addr %s326, 4
      %s328 = scalar_lea.vmem %s6, %s327
      %s329 = smul.u32 16, %s21
      %s330 = smul.u32 2, %s22
      %p331 = scmp.lt.s32.totalorder %s329, 31
      %s332 = scalar_select %p331, %s329, 31
      %p333 = scmp.lt.s32.totalorder %s330, 1
      %s334 = scalar_select %p333, %s330, 1
      %s335 = smul.addr %s332, 2
      %s336 = sadd.s32 %s334, %s335
      %s337 = smul.addr %s336, 4
      %s338 = scalar_lea.vmem %s0, %s337
      %s339 = smul.u32 16, %s21
      %s340 = smul.u32 2, %s22
      %s341 = smul.u32 16, %s21
      %s342 = smul.u32 2, %s22
      %p343 = scmp.lt.s32.totalorder %s341, 31
      %s344 = scalar_select %p343, %s341, 31
      %p345 = scmp.lt.s32.totalorder %s342, 1
      %s346 = scalar_select %p345, %s342, 1
      %s347 = smul.addr %s344, 2
      %s348 = sadd.s32 %s346, %s347
      %s349 = smul.addr %s348, 4
      %s350 = scalar_lea.vmem %s1, %s349
      %s351 = smul.u32 16, %s21
      %s352 = smul.u32 2, %s22
      %s353 = smul.u32 32, %s22
      %p354 = scmp.lt.s32.totalorder %s353, 31
      %s355 = scalar_select %p354, %s353, 31
      %s356 = smul.addr %s355, 4
      %s357 = scalar_lea.vmem %s2, %s356
      %s358 = smul.u32 32, %s22
      %s359 = smul.u32 16, %s21
      %p360 = scmp.lt.s32.totalorder %s359, 31
      %s361 = scalar_select %p360, %s359, 31
      %s362 = smul.addr %s361, 4
      %s363 = scalar_lea.vmem %s5, %s362
      %s364 = smul.u32 16, %s21
      %s365 = smul.u32 16, %s21
      %p366 = scmp.lt.s32.totalorder %s365, 31
      %s367 = scalar_select %p366, %s365, 31
      %s368 = smul.addr %s367, 4
      %s369 = scalar_lea.vmem %s6, %s368
      %s370 = smul.u32 16, %s21
      %p372 = scmp.eq.s32.totalorder %s22, 0
      // Predicated region
      $region45: #{mxmnet_forward.13} parent=43 // pred_check
        %p373 = pneg %p372
      $region46: #{mxmnet_forward.13} parent=43 // pred_check_branch
        %375 = sbr.rel (%p373) target = $region48
      $region47: #{mxmnet_forward.13} parent=43 // pred_region
        %376 = vst [vmem:[#allocation2] sm:$0xff] 0.0
        %377 = vst [vmem:[#allocation2 + $0x8] sm:$0xff] 0.0
        %378 = vst [vmem:[#allocation2 + $0x10] sm:$0xff] 0.0
        %379 = vst [vmem:[#allocation2 + $0x18] sm:$0xff] 0.0
        %380 = vst [vmem:[#allocation2 + $0x20] sm:$0xff] 0.0
        %381 = vst [vmem:[#allocation2 + $0x28] sm:$0xff] 0.0
        %382 = vst [vmem:[#allocation2 + $0x30] sm:$0xff] 0.0
        %383 = vst [vmem:[#allocation2 + $0x38] sm:$0xff] 0.0
        %384 = vst [vmem:[#allocation2 + $0x40] sm:$0xff] 0.0
        %385 = vst [vmem:[#allocation2 + $0x48] sm:$0xff] 0.0
        %386 = vst [vmem:[#allocation2 + $0x50] sm:$0xff] 0.0
        %387 = vst [vmem:[#allocation2 + $0x58] sm:$0xff] 0.0
        %388 = vst [vmem:[#allocation2 + $0x60] sm:$0xff] 0.0
        %389 = vst [vmem:[#allocation2 + $0x68] sm:$0xff] 0.0
        %390 = vst [vmem:[#allocation2 + $0x70] sm:$0xff] 0.0
        %391 = vst [vmem:[#allocation2 + $0x78] sm:$0xff] 0.0
      $region48: #{mxmnet_forward.13} parent=43 // pred_fallthru
        _
      %v392 = vld [vmem:[%s357] sm:$0xf]
      %v393 = vld [vmem:[%s357 + $0x4] sm:$0xf]
      %v394 = vld [vmem:[%s357 + $0x8] sm:$0xf]
      %v395 = vld [vmem:[%s357 + $0xc] sm:$0xf]
      %v396 = vld [vmem:[%s357 + $0x10] sm:$0xf]
      %v397 = vld [vmem:[%s357 + $0x14] sm:$0xf]
      %v398 = vld [vmem:[%s357 + $0x18] sm:$0xf]
      %v399 = vld [vmem:[%s357 + $0x1c] sm:$0xf]
      %v400 = vld [vmem:[%s357 + $0x20] sm:$0xf]
      %v401 = vld [vmem:[%s357 + $0x24] sm:$0xf]
      %v402 = vld [vmem:[%s357 + $0x28] sm:$0xf]
      %v403 = vld [vmem:[%s357 + $0x2c] sm:$0xf]
      %v404 = vld [vmem:[%s357 + $0x30] sm:$0xf]
      %v405 = vld [vmem:[%s357 + $0x34] sm:$0xf]
      %v406 = vld [vmem:[%s357 + $0x38] sm:$0xf]
      %v407 = vld [vmem:[%s357 + $0x3c] sm:$0xf]
      %v408 = vld [vmem:[%s357 + $0x40] sm:$0xf]
      %v409 = vld [vmem:[%s357 + $0x44] sm:$0xf]
      %v410 = vld [vmem:[%s357 + $0x48] sm:$0xf]
      %v411 = vld [vmem:[%s357 + $0x4c] sm:$0xf]
      %v412 = vld [vmem:[%s357 + $0x50] sm:$0xf]
      %v413 = vld [vmem:[%s357 + $0x54] sm:$0xf]
      %v414 = vld [vmem:[%s357 + $0x58] sm:$0xf]
      %v415 = vld [vmem:[%s357 + $0x5c] sm:$0xf]
      %v416 = vld [vmem:[%s357 + $0x60] sm:$0xf]
      %v417 = vld [vmem:[%s357 + $0x64] sm:$0xf]
      %v418 = vld [vmem:[%s357 + $0x68] sm:$0xf]
      %v419 = vld [vmem:[%s357 + $0x6c] sm:$0xf]
      %v420 = vld [vmem:[%s357 + $0x70] sm:$0xf]
      %v421 = vld [vmem:[%s357 + $0x74] sm:$0xf]
      %v422 = vld [vmem:[%s357 + $0x78] sm:$0xf]
      %v423 = vld [vmem:[%s357 + $0x7c] sm:$0xf]
      %v424 = vld [vmem:[%s3] sm:$0xf]
      %v425 = vld [vmem:[%s3 + $0x4] sm:$0xf]
      %v426 = vld [vmem:[%s3 + $0x8] sm:$0xf]
      %v427 = vld [vmem:[%s3 + $0xc] sm:$0xf]
      %v428 = vld [vmem:[%s3 + $0x10] sm:$0xf]
      %v429 = vld [vmem:[%s3 + $0x14] sm:$0xf]
      %v430 = vld [vmem:[%s3 + $0x18] sm:$0xf]
      %v431 = vld [vmem:[%s3 + $0x1c] sm:$0xf]
      %v432 = vld [vmem:[%s3 + $0x20] sm:$0xf]
      %v433 = vld [vmem:[%s3 + $0x24] sm:$0xf]
      %v434 = vld [vmem:[%s3 + $0x28] sm:$0xf]
      %v435 = vld [vmem:[%s3 + $0x2c] sm:$0xf]
      %v436 = vld [vmem:[%s3 + $0x30] sm:$0xf]
      %v437 = vld [vmem:[%s3 + $0x34] sm:$0xf]
      %v438 = vld [vmem:[%s3 + $0x38] sm:$0xf]
      %v439 = vld [vmem:[%s3 + $0x3c] sm:$0xf]
      %v440 = vld [vmem:[%s4] sm:$0x1]
      %v442 = vlaneseq
      %v443 = vshrl.u32 %v442, 7
      %v444 = vsub.s32 0, %v443
      %v445 = vrot.slane %v440, %v444
      %v479 = vunpack.c.l.b16 %v392
      %v480 = vunpack.c.l.b16 %v393
      %v481 = vunpack.c.l.b16 %v394
      %v482 = vunpack.c.l.b16 %v395
      %v483 = vunpack.c.l.b16 %v396
      %v484 = vunpack.c.l.b16 %v397
      %v485 = vunpack.c.l.b16 %v398
      %v486 = vunpack.c.l.b16 %v399
      %v487 = vunpack.c.l.b16 %v400
      %v488 = vunpack.c.l.b16 %v401
      %v489 = vunpack.c.l.b16 %v402
      %v490 = vunpack.c.l.b16 %v403
      %v491 = vunpack.c.l.b16 %v404
      %v492 = vunpack.c.l.b16 %v405
      %v493 = vunpack.c.l.b16 %v406
      %v494 = vunpack.c.l.b16 %v407
      %v495 = vunpack.c.l.b16 %v408
      %v496 = vunpack.c.l.b16 %v409
      %v497 = vunpack.c.l.b16 %v410
      %v498 = vunpack.c.l.b16 %v411
      %v499 = vunpack.c.l.b16 %v412
      %v500 = vunpack.c.l.b16 %v413
      %v501 = vunpack.c.l.b16 %v414
      %v502 = vunpack.c.l.b16 %v415
      %v503 = vunpack.c.l.b16 %v416
      %v504 = vunpack.c.l.b16 %v417
      %v505 = vunpack.c.l.b16 %v418
      %v506 = vunpack.c.l.b16 %v419
      %v507 = vunpack.c.l.b16 %v420
      %v508 = vunpack.c.l.b16 %v421
      %v509 = vunpack.c.l.b16 %v422
      %v510 = vunpack.c.l.b16 %v423
      %v511 = vpack.c.b16 %v480, %v479
      %v512 = vpack.c.b16 %v482, %v481
      %v513 = vpack.c.b16 %v484, %v483
      %v514 = vpack.c.b16 %v486, %v485
      %v515 = vpack.c.b16 %v488, %v487
      %v516 = vpack.c.b16 %v490, %v489
      %v517 = vpack.c.b16 %v492, %v491
      %v518 = vpack.c.b16 %v494, %v493
      %v519 = vpack.c.b16 %v496, %v495
      %v520 = vpack.c.b16 %v498, %v497
      %v521 = vpack.c.b16 %v500, %v499
      %v522 = vpack.c.b16 %v502, %v501
      %v523 = vpack.c.b16 %v504, %v503
      %v524 = vpack.c.b16 %v506, %v505
      %v525 = vpack.c.b16 %v508, %v507
      %v526 = vpack.c.b16 %v510, %v509
      %v559 = vunpack.c.l.b16 %v424
      %v560 = vunpack.c.l.b16 %v425
      %v561 = vunpack.c.l.b16 %v426
      %v562 = vunpack.c.l.b16 %v427
      %v563 = vunpack.c.l.b16 %v428
      %v564 = vunpack.c.l.b16 %v429
      %v565 = vunpack.c.l.b16 %v430
      %v566 = vunpack.c.l.b16 %v431
      %v567 = vunpack.c.l.b16 %v432
      %v568 = vunpack.c.l.b16 %v433
      %v569 = vunpack.c.l.b16 %v434
      %v570 = vunpack.c.l.b16 %v435
      %v571 = vunpack.c.l.b16 %v436
      %v572 = vunpack.c.l.b16 %v437
      %v573 = vunpack.c.l.b16 %v438
      %v574 = vunpack.c.l.b16 %v439
      %v575 = vpack.c.b16 %v560, %v559
      %v576 = vpack.c.b16 %v562, %v561
      %v577 = vpack.c.b16 %v564, %v563
      %v578 = vpack.c.b16 %v566, %v565
      %v579 = vpack.c.b16 %v568, %v567
      %v580 = vpack.c.b16 %v570, %v569
      %v581 = vpack.c.b16 %v572, %v571
      %v582 = vpack.c.b16 %v574, %v573
      %591 = vmatprep.subr.bf16.mxu0 0
      %592 = vmatpush1.bf16.msra.mxu0 %v575
      %593 = vmatprep.subr.bf16.mxu0 0
      %594 = vmatpush1.bf16.msra.mxu0 %v576
      %595 = vmatprep.subr.bf16.mxu0 0
      %596 = vmatpush1.bf16.msra.mxu0 %v577
      %597 = vmatprep.subr.bf16.mxu0 0
      %598 = vmatpush1.bf16.msra.mxu0 %v578
      %599 = vmatprep.subr.bf16.mxu0 0
      %600 = vmatpush1.bf16.msra.mxu0 %v579
      %601 = vmatprep.subr.bf16.mxu0 0
      %602 = vmatpush1.bf16.msra.mxu0 %v580
      %603 = vmatprep.subr.bf16.mxu0 0
      %604 = vmatpush1.bf16.msra.mxu0 %v581
      %605 = vmatprep.subr.bf16.mxu0 0
      %606 = vmatpush1.bf16.msra.mxu0 %v582
      %607 = vmatprep.subr.bf16.mxu0 0
      %608 = vmatpush1.bf16.msra.mxu0 0
      %609 = vmatprep.subr.bf16.mxu0 0
      %610 = vmatpush1.bf16.msra.mxu0 0
      %611 = vmatprep.subr.bf16.mxu0 0
      %612 = vmatpush1.bf16.msra.mxu0 0
      %613 = vmatprep.subr.bf16.mxu0 0
      %614 = vmatpush1.bf16.msra.mxu0 0
      %615 = vmatprep.subr.bf16.mxu0 0
      %616 = vmatpush1.bf16.msra.mxu0 0
      %617 = vmatprep.subr.bf16.mxu0 0
      %618 = vmatpush1.bf16.msra.mxu0 0
      %619 = vmatprep.subr.bf16.mxu0 0
      %620 = vmatpush1.bf16.msra.mxu0 0
      %621 = vmatprep.subr.bf16.mxu0 0
      %622 = vmatpush1.bf16.msra.mxu0 0
      %623 = vmatprep.mubr.bf16.mxu0 0
      %624 = vmatmul.mubr.bf16.gmra.mrb[0].mxu0 %v511
      %v625 = vpop.f32.mrb[0].mxu0
      %v626 = vadd.f32 %v445, %v625
      %v627 = vpop.f32.mrb[0].mxu0
      %v628 = vpop.f32.mrb[0].mxu0
      %v629 = vadd.f32 %v445, %v628
      %v630 = vpop.f32.mrb[0].mxu0
      %631 = vmatprep.mubr.bf16.mxu0 0
      %632 = vmatmul.mubr.bf16.gmra.mrb[0].mxu0 %v512
      %v633 = vpop.f32.mrb[0].mxu0
      %v634 = vadd.f32 %v445, %v633
      %v635 = vpop.f32.mrb[0].mxu0
      %v636 = vpop.f32.mrb[0].mxu0
      %v637 = vadd.f32 %v445, %v636
      %v638 = vpop.f32.mrb[0].mxu0
      %639 = vmatprep.mubr.bf16.mxu0 0
      %640 = vmatmul.mubr.bf16.gmra.mrb[0].mxu0 %v513
      %v641 = vpop.f32.mrb[0].mxu0
      %v642 = vadd.f32 %v445, %v641
      %v643 = vpop.f32.mrb[0].mxu0
      %v644 = vpop.f32.mrb[0].mxu0
      %v645 = vadd.f32 %v445, %v644
      %v646 = vpop.f32.mrb[0].mxu0
      %647 = vmatprep.mubr.bf16.mxu0 0
      %648 = vmatmul.mubr.bf16.gmra.mrb[0].mxu0 %v514
      %v649 = vpop.f32.mrb[0].mxu0
      %v650 = vadd.f32 %v445, %v649
      %v651 = vpop.f32.mrb[0].mxu0
      %v652 = vpop.f32.mrb[0].mxu0
      %v653 = vadd.f32 %v445, %v652
      %v654 = vpop.f32.mrb[0].mxu0
      %655 = vmatprep.mubr.bf16.mxu0 0
      %656 = vmatmul.mubr.bf16.gmra.mrb[0].mxu0 %v515
      %v657 = vpop.f32.mrb[0].mxu0
      %v658 = vadd.f32 %v445, %v657
      %v659 = vpop.f32.mrb[0].mxu0
      %v660 = vpop.f32.mrb[0].mxu0
      %v661 = vadd.f32 %v445, %v660
      %v662 = vpop.f32.mrb[0].mxu0
      %663 = vmatprep.mubr.bf16.mxu0 0
      %664 = vmatmul.mubr.bf16.gmra.mrb[0].mxu0 %v516
      %v665 = vpop.f32.mrb[0].mxu0
      %v666 = vadd.f32 %v445, %v665
      %v667 = vpop.f32.mrb[0].mxu0
      %v668 = vpop.f32.mrb[0].mxu0
      %v669 = vadd.f32 %v445, %v668
      %v670 = vpop.f32.mrb[0].mxu0
      %671 = vmatprep.mubr.bf16.mxu0 0
      %672 = vmatmul.mubr.bf16.gmra.mrb[0].mxu0 %v517
      %v673 = vpop.f32.mrb[0].mxu0
      %v674 = vadd.f32 %v445, %v673
      %v675 = vpop.f32.mrb[0].mxu0
      %v676 = vpop.f32.mrb[0].mxu0
      %v677 = vadd.f32 %v445, %v676
      %v678 = vpop.f32.mrb[0].mxu0
      %679 = vmatprep.mubr.bf16.mxu0 0
      %680 = vmatmul.mubr.bf16.gmra.mrb[0].mxu0 %v518
      %v681 = vpop.f32.mrb[0].mxu0
      %v682 = vadd.f32 %v445, %v681
      %v683 = vpop.f32.mrb[0].mxu0
      %v684 = vpop.f32.mrb[0].mxu0
      %v685 = vadd.f32 %v445, %v684
      %v686 = vpop.f32.mrb[0].mxu0
      %687 = vmatprep.mubr.bf16.mxu0 0
      %688 = vmatmul.mubr.bf16.gmra.mrb[0].mxu0 %v519
      %v689 = vpop.f32.mrb[0].mxu0
      %v690 = vadd.f32 %v445, %v689
      %v691 = vpop.f32.mrb[0].mxu0
      %v692 = vpop.f32.mrb[0].mxu0
      %v693 = vadd.f32 %v445, %v692
      %v694 = vpop.f32.mrb[0].mxu0
      %695 = vmatprep.mubr.bf16.mxu0 0
      %696 = vmatmul.mubr.bf16.gmra.mrb[0].mxu0 %v520
      %v697 = vpop.f32.mrb[0].mxu0
      %v698 = vadd.f32 %v445, %v697
      %v699 = vpop.f32.mrb[0].mxu0
      %v700 = vpop.f32.mrb[0].mxu0
      %v701 = vadd.f32 %v445, %v700
      %v702 = vpop.f32.mrb[0].mxu0
      %703 = vmatprep.mubr.bf16.mxu0 0
      %704 = vmatmul.mubr.bf16.gmra.mrb[0].mxu0 %v521
      %v705 = vpop.f32.mrb[0].mxu0
      %v706 = vadd.f32 %v445, %v705
      %v707 = vpop.f32.mrb[0].mxu0
      %v708 = vpop.f32.mrb[0].mxu0
      %v709 = vadd.f32 %v445, %v708
      %v710 = vpop.f32.mrb[0].mxu0
      %711 = vmatprep.mubr.bf16.mxu0 0
      %712 = vmatmul.mubr.bf16.gmra.mrb[0].mxu0 %v522
      %v713 = vpop.f32.mrb[0].mxu0
      %v714 = vadd.f32 %v445, %v713
      %v715 = vpop.f32.mrb[0].mxu0
      %v716 = vpop.f32.mrb[0].mxu0
      %v717 = vadd.f32 %v445, %v716
      %v718 = vpop.f32.mrb[0].mxu0
      %719 = vmatprep.mubr.bf16.mxu0 0
      %720 = vmatmul.mubr.bf16.gmra.mrb[0].mxu0 %v523
      %v721 = vpop.f32.mrb[0].mxu0
      %v722 = vadd.f32 %v445, %v721
      %v723 = vpop.f32.mrb[0].mxu0
      %v724 = vpop.f32.mrb[0].mxu0
      %v725 = vadd.f32 %v445, %v724
      %v726 = vpop.f32.mrb[0].mxu0
      %727 = vmatprep.mubr.bf16.mxu0 0
      %728 = vmatmul.mubr.bf16.gmra.mrb[0].mxu0 %v524
      %v729 = vpop.f32.mrb[0].mxu0
      %v730 = vadd.f32 %v445, %v729
      %v731 = vpop.f32.mrb[0].mxu0
      %v732 = vpop.f32.mrb[0].mxu0
      %v733 = vadd.f32 %v445, %v732
      %v734 = vpop.f32.mrb[0].mxu0
      %735 = vmatprep.mubr.bf16.mxu0 0
      %736 = vmatmul.mubr.bf16.gmra.mrb[0].mxu0 %v525
      %v737 = vpop.f32.mrb[0].mxu0
      %v738 = vadd.f32 %v445, %v737
      %v739 = vpop.f32.mrb[0].mxu0
      %v740 = vpop.f32.mrb[0].mxu0
      %v741 = vadd.f32 %v445, %v740
      %v742 = vpop.f32.mrb[0].mxu0
      %743 = vmatprep.mubr.bf16.mxu0 0
      %744 = vmatmul.mubr.bf16.gmra.mrb[0].mxu0 %v526
      %v745 = vpop.f32.mrb[0].mxu0
      %v746 = vadd.f32 %v445, %v745
      %v747 = vpop.f32.mrb[0].mxu0
      %v748 = vpop.f32.mrb[0].mxu0
      %v749 = vadd.f32 %v445, %v748
      %v750 = vpop.f32.mrb[0].mxu0
      %751 = vdwg.mxu0
      %v752 = vpack.c.bf16 %v629, %v626
      %v753 = vpack.c.bf16 %v637, %v634
      %v754 = vpack.c.bf16 %v645, %v642
      %v755 = vpack.c.bf16 %v653, %v650
      %v756 = vpack.c.bf16 %v661, %v658
      %v757 = vpack.c.bf16 %v669, %v666
      %v758 = vpack.c.bf16 %v677, %v674
      %v759 = vpack.c.bf16 %v685, %v682
      %v760 = vpack.c.bf16 %v693, %v690
      %v761 = vpack.c.bf16 %v701, %v698
      %v762 = vpack.c.bf16 %v709, %v706
      %v763 = vpack.c.bf16 %v717, %v714
      %v764 = vpack.c.bf16 %v725, %v722
      %v765 = vpack.c.bf16 %v733, %v730
      %v766 = vpack.c.bf16 %v741, %v738
      %v767 = vpack.c.bf16 %v749, %v746
      %v768 = vld [vmem:[%s338] sm:$0xff]
      %v769 = vld [vmem:[%s338 + $0x8] sm:$0xff]
      %v770 = vld [vmem:[%s338 + $0x10] sm:$0xff]
      %v771 = vld [vmem:[%s338 + $0x18] sm:$0xff]
      %v772 = vld [vmem:[%s338 + $0x20] sm:$0xff]
      %v773 = vld [vmem:[%s338 + $0x28] sm:$0xff]
      %v774 = vld [vmem:[%s338 + $0x30] sm:$0xff]
      %v775 = vld [vmem:[%s338 + $0x38] sm:$0xff]
      %v776 = vld [vmem:[%s338 + $0x40] sm:$0xff]
      %v777 = vld [vmem:[%s338 + $0x48] sm:$0xff]
      %v778 = vld [vmem:[%s338 + $0x50] sm:$0xff]
      %v779 = vld [vmem:[%s338 + $0x58] sm:$0xff]
      %v780 = vld [vmem:[%s338 + $0x60] sm:$0xff]
      %v781 = vld [vmem:[%s338 + $0x68] sm:$0xff]
      %v782 = vld [vmem:[%s338 + $0x70] sm:$0xff]
      %v783 = vld [vmem:[%s338 + $0x78] sm:$0xff]
      %v784 = vld [vmem:[%s350] sm:$0xff]
      %v785 = vld [vmem:[%s350 + $0x8] sm:$0xff]
      %v786 = vld [vmem:[%s350 + $0x10] sm:$0xff]
      %v787 = vld [vmem:[%s350 + $0x18] sm:$0xff]
      %v788 = vld [vmem:[%s350 + $0x20] sm:$0xff]
      %v789 = vld [vmem:[%s350 + $0x28] sm:$0xff]
      %v790 = vld [vmem:[%s350 + $0x30] sm:$0xff]
      %v791 = vld [vmem:[%s350 + $0x38] sm:$0xff]
      %v792 = vld [vmem:[%s350 + $0x40] sm:$0xff]
      %v793 = vld [vmem:[%s350 + $0x48] sm:$0xff]
      %v794 = vld [vmem:[%s350 + $0x50] sm:$0xff]
      %v795 = vld [vmem:[%s350 + $0x58] sm:$0xff]
      %v796 = vld [vmem:[%s350 + $0x60] sm:$0xff]
      %v797 = vld [vmem:[%s350 + $0x68] sm:$0xff]
      %v798 = vld [vmem:[%s350 + $0x70] sm:$0xff]
      %v799 = vld [vmem:[%s350 + $0x78] sm:$0xff]
      %v800 = vmul.bf16 %v768, %v784
      %v801 = vmul.bf16 %v769, %v785
      %v802 = vmul.bf16 %v770, %v786
      %v803 = vmul.bf16 %v771, %v787
      %v804 = vmul.bf16 %v772, %v788
      %v805 = vmul.bf16 %v773, %v789
      %v806 = vmul.bf16 %v774, %v790
      %v807 = vmul.bf16 %v775, %v791
      %v808 = vmul.bf16 %v776, %v792
      %v809 = vmul.bf16 %v777, %v793
      %v810 = vmul.bf16 %v778, %v794
      %v811 = vmul.bf16 %v779, %v795
      %v812 = vmul.bf16 %v780, %v796
      %v813 = vmul.bf16 %v781, %v797
      %v814 = vmul.bf16 %v782, %v798
      %v815 = vmul.bf16 %v783, %v799
      %v816 = vlaneseq
      %v817 = vshrl.u32 %v816, 7
      %v818 = vadd.s32 %v817, 8
      %v819 = vadd.s32 %v817, 16
      %v820 = vadd.s32 %v817, 24
      %v821 = vadd.s32 %v817, 32
      %v822 = vadd.s32 %v817, 40
      %v823 = vadd.s32 %v817, 48
      %v824 = vadd.s32 %v817, 56
      %v825 = vadd.s32 %v817, 64
      %v826 = vadd.s32 %v817, 72
      %v827 = vadd.s32 %v817, 80
      %v828 = vadd.s32 %v817, 88
      %v829 = vadd.s32 %v817, 96
      %v830 = vadd.s32 %v817, 104
      %v831 = vadd.s32 %v817, 112
      %v832 = vadd.s32 %v817, 120
      %s833 = smul.u32 %s21, 128
      %v834 = vstv %s833
      %v835 = vadd.s32 %v817, %v834
      %v836 = vadd.s32 %v818, %v834
      %v837 = vadd.s32 %v819, %v834
      %v838 = vadd.s32 %v820, %v834
      %v839 = vadd.s32 %v821, %v834
      %v840 = vadd.s32 %v822, %v834
      %v841 = vadd.s32 %v823, %v834
      %v842 = vadd.s32 %v824, %v834
      %v843 = vadd.s32 %v825, %v834
      %v844 = vadd.s32 %v826, %v834
      %v845 = vadd.s32 %v827, %v834
      %v846 = vadd.s32 %v828, %v834
      %v847 = vadd.s32 %v829, %v834
      %v848 = vadd.s32 %v830, %v834
      %v849 = vadd.s32 %v831, %v834
      %v850 = vadd.s32 %v832, %v834
      %v851 = vlaneseq
      %v852 = vand.u32 %v851, 127
      %v853 = vadd.s32 %v852, 128
      %s854 = smul.u32 %s22, 256
      %v855 = vstv %s854
      %v856 = vadd.s32 %v852, %v855
      %v857 = vadd.s32 %v853, %v855
      %vm858 = vcmp.eq.s32.totalorder %v835, %v856
      %vm859 = vcmp.eq.s32.totalorder %v835, %v857
      %vm860 = vcmp.eq.s32.totalorder %v836, %v856
      %vm861 = vcmp.eq.s32.totalorder %v836, %v857
      %vm862 = vcmp.eq.s32.totalorder %v837, %v856
      %vm863 = vcmp.eq.s32.totalorder %v837, %v857
      %vm864 = vcmp.eq.s32.totalorder %v838, %v856
      %vm865 = vcmp.eq.s32.totalorder %v838, %v857
      %vm866 = vcmp.eq.s32.totalorder %v839, %v856
      %vm867 = vcmp.eq.s32.totalorder %v839, %v857
      %vm868 = vcmp.eq.s32.totalorder %v840, %v856
      %vm869 = vcmp.eq.s32.totalorder %v840, %v857
      %vm870 = vcmp.eq.s32.totalorder %v841, %v856
      %vm871 = vcmp.eq.s32.totalorder %v841, %v857
      %vm872 = vcmp.eq.s32.totalorder %v842, %v856
      %vm873 = vcmp.eq.s32.totalorder %v842, %v857
      %vm874 = vcmp.eq.s32.totalorder %v843, %v856
      %vm875 = vcmp.eq.s32.totalorder %v843, %v857
      %vm876 = vcmp.eq.s32.totalorder %v844, %v856
      %vm877 = vcmp.eq.s32.totalorder %v844, %v857
      %vm878 = vcmp.eq.s32.totalorder %v845, %v856
      %vm879 = vcmp.eq.s32.totalorder %v845, %v857
      %vm880 = vcmp.eq.s32.totalorder %v846, %v856
      %vm881 = vcmp.eq.s32.totalorder %v846, %v857
      %vm882 = vcmp.eq.s32.totalorder %v847, %v856
      %vm883 = vcmp.eq.s32.totalorder %v847, %v857
      %vm884 = vcmp.eq.s32.totalorder %v848, %v856
      %vm885 = vcmp.eq.s32.totalorder %v848, %v857
      %vm886 = vcmp.eq.s32.totalorder %v849, %v856
      %vm887 = vcmp.eq.s32.totalorder %v849, %v857
      %vm888 = vcmp.eq.s32.totalorder %v850, %v856
      %vm889 = vcmp.eq.s32.totalorder %v850, %v857
      %v890 = vsel %vm858, 1, 0
      %v891 = vsel %vm859, 1, 0
      %v892 = vsel %vm860, 1, 0
      %v893 = vsel %vm861, 1, 0
      %v894 = vsel %vm862, 1, 0
      %v895 = vsel %vm863, 1, 0
      %v896 = vsel %vm864, 1, 0
      %v897 = vsel %vm865, 1, 0
      %v898 = vsel %vm866, 1, 0
      %v899 = vsel %vm867, 1, 0
      %v900 = vsel %vm868, 1, 0
      %v901 = vsel %vm869, 1, 0
      %v902 = vsel %vm870, 1, 0
      %v903 = vsel %vm871, 1, 0
      %v904 = vsel %vm872, 1, 0
      %v905 = vsel %vm873, 1, 0
      %v906 = vsel %vm874, 1, 0
      %v907 = vsel %vm875, 1, 0
      %v908 = vsel %vm876, 1, 0
      %v909 = vsel %vm877, 1, 0
      %v910 = vsel %vm878, 1, 0
      %v911 = vsel %vm879, 1, 0
      %v912 = vsel %vm880, 1, 0
      %v913 = vsel %vm881, 1, 0
      %v914 = vsel %vm882, 1, 0
      %v915 = vsel %vm883, 1, 0
      %v916 = vsel %vm884, 1, 0
      %v917 = vsel %vm885, 1, 0
      %v918 = vsel %vm886, 1, 0
      %v919 = vsel %vm887, 1, 0
      %v920 = vsel %vm888, 1, 0
      %v921 = vsel %vm889, 1, 0
      %v922 = vcvt.s32.f32 %v890
      %v923 = vcvt.s32.f32 %v891
      %v924 = vcvt.s32.f32 %v892
      %v925 = vcvt.s32.f32 %v893
      %v926 = vcvt.s32.f32 %v894
      %v927 = vcvt.s32.f32 %v895
      %v928 = vcvt.s32.f32 %v896
      %v929 = vcvt.s32.f32 %v897
      %v930 = vcvt.s32.f32 %v898
      %v931 = vcvt.s32.f32 %v899
      %v932 = vcvt.s32.f32 %v900
      %v933 = vcvt.s32.f32 %v901
      %v934 = vcvt.s32.f32 %v902
      %v935 = vcvt.s32.f32 %v903
      %v936 = vcvt.s32.f32 %v904
      %v937 = vcvt.s32.f32 %v905
      %v938 = vcvt.s32.f32 %v906
      %v939 = vcvt.s32.f32 %v907
      %v940 = vcvt.s32.f32 %v908
      %v941 = vcvt.s32.f32 %v909
      %v942 = vcvt.s32.f32 %v910
      %v943 = vcvt.s32.f32 %v911
      %v944 = vcvt.s32.f32 %v912
      %v945 = vcvt.s32.f32 %v913
      %v946 = vcvt.s32.f32 %v914
      %v947 = vcvt.s32.f32 %v915
      %v948 = vcvt.s32.f32 %v916
      %v949 = vcvt.s32.f32 %v917
      %v950 = vcvt.s32.f32 %v918
      %v951 = vcvt.s32.f32 %v919
      %v952 = vcvt.s32.f32 %v920
      %v953 = vcvt.s32.f32 %v921
      %v954 = vpack.c.bf16 %v924, %v922
      %v955 = vpack.c.bf16 %v925, %v923
      %v956 = vpack.c.bf16 %v928, %v926
      %v957 = vpack.c.bf16 %v929, %v927
      %v958 = vpack.c.bf16 %v932, %v930
      %v959 = vpack.c.bf16 %v933, %v931
      %v960 = vpack.c.bf16 %v936, %v934
      %v961 = vpack.c.bf16 %v937, %v935
      %v962 = vpack.c.bf16 %v940, %v938
      %v963 = vpack.c.bf16 %v941, %v939
      %v964 = vpack.c.bf16 %v944, %v942
      %v965 = vpack.c.bf16 %v945, %v943
      %v966 = vpack.c.bf16 %v948, %v946
      %v967 = vpack.c.bf16 %v949, %v947
      %v968 = vpack.c.bf16 %v952, %v950
      %v969 = vpack.c.bf16 %v953, %v951
      %v986 = vunpack.c.l.b16 %v954
      %v987 = vunpack.c.l.b16 %v955
      %v988 = vunpack.c.h.b16 %v954
      %v989 = vunpack.c.h.b16 %v955
      %v990 = vunpack.c.l.b16 %v956
      %v991 = vunpack.c.l.b16 %v957
      %v992 = vunpack.c.h.b16 %v956
      %v993 = vunpack.c.h.b16 %v957
      %v994 = vunpack.c.l.b16 %v958
      %v995 = vunpack.c.l.b16 %v959
      %v996 = vunpack.c.h.b16 %v958
      %v997 = vunpack.c.h.b16 %v959
      %v998 = vunpack.c.l.b16 %v960
      %v999 = vunpack.c.l.b16 %v961
      %v1000 = vunpack.c.h.b16 %v960
      %v1001 = vunpack.c.h.b16 %v961
      %v1002 = vunpack.c.l.b16 %v962
      %v1003 = vunpack.c.l.b16 %v963
      %v1004 = vunpack.c.h.b16 %v962
      %v1005 = vunpack.c.h.b16 %v963
      %v1006 = vunpack.c.l.b16 %v964
      %v1007 = vunpack.c.l.b16 %v965
      %v1008 = vunpack.c.h.b16 %v964
      %v1009 = vunpack.c.h.b16 %v965
      %v1010 = vunpack.c.l.b16 %v966
      %v1011 = vunpack.c.l.b16 %v967
      %v1012 = vunpack.c.h.b16 %v966
      %v1013 = vunpack.c.h.b16 %v967
      %v1014 = vunpack.c.l.b16 %v968
      %v1015 = vunpack.c.l.b16 %v969
      %v1016 = vunpack.c.h.b16 %v968
      %v1017 = vunpack.c.h.b16 %v969
      %v1018 = vpack.c.b16 %v987, %v986
      %v1019 = vpack.c.b16 %v989, %v988
      %v1020 = vpack.c.b16 %v991, %v990
      %v1021 = vpack.c.b16 %v993, %v992
      %v1022 = vpack.c.b16 %v995, %v994
      %v1023 = vpack.c.b16 %v997, %v996
      %v1024 = vpack.c.b16 %v999, %v998
      %v1025 = vpack.c.b16 %v1001, %v1000
      %v1026 = vpack.c.b16 %v1003, %v1002
      %v1027 = vpack.c.b16 %v1005, %v1004
      %v1028 = vpack.c.b16 %v1007, %v1006
      %v1029 = vpack.c.b16 %v1009, %v1008
      %v1030 = vpack.c.b16 %v1011, %v1010
      %v1031 = vpack.c.b16 %v1013, %v1012
      %v1032 = vpack.c.b16 %v1015, %v1014
      %v1033 = vpack.c.b16 %v1017, %v1016
      %v1050 = vadd.bf16 %v800, %v1018
      %v1051 = vadd.bf16 %v801, %v1019
      %v1052 = vadd.bf16 %v802, %v1020
      %v1053 = vadd.bf16 %v803, %v1021
      %v1054 = vadd.bf16 %v804, %v1022
      %v1055 = vadd.bf16 %v805, %v1023
      %v1056 = vadd.bf16 %v806, %v1024
      %v1057 = vadd.bf16 %v807, %v1025
      %v1058 = vadd.bf16 %v808, %v1026
      %v1059 = vadd.bf16 %v809, %v1027
      %v1060 = vadd.bf16 %v810, %v1028
      %v1061 = vadd.bf16 %v811, %v1029
      %v1062 = vadd.bf16 %v812, %v1030
      %v1063 = vadd.bf16 %v813, %v1031
      %v1064 = vadd.bf16 %v814, %v1032
      %v1065 = vadd.bf16 %v815, %v1033
      %v1066 = vld [vmem:[#allocation2] sm:$0xff]
      %v1067 = vld [vmem:[#allocation2 + $0x8] sm:$0xff]
      %v1068 = vld [vmem:[#allocation2 + $0x10] sm:$0xff]
      %v1069 = vld [vmem:[#allocation2 + $0x18] sm:$0xff]
      %v1070 = vld [vmem:[#allocation2 + $0x20] sm:$0xff]
      %v1071 = vld [vmem:[#allocation2 + $0x28] sm:$0xff]
      %v1072 = vld [vmem:[#allocation2 + $0x30] sm:$0xff]
      %v1073 = vld [vmem:[#allocation2 + $0x38] sm:$0xff]
      %v1074 = vld [vmem:[#allocation2 + $0x40] sm:$0xff]
      %v1075 = vld [vmem:[#allocation2 + $0x48] sm:$0xff]
      %v1076 = vld [vmem:[#allocation2 + $0x50] sm:$0xff]
      %v1077 = vld [vmem:[#allocation2 + $0x58] sm:$0xff]
      %v1078 = vld [vmem:[#allocation2 + $0x60] sm:$0xff]
      %v1079 = vld [vmem:[#allocation2 + $0x68] sm:$0xff]
      %v1080 = vld [vmem:[#allocation2 + $0x70] sm:$0xff]
      %v1081 = vld [vmem:[#allocation2 + $0x78] sm:$0xff]
      %v1098 = vunpack.c.l.b16 %v1050
      %v1099 = vunpack.c.h.b16 %v1050
      %v1100 = vunpack.c.l.b16 %v1051
      %v1101 = vunpack.c.h.b16 %v1051
      %v1102 = vunpack.c.l.b16 %v1052
      %v1103 = vunpack.c.h.b16 %v1052
      %v1104 = vunpack.c.l.b16 %v1053
      %v1105 = vunpack.c.h.b16 %v1053
      %v1106 = vunpack.c.l.b16 %v1054
      %v1107 = vunpack.c.h.b16 %v1054
      %v1108 = vunpack.c.l.b16 %v1055
      %v1109 = vunpack.c.h.b16 %v1055
      %v1110 = vunpack.c.l.b16 %v1056
      %v1111 = vunpack.c.h.b16 %v1056
      %v1112 = vunpack.c.l.b16 %v1057
      %v1113 = vunpack.c.h.b16 %v1057
      %v1114 = vunpack.c.l.b16 %v1058
      %v1115 = vunpack.c.h.b16 %v1058
      %v1116 = vunpack.c.l.b16 %v1059
      %v1117 = vunpack.c.h.b16 %v1059
      %v1118 = vunpack.c.l.b16 %v1060
      %v1119 = vunpack.c.h.b16 %v1060
      %v1120 = vunpack.c.l.b16 %v1061
      %v1121 = vunpack.c.h.b16 %v1061
      %v1122 = vunpack.c.l.b16 %v1062
      %v1123 = vunpack.c.h.b16 %v1062
      %v1124 = vunpack.c.l.b16 %v1063
      %v1125 = vunpack.c.h.b16 %v1063
      %v1126 = vunpack.c.l.b16 %v1064
      %v1127 = vunpack.c.h.b16 %v1064
      %v1128 = vunpack.c.l.b16 %v1065
      %v1129 = vunpack.c.h.b16 %v1065
      %v1130 = vpack.c.b16 %v1100, %v1098
      %v1131 = vpack.c.b16 %v1101, %v1099
      %v1132 = vpack.c.b16 %v1104, %v1102
      %v1133 = vpack.c.b16 %v1105, %v1103
      %v1134 = vpack.c.b16 %v1108, %v1106
      %v1135 = vpack.c.b16 %v1109, %v1107
      %v1136 = vpack.c.b16 %v1112, %v1110
      %v1137 = vpack.c.b16 %v1113, %v1111
      %v1138 = vpack.c.b16 %v1116, %v1114
      %v1139 = vpack.c.b16 %v1117, %v1115
      %v1140 = vpack.c.b16 %v1120, %v1118
      %v1141 = vpack.c.b16 %v1121, %v1119
      %v1142 = vpack.c.b16 %v1124, %v1122
      %v1143 = vpack.c.b16 %v1125, %v1123
      %v1144 = vpack.c.b16 %v1128, %v1126
      %v1145 = vpack.c.b16 %v1129, %v1127
      %1162 = vmatprep.subr.bf16.mxu0 0
      %1163 = vmatpush1.bf16.msra.mxu0 %v752
      %1164 = vmatprep.subr.bf16.mxu0 0
      %1165 = vmatpush1.bf16.msra.mxu0 %v753
      %1166 = vmatprep.subr.bf16.mxu0 0
      %1167 = vmatpush1.bf16.msra.mxu0 %v754
      %1168 = vmatprep.subr.bf16.mxu0 0
      %1169 = vmatpush1.bf16.msra.mxu0 %v755
      %1170 = vmatprep.subr.bf16.mxu0 0
      %1171 = vmatpush1.bf16.msra.mxu0 %v756
      %1172 = vmatprep.subr.bf16.mxu0 0
      %1173 = vmatpush1.bf16.msra.mxu0 %v757
      %1174 = vmatprep.subr.bf16.mxu0 0
      %1175 = vmatpush1.bf16.msra.mxu0 %v758
      %1176 = vmatprep.subr.bf16.mxu0 0
      %1177 = vmatpush1.bf16.msra.mxu0 %v759
      %1178 = vmatprep.subr.bf16.mxu0 0
      %1179 = vmatpush1.bf16.msra.mxu0 %v760
      %1180 = vmatprep.subr.bf16.mxu0 0
      %1181 = vmatpush1.bf16.msra.mxu0 %v761
      %1182 = vmatprep.subr.bf16.mxu0 0
      %1183 = vmatpush1.bf16.msra.mxu0 %v762
      %1184 = vmatprep.subr.bf16.mxu0 0
      %1185 = vmatpush1.bf16.msra.mxu0 %v763
      %1186 = vmatprep.subr.bf16.mxu0 0
      %1187 = vmatpush1.bf16.msra.mxu0 %v764
      %1188 = vmatprep.subr.bf16.mxu0 0
      %1189 = vmatpush1.bf16.msra.mxu0 %v765
      %1190 = vmatprep.subr.bf16.mxu0 0
      %1191 = vmatpush1.bf16.msra.mxu0 %v766
      %1192 = vmatprep.subr.bf16.mxu0 0
      %1193 = vmatpush1.bf16.msra.mxu0 %v767
      %1194 = vmatprep.mubr.bf16.mxu0 %v1131
      %1195 = vmatmul.mubr.bf16.gmra.mrb[0].mxu0 %v1130
      %v1196 = vpop.f32.mrb[0].mxu0
      %v1197 = vadd.f32 0.0, %v1196
      %v1198 = vpop.f32.mrb[0].mxu0
      %v1199 = vpop.f32.mrb[0].mxu0
      %v1200 = vadd.f32 0.0, %v1199
      %v1201 = vpop.f32.mrb[0].mxu0
      %1202 = vmatprep.mubr.bf16.mxu0 %v1133
      %1203 = vmatmul.mubr.bf16.gmra.mrb[0].mxu0 %v1132
      %v1204 = vpop.f32.mrb[0].mxu0
      %v1205 = vadd.f32 0.0, %v1204
      %v1206 = vpop.f32.mrb[0].mxu0
      %v1207 = vpop.f32.mrb[0].mxu0
      %v1208 = vadd.f32 0.0, %v1207
      %v1209 = vpop.f32.mrb[0].mxu0
      %1210 = vmatprep.mubr.bf16.mxu0 %v1135
      %1211 = vmatmul.mubr.bf16.gmra.mrb[0].mxu0 %v1134
      %v1212 = vpop.f32.mrb[0].mxu0
      %v1213 = vadd.f32 0.0, %v1212
      %v1214 = vpop.f32.mrb[0].mxu0
      %v1215 = vpop.f32.mrb[0].mxu0
      %v1216 = vadd.f32 0.0, %v1215
      %v1217 = vpop.f32.mrb[0].mxu0
      %1218 = vmatprep.mubr.bf16.mxu0 %v1137
      %1219 = vmatmul.mubr.bf16.gmra.mrb[0].mxu0 %v1136
      %v1220 = vpop.f32.mrb[0].mxu0
      %v1221 = vadd.f32 0.0, %v1220
      %v1222 = vpop.f32.mrb[0].mxu0
      %v1223 = vpop.f32.mrb[0].mxu0
      %v1224 = vadd.f32 0.0, %v1223
      %v1225 = vpop.f32.mrb[0].mxu0
      %1226 = vmatprep.mubr.bf16.mxu0 %v1139
      %1227 = vmatmul.mubr.bf16.gmra.mrb[0].mxu0 %v1138
      %v1228 = vpop.f32.mrb[0].mxu0
      %v1229 = vadd.f32 0.0, %v1228
      %v1230 = vpop.f32.mrb[0].mxu0
      %v1231 = vpop.f32.mrb[0].mxu0
      %v1232 = vadd.f32 0.0, %v1231
      %v1233 = vpop.f32.mrb[0].mxu0
      %1234 = vmatprep.mubr.bf16.mxu0 %v1141
      %1235 = vmatmul.mubr.bf16.gmra.mrb[0].mxu0 %v1140
      %v1236 = vpop.f32.mrb[0].mxu0
      %v1237 = vadd.f32 0.0, %v1236
      %v1238 = vpop.f32.mrb[0].mxu0
      %v1239 = vpop.f32.mrb[0].mxu0
      %v1240 = vadd.f32 0.0, %v1239
      %v1241 = vpop.f32.mrb[0].mxu0
      %1242 = vmatprep.mubr.bf16.mxu0 %v1143
      %1243 = vmatmul.mubr.bf16.gmra.mrb[0].mxu0 %v1142
      %v1244 = vpop.f32.mrb[0].mxu0
      %v1245 = vadd.f32 0.0, %v1244
      %v1246 = vpop.f32.mrb[0].mxu0
      %v1247 = vpop.f32.mrb[0].mxu0
      %v1248 = vadd.f32 0.0, %v1247
      %v1249 = vpop.f32.mrb[0].mxu0
      %1250 = vmatprep.mubr.bf16.mxu0 %v1145
      %1251 = vmatmul.mubr.bf16.gmra.mrb[0].mxu0 %v1144
      %v1252 = vpop.f32.mrb[0].mxu0
      %v1253 = vadd.f32 0.0, %v1252
      %v1254 = vpop.f32.mrb[0].mxu0
      %v1255 = vpop.f32.mrb[0].mxu0
      %v1256 = vadd.f32 0.0, %v1255
      %v1257 = vpop.f32.mrb[0].mxu0
      %1258 = vdwg.mxu0
      %v1259 = vadd.f32 %v1066, %v1197
      %v1260 = vadd.f32 %v1067, %v1200
      %v1261 = vadd.f32 %v1068, %v1205
      %v1262 = vadd.f32 %v1069, %v1208
      %v1263 = vadd.f32 %v1070, %v1213
      %v1264 = vadd.f32 %v1071, %v1216
      %v1265 = vadd.f32 %v1072, %v1221
      %v1266 = vadd.f32 %v1073, %v1224
      %v1267 = vadd.f32 %v1074, %v1229
      %v1268 = vadd.f32 %v1075, %v1232
      %v1269 = vadd.f32 %v1076, %v1237
      %v1270 = vadd.f32 %v1077, %v1240
      %v1271 = vadd.f32 %v1078, %v1245
      %v1272 = vadd.f32 %v1079, %v1248
      %v1273 = vadd.f32 %v1080, %v1253
      %v1274 = vadd.f32 %v1081, %v1256
      %1275 = vst [vmem:[#allocation2] sm:$0xff] %v1259
      %1276 = vst [vmem:[#allocation2 + $0x8] sm:$0xff] %v1260
      %1277 = vst [vmem:[#allocation2 + $0x10] sm:$0xff] %v1261
      %1278 = vst [vmem:[#allocation2 + $0x18] sm:$0xff] %v1262
      %1279 = vst [vmem:[#allocation2 + $0x20] sm:$0xff] %v1263
      %1280 = vst [vmem:[#allocation2 + $0x28] sm:$0xff] %v1264
      %1281 = vst [vmem:[#allocation2 + $0x30] sm:$0xff] %v1265
      %1282 = vst [vmem:[#allocation2 + $0x38] sm:$0xff] %v1266
      %1283 = vst [vmem:[#allocation2 + $0x40] sm:$0xff] %v1267
      %1284 = vst [vmem:[#allocation2 + $0x48] sm:$0xff] %v1268
      %1285 = vst [vmem:[#allocation2 + $0x50] sm:$0xff] %v1269
      %1286 = vst [vmem:[#allocation2 + $0x58] sm:$0xff] %v1270
      %1287 = vst [vmem:[#allocation2 + $0x60] sm:$0xff] %v1271
      %1288 = vst [vmem:[#allocation2 + $0x68] sm:$0xff] %v1272
      %1289 = vst [vmem:[#allocation2 + $0x70] sm:$0xff] %v1273
      %1290 = vst [vmem:[#allocation2 + $0x78] sm:$0xff] %v1274
      // Predicated region
      $region49: #{mxmnet_forward.13} parent=43 // pred_check
        %p1291 = pneg %p372
      $region50: #{mxmnet_forward.13} parent=43 // pred_check_branch
        %1293 = sbr.rel (%p1291) target = $region52
      $region51: #{mxmnet_forward.13} parent=43 // pred_region
        %v1294 = vld [vmem:[#allocation2] sm:$0xff]
        %v1295 = vld [vmem:[#allocation2 + $0x8] sm:$0xff]
        %v1296 = vld [vmem:[#allocation2 + $0x10] sm:$0xff]
        %v1297 = vld [vmem:[#allocation2 + $0x18] sm:$0xff]
        %v1298 = vld [vmem:[#allocation2 + $0x20] sm:$0xff]
        %v1299 = vld [vmem:[#allocation2 + $0x28] sm:$0xff]
        %v1300 = vld [vmem:[#allocation2 + $0x30] sm:$0xff]
        %v1301 = vld [vmem:[#allocation2 + $0x38] sm:$0xff]
        %v1302 = vld [vmem:[#allocation2 + $0x40] sm:$0xff]
        %v1303 = vld [vmem:[#allocation2 + $0x48] sm:$0xff]
        %v1304 = vld [vmem:[#allocation2 + $0x50] sm:$0xff]
        %v1305 = vld [vmem:[#allocation2 + $0x58] sm:$0xff]
        %v1306 = vld [vmem:[#allocation2 + $0x60] sm:$0xff]
        %v1307 = vld [vmem:[#allocation2 + $0x68] sm:$0xff]
        %v1308 = vld [vmem:[#allocation2 + $0x70] sm:$0xff]
        %v1309 = vld [vmem:[#allocation2 + $0x78] sm:$0xff]
        %v1310 = vld [vmem:[%s363] sm:$0xf]
        %v1311 = vld [vmem:[%s363 + $0x4] sm:$0xf]
        %v1312 = vld [vmem:[%s363 + $0x8] sm:$0xf]
        %v1313 = vld [vmem:[%s363 + $0xc] sm:$0xf]
        %v1314 = vld [vmem:[%s363 + $0x10] sm:$0xf]
        %v1315 = vld [vmem:[%s363 + $0x14] sm:$0xf]
        %v1316 = vld [vmem:[%s363 + $0x18] sm:$0xf]
        %v1317 = vld [vmem:[%s363 + $0x1c] sm:$0xf]
        %v1318 = vld [vmem:[%s363 + $0x20] sm:$0xf]
        %v1319 = vld [vmem:[%s363 + $0x24] sm:$0xf]
        %v1320 = vld [vmem:[%s363 + $0x28] sm:$0xf]
        %v1321 = vld [vmem:[%s363 + $0x2c] sm:$0xf]
        %v1322 = vld [vmem:[%s363 + $0x30] sm:$0xf]
        %v1323 = vld [vmem:[%s363 + $0x34] sm:$0xf]
        %v1324 = vld [vmem:[%s363 + $0x38] sm:$0xf]
        %v1325 = vld [vmem:[%s363 + $0x3c] sm:$0xf]
        %v1326 = vunpack.c.l.bf16 %v1310
        %v1327 = vunpack.c.l.bf16 %v1311
        %v1328 = vunpack.c.l.bf16 %v1312
        %v1329 = vunpack.c.l.bf16 %v1313
        %v1330 = vunpack.c.l.bf16 %v1314
        %v1331 = vunpack.c.l.bf16 %v1315
        %v1332 = vunpack.c.l.bf16 %v1316
        %v1333 = vunpack.c.l.bf16 %v1317
        %v1334 = vunpack.c.l.bf16 %v1318
        %v1335 = vunpack.c.l.bf16 %v1319
        %v1336 = vunpack.c.l.bf16 %v1320
        %v1337 = vunpack.c.l.bf16 %v1321
        %v1338 = vunpack.c.l.bf16 %v1322
        %v1339 = vunpack.c.l.bf16 %v1323
        %v1340 = vunpack.c.l.bf16 %v1324
        %v1341 = vunpack.c.l.bf16 %v1325
        %v1342 = vadd.f32 %v1294, %v1326
        %v1343 = vadd.f32 %v1295, %v1327
        %v1344 = vadd.f32 %v1296, %v1328
        %v1345 = vadd.f32 %v1297, %v1329
        %v1346 = vadd.f32 %v1298, %v1330
        %v1347 = vadd.f32 %v1299, %v1331
        %v1348 = vadd.f32 %v1300, %v1332
        %v1349 = vadd.f32 %v1301, %v1333
        %v1350 = vadd.f32 %v1302, %v1334
        %v1351 = vadd.f32 %v1303, %v1335
        %v1352 = vadd.f32 %v1304, %v1336
        %v1353 = vadd.f32 %v1305, %v1337
        %v1354 = vadd.f32 %v1306, %v1338
        %v1355 = vadd.f32 %v1307, %v1339
        %v1356 = vadd.f32 %v1308, %v1340
        %v1357 = vadd.f32 %v1309, %v1341
        %v1358 = vpack.c.bf16 %v1343, %v1342
        %v1359 = vpack.c.bf16 %v1345, %v1344
        %v1360 = vpack.c.bf16 %v1347, %v1346
        %v1361 = vpack.c.bf16 %v1349, %v1348
        %v1362 = vpack.c.bf16 %v1351, %v1350
        %v1363 = vpack.c.bf16 %v1353, %v1352
        %v1364 = vpack.c.bf16 %v1355, %v1354
        %v1365 = vpack.c.bf16 %v1357, %v1356
        %v1374 = vunpack.c.l.b16 %v1358
        %v1375 = vunpack.c.h.b16 %v1358
        %v1376 = vunpack.c.l.b16 %v1359
        %v1377 = vunpack.c.h.b16 %v1359
        %v1378 = vunpack.c.l.b16 %v1360
        %v1379 = vunpack.c.h.b16 %v1360
        %v1380 = vunpack.c.l.b16 %v1361
        %v1381 = vunpack.c.h.b16 %v1361
        %v1382 = vunpack.c.l.b16 %v1362
        %v1383 = vunpack.c.h.b16 %v1362
        %v1384 = vunpack.c.l.b16 %v1363
        %v1385 = vunpack.c.h.b16 %v1363
        %v1386 = vunpack.c.l.b16 %v1364
        %v1387 = vunpack.c.h.b16 %v1364
        %v1388 = vunpack.c.l.b16 %v1365
        %v1389 = vunpack.c.h.b16 %v1365
        %v1390 = vpack.c.b16 %v1374, %v1374
        %v1391 = vpack.c.b16 %v1375, %v1375
        %v1392 = vpack.c.b16 %v1376, %v1376
        %v1393 = vpack.c.b16 %v1377, %v1377
        %v1394 = vpack.c.b16 %v1378, %v1378
        %v1395 = vpack.c.b16 %v1379, %v1379
        %v1396 = vpack.c.b16 %v1380, %v1380
        %v1397 = vpack.c.b16 %v1381, %v1381
        %v1398 = vpack.c.b16 %v1382, %v1382
        %v1399 = vpack.c.b16 %v1383, %v1383
        %v1400 = vpack.c.b16 %v1384, %v1384
        %v1401 = vpack.c.b16 %v1385, %v1385
        %v1402 = vpack.c.b16 %v1386, %v1386
        %v1403 = vpack.c.b16 %v1387, %v1387
        %v1404 = vpack.c.b16 %v1388, %v1388
        %v1405 = vpack.c.b16 %v1389, %v1389
        %1422 = vst [vmem:[%s369] sm:$0xf] %v1390
        %1423 = vst [vmem:[%s369 + $0x4] sm:$0xf] %v1391
        %1424 = vst [vmem:[%s369 + $0x8] sm:$0xf] %v1392
        %1425 = vst [vmem:[%s369 + $0xc] sm:$0xf] %v1393
        %1426 = vst [vmem:[%s369 + $0x10] sm:$0xf] %v1394
        %1427 = vst [vmem:[%s369 + $0x14] sm:$0xf] %v1395
        %1428 = vst [vmem:[%s369 + $0x18] sm:$0xf] %v1396
        %1429 = vst [vmem:[%s369 + $0x1c] sm:$0xf] %v1397
        %1430 = vst [vmem:[%s369 + $0x20] sm:$0xf] %v1398
        %1431 = vst [vmem:[%s369 + $0x24] sm:$0xf] %v1399
        %1432 = vst [vmem:[%s369 + $0x28] sm:$0xf] %v1400
        %1433 = vst [vmem:[%s369 + $0x2c] sm:$0xf] %v1401
        %1434 = vst [vmem:[%s369 + $0x30] sm:$0xf] %v1402
        %1435 = vst [vmem:[%s369 + $0x34] sm:$0xf] %v1403
        %1436 = vst [vmem:[%s369 + $0x38] sm:$0xf] %v1404
        %1437 = vst [vmem:[%s369 + $0x3c] sm:$0xf] %v1405
      $region52: #{mxmnet_forward.13} parent=43 // pred_fallthru
        _
      %s1438 = smul.u32 16, %s21
      %p1439 = scmp.lt.s32.totalorder %s1438, 31
      %s1440 = scalar_select %p1439, %s1438, 31
      %s1441 = smul.addr %s1440, 4
      %s1442 = scalar_lea.vmem %s6, %s1441
      // Predicated region
      $region53: #{mxmnet_forward.13} parent=43 // pred_check
        %p1443 = pneg %p197
      $region54: #{mxmnet_forward.13} parent=43 // pred_check_branch
        %1445 = sbr.rel (%p1443) target = $region56
      $region55: #{mxmnet_forward.13} parent=43 // pred_region
        %s1446 = smul.u32 16, %s21
      $region56: #{mxmnet_forward.13} parent=43 // pred_fallthru
        _
    $region44: #{mxmnet_forward.13} parent=5 // pred_fallthru
      _
    %p1447 = scmp.le.s32.totalorder 2, %s12
    // Predicated region
    $region57: #{mxmnet_forward.13} parent=5 // pred_check
      %p1448 = pneg %p1447
    $region58: #{mxmnet_forward.13} parent=5 // pred_check_branch
      %1450 = sbr.rel (%p1448) target = $region60
    $region59: #{mxmnet_forward.13} parent=5 // pred_region
      %s1451 = ssub.s32 %s12, 2
      // Predicated region
      $region61: #{mxmnet_forward.13} parent=59 // pred_check
        %p1452 = pneg %p203
      $region62: #{mxmnet_forward.13} parent=59 // pred_check_branch
        %1454 = sbr.rel (%p1452) target = $region64
      $region63: #{mxmnet_forward.13} parent=59 // pred_region
        %s1455 = smul.u32 16, %s23
        %p1456 = scmp.lt.s32.totalorder %s1455, 31
        %s1457 = scalar_select %p1456, %s1455, 31
        %s1458 = smul.addr %s1457, 4
        %s1459 = scalar_lea.vmem %s6, %s1458
      $region64: #{mxmnet_forward.13} parent=59 // pred_fallthru
        _
    $region60: #{mxmnet_forward.13} parent=5 // pred_fallthru
      _
  $region6: #{mxmnet_forward.13} parent=0 // loop_footer
    %s16 = sadd.s32 1, %s12
  $region7: #{mxmnet_forward.13} parent=0 // loop_footer_branch
    %11 = sbr.rel target = $region3
  $region8: #{mxmnet_forward.13} parent=0 // loop_exit
    _

// kernel: mxmnet_forward.15
$region0: #{mxmnet_forward.15}
  #allocation0 [shape = 'u32[]', space=smem, size = 0x4, offset = 0x4, fixed_abs, tag = 'smem constant byte address 0x4 - core index']
  #allocation1 [shape = 'u32[144,128]{1,0:T(1,128)}', space=vmem, size = 0x12000, scoped, tag = 'internal scratch']
  #allocation2 [shape = 'f32[128,128]{1,0:T(8,128)}', space=vmem, size = 0x10000, scoped, tag = 'scratch operand']
  %s0 = inlined_call_operand.vmem [shape: bf16[256,256], index: 0, kind: input, shape index: {}]
  %s1 = inlined_call_operand.vmem [shape: bf16[256,256], index: 1, kind: input, shape index: {}]
  %s2 = inlined_call_operand.vmem [shape: bf16[256,128], index: 2, kind: input, shape index: {}, may-alias: {2,5}]
  %s3 = inlined_call_operand.vmem [shape: bf16[128,128], index: 3, kind: input, shape index: {}]
  %s4 = inlined_call_operand.vmem [shape: f32[1,128], index: 4, kind: input, shape index: {}]
  %s5 = inlined_call_operand.vmem [shape: bf16[256,128], index: 5, kind: input, shape index: {}, may-alias: {2,5}]
  %s6 = inlined_call_operand.vmem [shape: bf16[256,128], index: 6, kind: output, shape index: {}]
  %s7 = sld [smem:[#allocation0]]
  $region65: #{mxmnet_forward.15} parent=0
    _
  %s9 = ssub.s32 1, %s7
  %s10 = scalar_select 0, %s9, %s7
  loop: start=0, step=1, limit=4
  $region2: #{mxmnet_forward.15} parent=0 // loop_pre_header
    _
  $region3: #{mxmnet_forward.15} parent=0 // loop_header
    %s12 = sphi 0, %s16
    %p13 = scmp.ge.s32.totalorder %s12, 4
    %s19 = sphi 0, %s31
    %s20 = sphi 0, %s27
    %s21 = sphi 0, %s19
    %s22 = sphi 0, %s20
    %s23 = sphi 0, %s21
    %s24 = sphi 0, %s22
    %s36 = sphi 0, %s38
    %s39 = sphi 0, %s36
    %s40 = sphi 0, %s39
    %s56 = sphi 0, %s40
    %s64 = sphi 0, %s66
    %s67 = sphi 0, %s64
    %s68 = sphi 0, %s67
    %s84 = sphi 0, %s68
    %s90 = sphi 0, %s92
    %s93 = sphi 0, %s90
    %s94 = sphi 0, %s93
    %s110 = sphi 0, %s94
    %s114 = sphi 0, %s114
    %s116 = sphi 0, %s114
    %s117 = sphi 0, %s116
    %s131 = sphi 0, %s117
    %s135 = sphi 0, %s135
    %s137 = sphi 0, %s135
    %s138 = sphi 0, %s137
    %s152 = sphi 0, %s138
    %s158 = sphi 0, %s160
    %s161 = sphi 0, %s158
    %s162 = sphi 0, %s161
    %s178 = sphi 0, %s162
    %s184 = sphi 0, %s186
    %s187 = sphi 0, %s184
    %s188 = sphi 0, %s187
    %s204 = sphi 0, %s188
  $region4: #{mxmnet_forward.15} parent=0 // loop_header_branch
    %15 = sbr.rel (%p13) target = $region8
  $region5: #{mxmnet_forward.15} parent=0 // loop_body
    %s17 = ssub.s32 %s12, 1
    %s18 = ssub.s32 %s12, 2
    %s25 = sadd.s32 1, %s20
    %p26 = scmp.ge.s32.totalorder %s25, 1
    %s27 = scalar_select %p26, 0, %s25
    %s28 = sadd.s32 1, %s19
    %s29 = scalar_select %p26, %s28, %s19
    %p30 = scmp.ge.s32.totalorder %s29, 2
    %s31 = scalar_select %p30, 0, %s29
    %s32 = ssub.s32 %s19, %s31
    %s33 = ssub.s32 %s20, %s27
    %s34 = sor.u32 %s32, %s33
    %p35 = scmp.eq.s32.totalorder %s34, 0
    %s37 = sadd.s32 %s36, 1
    %s38 = scalar_select %p35, %s36, %s37
    %p41 = pneg %p35
    %p42 = scmp.eq.s32.totalorder %s12, 1
    %p43 = por %p41, %p42
    %p44 = scmp.ne.s32.totalorder %s36, %s39
    %p45 = scmp.eq.s32.totalorder %s12, 0
    %p46 = por %p44, %p45
    %p47 = scmp.ne.s32.totalorder %s36, %s39
    %p48 = scmp.eq.s32.totalorder %s17, 1
    %p49 = por %p47, %p48
    %p50 = scmp.ne.s32.totalorder %s39, %s40
    %p51 = scmp.eq.s32.totalorder %s17, 0
    %p52 = por %p50, %p51
    %p53 = scmp.ne.s32.totalorder %s39, %s40
    %p54 = scmp.eq.s32.totalorder %s18, 1
    %p55 = por %p53, %p54
    %p57 = scmp.ne.s32.totalorder %s40, %s56
    %p58 = scmp.eq.s32.totalorder %s18, 0
    %p59 = por %p57, %p58
    %s60 = ssub.s32 %s19, %s31
    %s61 = ssub.s32 %s20, %s27
    %s62 = sor.u32 %s60, %s61
    %p63 = scmp.eq.s32.totalorder %s62, 0
    %s65 = sadd.s32 %s64, 1
    %s66 = scalar_select %p63, %s64, %s65
    %p69 = pneg %p63
    %p70 = scmp.eq.s32.totalorder %s12, 1
    %p71 = por %p69, %p70
    %p72 = scmp.ne.s32.totalorder %s64, %s67
    %p73 = scmp.eq.s32.totalorder %s12, 0
    %p74 = por %p72, %p73
    %p75 = scmp.ne.s32.totalorder %s64, %s67
    %p76 = scmp.eq.s32.totalorder %s17, 1
    %p77 = por %p75, %p76
    %p78 = scmp.ne.s32.totalorder %s67, %s68
    %p79 = scmp.eq.s32.totalorder %s17, 0
    %p80 = por %p78, %p79
    %p81 = scmp.ne.s32.totalorder %s67, %s68
    %p82 = scmp.eq.s32.totalorder %s18, 1
    %p83 = por %p81, %p82
    %p85 = scmp.ne.s32.totalorder %s68, %s84
    %p86 = scmp.eq.s32.totalorder %s18, 0
    %p87 = por %p85, %p86
    %s88 = ssub.s32 %s20, %s27
    %p89 = scmp.eq.s32.totalorder %s88, 0
    %s91 = sadd.s32 %s90, 1
    %s92 = scalar_select %p89, %s90, %s91
    %p95 = pneg %p89
    %p96 = scmp.eq.s32.totalorder %s12, 1
    %p97 = por %p95, %p96
    %p98 = scmp.ne.s32.totalorder %s90, %s93
    %p99 = scmp.eq.s32.totalorder %s12, 0
    %p100 = por %p98, %p99
    %p101 = scmp.ne.s32.totalorder %s90, %s93
    %p102 = scmp.eq.s32.totalorder %s17, 1
    %p103 = por %p101, %p102
    %p104 = scmp.ne.s32.totalorder %s93, %s94
    %p105 = scmp.eq.s32.totalorder %s17, 0
    %p106 = por %p104, %p105
    %p107 = scmp.ne.s32.totalorder %s93, %s94
    %p108 = scmp.eq.s32.totalorder %s18, 1
    %p109 = por %p107, %p108
    %p111 = scmp.ne.s32.totalorder %s94, %s110
    %p112 = scmp.eq.s32.totalorder %s18, 0
    %p113 = por %p111, %p112
    %s115 = sadd.s32 %s114, 1
    %p118 = scmp.eq.s32.totalorder %s12, 1
    %p119 = scmp.ne.s32.totalorder %s114, %s116
    %p120 = scmp.eq.s32.totalorder %s12, 0
    %p121 = por %p119, %p120
    %p122 = scmp.ne.s32.totalorder %s114, %s116
    %p123 = scmp.eq.s32.totalorder %s17, 1
    %p124 = por %p122, %p123
    %p125 = scmp.ne.s32.totalorder %s116, %s117
    %p126 = scmp.eq.s32.totalorder %s17, 0
    %p127 = por %p125, %p126
    %p128 = scmp.ne.s32.totalorder %s116, %s117
    %p129 = scmp.eq.s32.totalorder %s18, 1
    %p130 = por %p128, %p129
    %p132 = scmp.ne.s32.totalorder %s117, %s131
    %p133 = scmp.eq.s32.totalorder %s18, 0
    %p134 = por %p132, %p133
    %s136 = sadd.s32 %s135, 1
    %p139 = scmp.eq.s32.totalorder %s12, 1
    %p140 = scmp.ne.s32.totalorder %s135, %s137
    %p141 = scmp.eq.s32.totalorder %s12, 0
    %p142 = por %p140, %p141
    %p143 = scmp.ne.s32.totalorder %s135, %s137
    %p144 = scmp.eq.s32.totalorder %s17, 1
    %p145 = por %p143, %p144
    %p146 = scmp.ne.s32.totalorder %s137, %s138
    %p147 = scmp.eq.s32.totalorder %s17, 0
    %p148 = por %p146, %p147
    %p149 = scmp.ne.s32.totalorder %s137, %s138
    %p150 = scmp.eq.s32.totalorder %s18, 1
    %p151 = por %p149, %p150
    %p153 = scmp.ne.s32.totalorder %s138, %s152
    %p154 = scmp.eq.s32.totalorder %s18, 0
    %p155 = por %p153, %p154
    %s156 = ssub.s32 %s19, %s31
    %p157 = scmp.eq.s32.totalorder %s156, 0
    %s159 = sadd.s32 %s158, 1
    %s160 = scalar_select %p157, %s158, %s159
    %p163 = pneg %p157
    %p164 = scmp.eq.s32.totalorder %s12, 1
    %p165 = por %p163, %p164
    %p166 = scmp.ne.s32.totalorder %s158, %s161
    %p167 = scmp.eq.s32.totalorder %s12, 0
    %p168 = por %p166, %p167
    %p169 = scmp.ne.s32.totalorder %s158, %s161
    %p170 = scmp.eq.s32.totalorder %s17, 1
    %p171 = por %p169, %p170
    %p172 = scmp.ne.s32.totalorder %s161, %s162
    %p173 = scmp.eq.s32.totalorder %s17, 0
    %p174 = por %p172, %p173
    %p175 = scmp.ne.s32.totalorder %s161, %s162
    %p176 = scmp.eq.s32.totalorder %s18, 1
    %p177 = por %p175, %p176
    %p179 = scmp.ne.s32.totalorder %s162, %s178
    %p180 = scmp.eq.s32.totalorder %s18, 0
    %p181 = por %p179, %p180
    %s182 = ssub.s32 %s19, %s31
    %p183 = scmp.eq.s32.totalorder %s182, 0
    %s185 = sadd.s32 %s184, 1
    %s186 = scalar_select %p183, %s184, %s185
    %p189 = pneg %p183
    %p190 = scmp.eq.s32.totalorder %s12, 1
    %p191 = por %p189, %p190
    %p192 = scmp.ne.s32.totalorder %s184, %s187
    %p193 = scmp.eq.s32.totalorder %s12, 0
    %p194 = por %p192, %p193
    %p195 = scmp.ne.s32.totalorder %s184, %s187
    %p196 = scmp.eq.s32.totalorder %s17, 1
    %p197 = por %p195, %p196
    %p198 = scmp.ne.s32.totalorder %s187, %s188
    %p199 = scmp.eq.s32.totalorder %s17, 0
    %p200 = por %p198, %p199
    %p201 = scmp.ne.s32.totalorder %s187, %s188
    %p202 = scmp.eq.s32.totalorder %s18, 1
    %p203 = por %p201, %p202
    %p205 = scmp.ne.s32.totalorder %s188, %s204
    %p206 = scmp.eq.s32.totalorder %s18, 0
    %p207 = por %p205, %p206
    %p208 = scmp.le.s32.totalorder 1, %s12
    %p209 = scmp.lt.s32.totalorder %s12, 3
    %p210 = pnand %p208, %p209
    %p211 = pneg %p210
    // Predicated region
    $region9: #{mxmnet_forward.15} parent=5 // pred_check
      _
    $region10: #{mxmnet_forward.15} parent=5 // pred_check_branch
      %213 = sbr.rel (%p210) target = $region12
    $region11: #{mxmnet_forward.15} parent=5 // pred_region
      %s214 = ssub.s32 %s12, 1
      // Predicated region
      $region13: #{mxmnet_forward.15} parent=11 // pred_check
        %p215 = pneg %p106
      $region14: #{mxmnet_forward.15} parent=11 // pred_check_branch
        %217 = sbr.rel (%p215) target = $region16
      $region15: #{mxmnet_forward.15} parent=11 // pred_region
        %s218 = smul.u32 32, %s22
        %p219 = scmp.lt.s32.totalorder %s218, 31
        %s220 = scalar_select %p219, %s218, 31
        %s221 = smul.addr %s220, 4
        %s222 = scalar_lea.vmem %s2, %s221
        %s223 = smul.u32 32, %s22
      $region16: #{mxmnet_forward.15} parent=11 // pred_fallthru
        _
      // Predicated region
      $region17: #{mxmnet_forward.15} parent=11 // pred_check
        %p224 = pneg %p127
      $region18: #{mxmnet_forward.15} parent=11 // pred_check_branch
        %226 = sbr.rel (%p224) target = $region20
      $region19: #{mxmnet_forward.15} parent=11 // pred_region
        _
      $region20: #{mxmnet_forward.15} parent=11 // pred_fallthru
        _
      // Predicated region
      $region21: #{mxmnet_forward.15} parent=11 // pred_check
        %p227 = pneg %p148
      $region22: #{mxmnet_forward.15} parent=11 // pred_check_branch
        %229 = sbr.rel (%p227) target = $region24
      $region23: #{mxmnet_forward.15} parent=11 // pred_region
        _
      $region24: #{mxmnet_forward.15} parent=11 // pred_fallthru
        _
    $region12: #{mxmnet_forward.15} parent=5 // pred_fallthru
      _
    %p230 = scmp.lt.s32.totalorder %s12, 2
    // Predicated region
    $region25: #{mxmnet_forward.15} parent=5 // pred_check
      %p231 = pneg %p230
    $region26: #{mxmnet_forward.15} parent=5 // pred_check_branch
      %233 = sbr.rel (%p231) target = $region28
    $region27: #{mxmnet_forward.15} parent=5 // pred_region
      // Predicated region
      $region29: #{mxmnet_forward.15} parent=27 // pred_check
        %p234 = pneg %p46
      $region30: #{mxmnet_forward.15} parent=27 // pred_check_branch
        %236 = sbr.rel (%p234) target = $region32
      $region31: #{mxmnet_forward.15} parent=27 // pred_region
        %s237 = smul.u32 16, %s19
        %s238 = smul.u32 2, %s20
        %p239 = scmp.lt.s32.totalorder %s237, 31
        %s240 = scalar_select %p239, %s237, 31
        %p241 = scmp.lt.s32.totalorder %s238, 1
        %s242 = scalar_select %p241, %s238, 1
        %s243 = smul.addr %s240, 2
        %s244 = sadd.s32 %s242, %s243
        %s245 = smul.addr %s244, 4
        %s246 = scalar_lea.vmem %s0, %s245
        %s247 = smul.u32 16, %s19
        %s248 = smul.u32 2, %s20
      $region32: #{mxmnet_forward.15} parent=27 // pred_fallthru
        _
      // Predicated region
      $region33: #{mxmnet_forward.15} parent=27 // pred_check
        %p249 = pneg %p74
      $region34: #{mxmnet_forward.15} parent=27 // pred_check_branch
        %251 = sbr.rel (%p249) target = $region36
      $region35: #{mxmnet_forward.15} parent=27 // pred_region
        %s252 = smul.u32 16, %s19
        %s253 = smul.u32 2, %s20
        %p254 = scmp.lt.s32.totalorder %s252, 31
        %s255 = scalar_select %p254, %s252, 31
        %p256 = scmp.lt.s32.totalorder %s253, 1
        %s257 = scalar_select %p256, %s253, 1
        %s258 = smul.addr %s255, 2
        %s259 = sadd.s32 %s257, %s258
        %s260 = smul.addr %s259, 4
        %s261 = scalar_lea.vmem %s1, %s260
        %s262 = smul.u32 16, %s19
        %s263 = smul.u32 2, %s20
      $region36: #{mxmnet_forward.15} parent=27 // pred_fallthru
        _
      // Predicated region
      $region37: #{mxmnet_forward.15} parent=27 // pred_check
        %p264 = pneg %p168
      $region38: #{mxmnet_forward.15} parent=27 // pred_check_branch
        %266 = sbr.rel (%p264) target = $region40
      $region39: #{mxmnet_forward.15} parent=27 // pred_region
        %s267 = smul.u32 16, %s19
        %p268 = scmp.lt.s32.totalorder %s267, 31
        %s269 = scalar_select %p268, %s267, 31
        %s270 = smul.addr %s269, 4
        %s271 = scalar_lea.vmem %s5, %s270
        %s272 = smul.u32 16, %s19
      $region40: #{mxmnet_forward.15} parent=27 // pred_fallthru
        _
    $region28: #{mxmnet_forward.15} parent=5 // pred_fallthru
      _
    %p273 = scmp.le.s32.totalorder 1, %s12
    %p274 = scmp.lt.s32.totalorder %s12, 3
    %p275 = pnand %p273, %p274
    %p276 = pneg %p275
    // Predicated region
    $region41: #{mxmnet_forward.15} parent=5 // pred_check
      _
    $region42: #{mxmnet_forward.15} parent=5 // pred_check_branch
      %278 = sbr.rel (%p275) target = $region44
    $region43: #{mxmnet_forward.15} parent=5 // pred_region
      %s279 = ssub.s32 %s12, 1
      %s280 = smul.u32 16, %s21
      %s281 = smul.u32 2, %s22
      %p282 = scmp.lt.s32.totalorder %s280, 31
      %s283 = scalar_select %p282, %s280, 31
      %p284 = scmp.lt.s32.totalorder %s281, 1
      %s285 = scalar_select %p284, %s281, 1
      %s286 = smul.addr %s283, 2
      %s287 = sadd.s32 %s285, %s286
      %s288 = smul.addr %s287, 4
      %s289 = scalar_lea.vmem %s0, %s288
      %p290 = pneg %p52
      %p291 = pneg %p49
      %s292 = smul.u32 16, %s21
      %s293 = smul.u32 2, %s22
      %p294 = scmp.lt.s32.totalorder %s292, 31
      %s295 = scalar_select %p294, %s292, 31
      %p296 = scmp.lt.s32.totalorder %s293, 1
      %s297 = scalar_select %p296, %s293, 1
      %s298 = smul.addr %s295, 2
      %s299 = sadd.s32 %s297, %s298
      %s300 = smul.addr %s299, 4
      %s301 = scalar_lea.vmem %s1, %s300
      %p302 = pneg %p80
      %p303 = pneg %p77
      %s304 = smul.u32 32, %s22
      %p305 = scmp.lt.s32.totalorder %s304, 31
      %s306 = scalar_select %p305, %s304, 31
      %s307 = smul.addr %s306, 4
      %s308 = scalar_lea.vmem %s2, %s307
      %p309 = pneg %p106
      %p310 = pneg %p103
      %p311 = pneg %p127
      %p312 = pneg %p124
      %p313 = pneg %p148
      %p314 = pneg %p145
      %s315 = smul.u32 16, %s21
      %p316 = scmp.lt.s32.totalorder %s315, 31
      %s317 = scalar_select %p316, %s315, 31
      %s318 = smul.addr %s317, 4
      %s319 = scalar_lea.vmem %s5, %s318
      %p320 = pneg %p174
      %p321 = pneg %p171
      %p322 = pneg %p200
      %p323 = pneg %p197
      %s324 = smul.u32 16, %s21
      %p325 = scmp.lt.s32.totalorder %s324, 31
      %s326 = scalar_select %p325, %s324, 31
      %s327 = smul.addr %s326, 4
      %s328 = scalar_lea.vmem %s6, %s327
      %s329 = smul.u32 16, %s21
      %s330 = smul.u32 2, %s22
      %p331 = scmp.lt.s32.totalorder %s329, 31
      %s332 = scalar_select %p331, %s329, 31
      %p333 = scmp.lt.s32.totalorder %s330, 1
      %s334 = scalar_select %p333, %s330, 1
      %s335 = smul.addr %s332, 2
      %s336 = sadd.s32 %s334, %s335
      %s337 = smul.addr %s336, 4
      %s338 = scalar_lea.vmem %s0, %s337
      %s339 = smul.u32 16, %s21
      %s340 = smul.u32 2, %s22
      %s341 = smul.u32 16, %s21
      %s342 = smul.u32 2, %s22
      %p343 = scmp.lt.s32.totalorder %s341, 31
      %s344 = scalar_select %p343, %s341, 31
      %p345 = scmp.lt.s32.totalorder %s342, 1
      %s346 = scalar_select %p345, %s342, 1
      %s347 = smul.addr %s344, 2
      %s348 = sadd.s32 %s346, %s347
      %s349 = smul.addr %s348, 4
      %s350 = scalar_lea.vmem %s1, %s349
      %s351 = smul.u32 16, %s21
      %s352 = smul.u32 2, %s22
      %s353 = smul.u32 32, %s22
      %p354 = scmp.lt.s32.totalorder %s353, 31
      %s355 = scalar_select %p354, %s353, 31
      %s356 = smul.addr %s355, 4
      %s357 = scalar_lea.vmem %s2, %s356
      %s358 = smul.u32 32, %s22
      %s359 = smul.u32 16, %s21
      %p360 = scmp.lt.s32.totalorder %s359, 31
      %s361 = scalar_select %p360, %s359, 31
      %s362 = smul.addr %s361, 4
      %s363 = scalar_lea.vmem %s5, %s362
      %s364 = smul.u32 16, %s21
      %s365 = smul.u32 16, %s21
      %p366 = scmp.lt.s32.totalorder %s365, 31
      %s367 = scalar_select %p366, %s365, 31
      %s368 = smul.addr %s367, 4
      %s369 = scalar_lea.vmem %s6, %s368
      %s370 = smul.u32 16, %s21
      %p372 = scmp.eq.s32.totalorder %s22, 0
      // Predicated region
      $region45: #{mxmnet_forward.15} parent=43 // pred_check
        %p373 = pneg %p372
      $region46: #{mxmnet_forward.15} parent=43 // pred_check_branch
        %375 = sbr.rel (%p373) target = $region48
      $region47: #{mxmnet_forward.15} parent=43 // pred_region
        %376 = vst [vmem:[#allocation2] sm:$0xff] 0.0
        %377 = vst [vmem:[#allocation2 + $0x8] sm:$0xff] 0.0
        %378 = vst [vmem:[#allocation2 + $0x10] sm:$0xff] 0.0
        %379 = vst [vmem:[#allocation2 + $0x18] sm:$0xff] 0.0
        %380 = vst [vmem:[#allocation2 + $0x20] sm:$0xff] 0.0
        %381 = vst [vmem:[#allocation2 + $0x28] sm:$0xff] 0.0
        %382 = vst [vmem:[#allocation2 + $0x30] sm:$0xff] 0.0
        %383 = vst [vmem:[#allocation2 + $0x38] sm:$0xff] 0.0
        %384 = vst [vmem:[#allocation2 + $0x40] sm:$0xff] 0.0
        %385 = vst [vmem:[#allocation2 + $0x48] sm:$0xff] 0.0
        %386 = vst [vmem:[#allocation2 + $0x50] sm:$0xff] 0.0
        %387 = vst [vmem:[#allocation2 + $0x58] sm:$0xff] 0.0
        %388 = vst [vmem:[#allocation2 + $0x60] sm:$0xff] 0.0
        %389 = vst [vmem:[#allocation2 + $0x68] sm:$0xff] 0.0
        %390 = vst [vmem:[#allocation2 + $0x70] sm:$0xff] 0.0
        %391 = vst [vmem:[#allocation2 + $0x78] sm:$0xff] 0.0
      $region48: #{mxmnet_forward.15} parent=43 // pred_fallthru
        _
      %v392 = vld [vmem:[%s357] sm:$0xf]
      %v393 = vld [vmem:[%s357 + $0x4] sm:$0xf]
      %v394 = vld [vmem:[%s357 + $0x8] sm:$0xf]
      %v395 = vld [vmem:[%s357 + $0xc] sm:$0xf]
      %v396 = vld [vmem:[%s357 + $0x10] sm:$0xf]
      %v397 = vld [vmem:[%s357 + $0x14] sm:$0xf]
      %v398 = vld [vmem:[%s357 + $0x18] sm:$0xf]
      %v399 = vld [vmem:[%s357 + $0x1c] sm:$0xf]
      %v400 = vld [vmem:[%s357 + $0x20] sm:$0xf]
      %v401 = vld [vmem:[%s357 + $0x24] sm:$0xf]
      %v402 = vld [vmem:[%s357 + $0x28] sm:$0xf]
      %v403 = vld [vmem:[%s357 + $0x2c] sm:$0xf]
      %v404 = vld [vmem:[%s357 + $0x30] sm:$0xf]
      %v405 = vld [vmem:[%s357 + $0x34] sm:$0xf]
      %v406 = vld [vmem:[%s357 + $0x38] sm:$0xf]
      %v407 = vld [vmem:[%s357 + $0x3c] sm:$0xf]
      %v408 = vld [vmem:[%s357 + $0x40] sm:$0xf]
      %v409 = vld [vmem:[%s357 + $0x44] sm:$0xf]
      %v410 = vld [vmem:[%s357 + $0x48] sm:$0xf]
      %v411 = vld [vmem:[%s357 + $0x4c] sm:$0xf]
      %v412 = vld [vmem:[%s357 + $0x50] sm:$0xf]
      %v413 = vld [vmem:[%s357 + $0x54] sm:$0xf]
      %v414 = vld [vmem:[%s357 + $0x58] sm:$0xf]
      %v415 = vld [vmem:[%s357 + $0x5c] sm:$0xf]
      %v416 = vld [vmem:[%s357 + $0x60] sm:$0xf]
      %v417 = vld [vmem:[%s357 + $0x64] sm:$0xf]
      %v418 = vld [vmem:[%s357 + $0x68] sm:$0xf]
      %v419 = vld [vmem:[%s357 + $0x6c] sm:$0xf]
      %v420 = vld [vmem:[%s357 + $0x70] sm:$0xf]
      %v421 = vld [vmem:[%s357 + $0x74] sm:$0xf]
      %v422 = vld [vmem:[%s357 + $0x78] sm:$0xf]
      %v423 = vld [vmem:[%s357 + $0x7c] sm:$0xf]
      %v424 = vld [vmem:[%s3] sm:$0xf]
      %v425 = vld [vmem:[%s3 + $0x4] sm:$0xf]
      %v426 = vld [vmem:[%s3 + $0x8] sm:$0xf]
      %v427 = vld [vmem:[%s3 + $0xc] sm:$0xf]
      %v428 = vld [vmem:[%s3 + $0x10] sm:$0xf]
      %v429 = vld [vmem:[%s3 + $0x14] sm:$0xf]
      %v430 = vld [vmem:[%s3 + $0x18] sm:$0xf]
      %v431 = vld [vmem:[%s3 + $0x1c] sm:$0xf]
      %v432 = vld [vmem:[%s3 + $0x20] sm:$0xf]
      %v433 = vld [vmem:[%s3 + $0x24] sm:$0xf]
      %v434 = vld [vmem:[%s3 + $0x28] sm:$0xf]
      %v435 = vld [vmem:[%s3 + $0x2c] sm:$0xf]
      %v436 = vld [vmem:[%s3 + $0x30] sm:$0xf]
      %v437 = vld [vmem:[%s3 + $0x34] sm:$0xf]
      %v438 = vld [vmem:[%s3 + $0x38] sm:$0xf]
      %v439 = vld [vmem:[%s3 + $0x3c] sm:$0xf]
      %v440 = vld [vmem:[%s4] sm:$0x1]
      %v442 = vlaneseq
      %v443 = vshrl.u32 %v442, 7
      %v444 = vsub.s32 0, %v443
      %v445 = vrot.slane %v440, %v444
      %v479 = vunpack.c.l.b16 %v392
      %v480 = vunpack.c.l.b16 %v393
      %v481 = vunpack.c.l.b16 %v394
      %v482 = vunpack.c.l.b16 %v395
      %v483 = vunpack.c.l.b16 %v396
      %v484 = vunpack.c.l.b16 %v397
      %v485 = vunpack.c.l.b16 %v398
      %v486 = vunpack.c.l.b16 %v399
      %v487 = vunpack.c.l.b16 %v400
      %v488 = vunpack.c.l.b16 %v401
      %v489 = vunpack.c.l.b16 %v402
      %v490 = vunpack.c.l.b16 %v403
      %v491 = vunpack.c.l.b16 %v404
      %v492 = vunpack.c.l.b16 %v405
      %v493 = vunpack.c.l.b16 %v406
      %v494 = vunpack.c.l.b16 %v407
      %v495 = vunpack.c.l.b16 %v408
      %v496 = vunpack.c.l.b16 %v409
      %v497 = vunpack.c.l.b16 %v410
      %v498 = vunpack.c.l.b16 %v411
      %v499 = vunpack.c.l.b16 %v412
      %v500 = vunpack.c.l.b16 %v413
      %v501 = vunpack.c.l.b16 %v414
      %v502 = vunpack.c.l.b16 %v415
      %v503 = vunpack.c.l.b16 %v416
      %v504 = vunpack.c.l.b16 %v417
      %v505 = vunpack.c.l.b16 %v418
      %v506 = vunpack.c.l.b16 %v419
      %v507 = vunpack.c.l.b16 %v420
      %v508 = vunpack.c.l.b16 %v421
      %v509 = vunpack.c.l.b16 %v422
      %v510 = vunpack.c.l.b16 %v423
      %v511 = vpack.c.b16 %v480, %v479
      %v512 = vpack.c.b16 %v482, %v481
      %v513 = vpack.c.b16 %v484, %v483
      %v514 = vpack.c.b16 %v486, %v485
      %v515 = vpack.c.b16 %v488, %v487
      %v516 = vpack.c.b16 %v490, %v489
      %v517 = vpack.c.b16 %v492, %v491
      %v518 = vpack.c.b16 %v494, %v493
      %v519 = vpack.c.b16 %v496, %v495
      %v520 = vpack.c.b16 %v498, %v497
      %v521 = vpack.c.b16 %v500, %v499
      %v522 = vpack.c.b16 %v502, %v501
      %v523 = vpack.c.b16 %v504, %v503
      %v524 = vpack.c.b16 %v506, %v505
      %v525 = vpack.c.b16 %v508, %v507
      %v526 = vpack.c.b16 %v510, %v509
      %v559 = vunpack.c.l.b16 %v424
      %v560 = vunpack.c.l.b16 %v425
      %v561 = vunpack.c.l.b16 %v426
      %v562 = vunpack.c.l.b16 %v427
      %v563 = vunpack.c.l.b16 %v428
      %v564 = vunpack.c.l.b16 %v429
      %v565 = vunpack.c.l.b16 %v430
      %v566 = vunpack.c.l.b16 %v431
      %v567 = vunpack.c.l.b16 %v432
      %v568 = vunpack.c.l.b16 %v433
      %v569 = vunpack.c.l.b16 %v434
      %v570 = vunpack.c.l.b16 %v435
      %v571 = vunpack.c.l.b16 %v436
      %v572 = vunpack.c.l.b16 %v437
      %v573 = vunpack.c.l.b16 %v438
      %v574 = vunpack.c.l.b16 %v439
      %v575 = vpack.c.b16 %v560, %v559
      %v576 = vpack.c.b16 %v562, %v561
      %v577 = vpack.c.b16 %v564, %v563
      %v578 = vpack.c.b16 %v566, %v565
      %v579 = vpack.c.b16 %v568, %v567
      %v580 = vpack.c.b16 %v570, %v569
      %v581 = vpack.c.b16 %v572, %v571
      %v582 = vpack.c.b16 %v574, %v573
      %591 = vmatprep.subr.bf16.mxu0 0
      %592 = vmatpush1.bf16.msra.mxu0 %v575
      %593 = vmatprep.subr.bf16.mxu0 0
      %594 = vmatpush1.bf16.msra.mxu0 %v576
      %595 = vmatprep.subr.bf16.mxu0 0
      %596 = vmatpush1.bf16.msra.mxu0 %v577
      %597 = vmatprep.subr.bf16.mxu0 0
      %598 = vmatpush1.bf16.msra.mxu0 %v578
      %599 = vmatprep.subr.bf16.mxu0 0
      %600 = vmatpush1.bf16.msra.mxu0 %v579
      %601 = vmatprep.subr.bf16.mxu0 0
      %602 = vmatpush1.bf16.msra.mxu0 %v580
      %603 = vmatprep.subr.bf16.mxu0 0
      %604 = vmatpush1.bf16.msra.mxu0 %v581
      %605 = vmatprep.subr.bf16.mxu0 0
      %606 = vmatpush1.bf16.msra.mxu0 %v582
      %607 = vmatprep.subr.bf16.mxu0 0
      %608 = vmatpush1.bf16.msra.mxu0 0
      %609 = vmatprep.subr.bf16.mxu0 0
      %610 = vmatpush1.bf16.msra.mxu0 0
      %611 = vmatprep.subr.bf16.mxu0 0
      %612 = vmatpush1.bf16.msra.mxu0 0
      %613 = vmatprep.subr.bf16.mxu0 0
      %614 = vmatpush1.bf16.msra.mxu0 0
      %615 = vmatprep.subr.bf16.mxu0 0
      %616 = vmatpush1.bf16.msra.mxu0 0
      %617 = vmatprep.subr.bf16.mxu0 0
      %618 = vmatpush1.bf16.msra.mxu0 0
      %619 = vmatprep.subr.bf16.mxu0 0
      %620 = vmatpush1.bf16.msra.mxu0 0
      %621 = vmatprep.subr.bf16.mxu0 0
      %622 = vmatpush1.bf16.msra.mxu0 0
      %623 = vmatprep.mubr.bf16.mxu0 0
      %624 = vmatmul.mubr.bf16.gmra.mrb[0].mxu0 %v511
      %v625 = vpop.f32.mrb[0].mxu0
      %v626 = vadd.f32 %v445, %v625
      %v627 = vpop.f32.mrb[0].mxu0
      %v628 = vpop.f32.mrb[0].mxu0
      %v629 = vadd.f32 %v445, %v628
      %v630 = vpop.f32.mrb[0].mxu0
      %631 = vmatprep.mubr.bf16.mxu0 0
      %632 = vmatmul.mubr.bf16.gmra.mrb[0].mxu0 %v512
      %v633 = vpop.f32.mrb[0].mxu0
      %v634 = vadd.f32 %v445, %v633
      %v635 = vpop.f32.mrb[0].mxu0
      %v636 = vpop.f32.mrb[0].mxu0
      %v637 = vadd.f32 %v445, %v636
      %v638 = vpop.f32.mrb[0].mxu0
      %639 = vmatprep.mubr.bf16.mxu0 0
      %640 = vmatmul.mubr.bf16.gmra.mrb[0].mxu0 %v513
      %v641 = vpop.f32.mrb[0].mxu0
      %v642 = vadd.f32 %v445, %v641
      %v643 = vpop.f32.mrb[0].mxu0
      %v644 = vpop.f32.mrb[0].mxu0
      %v645 = vadd.f32 %v445, %v644
      %v646 = vpop.f32.mrb[0].mxu0
      %647 = vmatprep.mubr.bf16.mxu0 0
      %648 = vmatmul.mubr.bf16.gmra.mrb[0].mxu0 %v514
      %v649 = vpop.f32.mrb[0].mxu0
      %v650 = vadd.f32 %v445, %v649
      %v651 = vpop.f32.mrb[0].mxu0
      %v652 = vpop.f32.mrb[0].mxu0
      %v653 = vadd.f32 %v445, %v652
      %v654 = vpop.f32.mrb[0].mxu0
      %655 = vmatprep.mubr.bf16.mxu0 0
      %656 = vmatmul.mubr.bf16.gmra.mrb[0].mxu0 %v515
      %v657 = vpop.f32.mrb[0].mxu0
      %v658 = vadd.f32 %v445, %v657
      %v659 = vpop.f32.mrb[0].mxu0
      %v660 = vpop.f32.mrb[0].mxu0
      %v661 = vadd.f32 %v445, %v660
      %v662 = vpop.f32.mrb[0].mxu0
      %663 = vmatprep.mubr.bf16.mxu0 0
      %664 = vmatmul.mubr.bf16.gmra.mrb[0].mxu0 %v516
      %v665 = vpop.f32.mrb[0].mxu0
      %v666 = vadd.f32 %v445, %v665
      %v667 = vpop.f32.mrb[0].mxu0
      %v668 = vpop.f32.mrb[0].mxu0
      %v669 = vadd.f32 %v445, %v668
      %v670 = vpop.f32.mrb[0].mxu0
      %671 = vmatprep.mubr.bf16.mxu0 0
      %672 = vmatmul.mubr.bf16.gmra.mrb[0].mxu0 %v517
      %v673 = vpop.f32.mrb[0].mxu0
      %v674 = vadd.f32 %v445, %v673
      %v675 = vpop.f32.mrb[0].mxu0
      %v676 = vpop.f32.mrb[0].mxu0
      %v677 = vadd.f32 %v445, %v676
      %v678 = vpop.f32.mrb[0].mxu0
      %679 = vmatprep.mubr.bf16.mxu0 0
      %680 = vmatmul.mubr.bf16.gmra.mrb[0].mxu0 %v518
      %v681 = vpop.f32.mrb[0].mxu0
      %v682 = vadd.f32 %v445, %v681
      %v683 = vpop.f32.mrb[0].mxu0
      %v684 = vpop.f32.mrb[0].mxu0
      %v685 = vadd.f32 %v445, %v684
      %v686 = vpop.f32.mrb[0].mxu0
      %687 = vmatprep.mubr.bf16.mxu0 0
      %688 = vmatmul.mubr.bf16.gmra.mrb[0].mxu0 %v519
      %v689 = vpop.f32.mrb[0].mxu0
      %v690 = vadd.f32 %v445, %v689
      %v691 = vpop.f32.mrb[0].mxu0
      %v692 = vpop.f32.mrb[0].mxu0
      %v693 = vadd.f32 %v445, %v692
      %v694 = vpop.f32.mrb[0].mxu0
      %695 = vmatprep.mubr.bf16.mxu0 0
      %696 = vmatmul.mubr.bf16.gmra.mrb[0].mxu0 %v520
      %v697 = vpop.f32.mrb[0].mxu0
      %v698 = vadd.f32 %v445, %v697
      %v699 = vpop.f32.mrb[0].mxu0
      %v700 = vpop.f32.mrb[0].mxu0
      %v701 = vadd.f32 %v445, %v700
      %v702 = vpop.f32.mrb[0].mxu0
      %703 = vmatprep.mubr.bf16.mxu0 0
      %704 = vmatmul.mubr.bf16.gmra.mrb[0].mxu0 %v521
      %v705 = vpop.f32.mrb[0].mxu0
      %v706 = vadd.f32 %v445, %v705
      %v707 = vpop.f32.mrb[0].mxu0
      %v708 = vpop.f32.mrb[0].mxu0
      %v709 = vadd.f32 %v445, %v708
      %v710 = vpop.f32.mrb[0].mxu0
      %711 = vmatprep.mubr.bf16.mxu0 0
      %712 = vmatmul.mubr.bf16.gmra.mrb[0].mxu0 %v522
      %v713 = vpop.f32.mrb[0].mxu0
      %v714 = vadd.f32 %v445, %v713
      %v715 = vpop.f32.mrb[0].mxu0
      %v716 = vpop.f32.mrb[0].mxu0
      %v717 = vadd.f32 %v445, %v716
      %v718 = vpop.f32.mrb[0].mxu0
      %719 = vmatprep.mubr.bf16.mxu0 0
      %720 = vmatmul.mubr.bf16.gmra.mrb[0].mxu0 %v523
      %v721 = vpop.f32.mrb[0].mxu0
      %v722 = vadd.f32 %v445, %v721
      %v723 = vpop.f32.mrb[0].mxu0
      %v724 = vpop.f32.mrb[0].mxu0
      %v725 = vadd.f32 %v445, %v724
      %v726 = vpop.f32.mrb[0].mxu0
      %727 = vmatprep.mubr.bf16.mxu0 0
      %728 = vmatmul.mubr.bf16.gmra.mrb[0].mxu0 %v524
      %v729 = vpop.f32.mrb[0].mxu0
      %v730 = vadd.f32 %v445, %v729
      %v731 = vpop.f32.mrb[0].mxu0
      %v732 = vpop.f32.mrb[0].mxu0
      %v733 = vadd.f32 %v445, %v732
      %v734 = vpop.f32.mrb[0].mxu0
      %735 = vmatprep.mubr.bf16.mxu0 0
      %736 = vmatmul.mubr.bf16.gmra.mrb[0].mxu0 %v525
      %v737 = vpop.f32.mrb[0].mxu0
      %v738 = vadd.f32 %v445, %v737
      %v739 = vpop.f32.mrb[0].mxu0
      %v740 = vpop.f32.mrb[0].mxu0
      %v741 = vadd.f32 %v445, %v740
      %v742 = vpop.f32.mrb[0].mxu0
      %743 = vmatprep.mubr.bf16.mxu0 0
      %744 = vmatmul.mubr.bf16.gmra.mrb[0].mxu0 %v526
      %v745 = vpop.f32.mrb[0].mxu0
      %v746 = vadd.f32 %v445, %v745
      %v747 = vpop.f32.mrb[0].mxu0
      %v748 = vpop.f32.mrb[0].mxu0
      %v749 = vadd.f32 %v445, %v748
      %v750 = vpop.f32.mrb[0].mxu0
      %751 = vdwg.mxu0
      %v752 = vpack.c.bf16 %v629, %v626
      %v753 = vpack.c.bf16 %v637, %v634
      %v754 = vpack.c.bf16 %v645, %v642
      %v755 = vpack.c.bf16 %v653, %v650
      %v756 = vpack.c.bf16 %v661, %v658
      %v757 = vpack.c.bf16 %v669, %v666
      %v758 = vpack.c.bf16 %v677, %v674
      %v759 = vpack.c.bf16 %v685, %v682
      %v760 = vpack.c.bf16 %v693, %v690
      %v761 = vpack.c.bf16 %v701, %v698
      %v762 = vpack.c.bf16 %v709, %v706
      %v763 = vpack.c.bf16 %v717, %v714
      %v764 = vpack.c.bf16 %v725, %v722
      %v765 = vpack.c.bf16 %v733, %v730
      %v766 = vpack.c.bf16 %v741, %v738
      %v767 = vpack.c.bf16 %v749, %v746
      %v768 = vld [vmem:[%s338] sm:$0xff]
      %v769 = vld [vmem:[%s338 + $0x8] sm:$0xff]
      %v770 = vld [vmem:[%s338 + $0x10] sm:$0xff]
      %v771 = vld [vmem:[%s338 + $0x18] sm:$0xff]
      %v772 = vld [vmem:[%s338 + $0x20] sm:$0xff]
      %v773 = vld [vmem:[%s338 + $0x28] sm:$0xff]
      %v774 = vld [vmem:[%s338 + $0x30] sm:$0xff]
      %v775 = vld [vmem:[%s338 + $0x38] sm:$0xff]
      %v776 = vld [vmem:[%s338 + $0x40] sm:$0xff]
      %v777 = vld [vmem:[%s338 + $0x48] sm:$0xff]
      %v778 = vld [vmem:[%s338 + $0x50] sm:$0xff]
      %v779 = vld [vmem:[%s338 + $0x58] sm:$0xff]
      %v780 = vld [vmem:[%s338 + $0x60] sm:$0xff]
      %v781 = vld [vmem:[%s338 + $0x68] sm:$0xff]
      %v782 = vld [vmem:[%s338 + $0x70] sm:$0xff]
      %v783 = vld [vmem:[%s338 + $0x78] sm:$0xff]
      %v784 = vld [vmem:[%s350] sm:$0xff]
      %v785 = vld [vmem:[%s350 + $0x8] sm:$0xff]
      %v786 = vld [vmem:[%s350 + $0x10] sm:$0xff]
      %v787 = vld [vmem:[%s350 + $0x18] sm:$0xff]
      %v788 = vld [vmem:[%s350 + $0x20] sm:$0xff]
      %v789 = vld [vmem:[%s350 + $0x28] sm:$0xff]
      %v790 = vld [vmem:[%s350 + $0x30] sm:$0xff]
      %v791 = vld [vmem:[%s350 + $0x38] sm:$0xff]
      %v792 = vld [vmem:[%s350 + $0x40] sm:$0xff]
      %v793 = vld [vmem:[%s350 + $0x48] sm:$0xff]
      %v794 = vld [vmem:[%s350 + $0x50] sm:$0xff]
      %v795 = vld [vmem:[%s350 + $0x58] sm:$0xff]
      %v796 = vld [vmem:[%s350 + $0x60] sm:$0xff]
      %v797 = vld [vmem:[%s350 + $0x68] sm:$0xff]
      %v798 = vld [vmem:[%s350 + $0x70] sm:$0xff]
      %v799 = vld [vmem:[%s350 + $0x78] sm:$0xff]
      %v800 = vmul.bf16 %v768, %v784
      %v801 = vmul.bf16 %v769, %v785
      %v802 = vmul.bf16 %v770, %v786
      %v803 = vmul.bf16 %v771, %v787
      %v804 = vmul.bf16 %v772, %v788
      %v805 = vmul.bf16 %v773, %v789
      %v806 = vmul.bf16 %v774, %v790
      %v807 = vmul.bf16 %v775, %v791
      %v808 = vmul.bf16 %v776, %v792
      %v809 = vmul.bf16 %v777, %v793
      %v810 = vmul.bf16 %v778, %v794
      %v811 = vmul.bf16 %v779, %v795
      %v812 = vmul.bf16 %v780, %v796
      %v813 = vmul.bf16 %v781, %v797
      %v814 = vmul.bf16 %v782, %v798
      %v815 = vmul.bf16 %v783, %v799
      %v816 = vld [vmem:[#allocation2] sm:$0xff]
      %v817 = vld [vmem:[#allocation2 + $0x8] sm:$0xff]
      %v818 = vld [vmem:[#allocation2 + $0x10] sm:$0xff]
      %v819 = vld [vmem:[#allocation2 + $0x18] sm:$0xff]
      %v820 = vld [vmem:[#allocation2 + $0x20] sm:$0xff]
      %v821 = vld [vmem:[#allocation2 + $0x28] sm:$0xff]
      %v822 = vld [vmem:[#allocation2 + $0x30] sm:$0xff]
      %v823 = vld [vmem:[#allocation2 + $0x38] sm:$0xff]
      %v824 = vld [vmem:[#allocation2 + $0x40] sm:$0xff]
      %v825 = vld [vmem:[#allocation2 + $0x48] sm:$0xff]
      %v826 = vld [vmem:[#allocation2 + $0x50] sm:$0xff]
      %v827 = vld [vmem:[#allocation2 + $0x58] sm:$0xff]
      %v828 = vld [vmem:[#allocation2 + $0x60] sm:$0xff]
      %v829 = vld [vmem:[#allocation2 + $0x68] sm:$0xff]
      %v830 = vld [vmem:[#allocation2 + $0x70] sm:$0xff]
      %v831 = vld [vmem:[#allocation2 + $0x78] sm:$0xff]
      %v848 = vunpack.c.l.b16 %v800
      %v849 = vunpack.c.h.b16 %v800
      %v850 = vunpack.c.l.b16 %v801
      %v851 = vunpack.c.h.b16 %v801
      %v852 = vunpack.c.l.b16 %v802
      %v853 = vunpack.c.h.b16 %v802
      %v854 = vunpack.c.l.b16 %v803
      %v855 = vunpack.c.h.b16 %v803
      %v856 = vunpack.c.l.b16 %v804
      %v857 = vunpack.c.h.b16 %v804
      %v858 = vunpack.c.l.b16 %v805
      %v859 = vunpack.c.h.b16 %v805
      %v860 = vunpack.c.l.b16 %v806
      %v861 = vunpack.c.h.b16 %v806
      %v862 = vunpack.c.l.b16 %v807
      %v863 = vunpack.c.h.b16 %v807
      %v864 = vunpack.c.l.b16 %v808
      %v865 = vunpack.c.h.b16 %v808
      %v866 = vunpack.c.l.b16 %v809
      %v867 = vunpack.c.h.b16 %v809
      %v868 = vunpack.c.l.b16 %v810
      %v869 = vunpack.c.h.b16 %v810
      %v870 = vunpack.c.l.b16 %v811
      %v871 = vunpack.c.h.b16 %v811
      %v872 = vunpack.c.l.b16 %v812
      %v873 = vunpack.c.h.b16 %v812
      %v874 = vunpack.c.l.b16 %v813
      %v875 = vunpack.c.h.b16 %v813
      %v876 = vunpack.c.l.b16 %v814
      %v877 = vunpack.c.h.b16 %v814
      %v878 = vunpack.c.l.b16 %v815
      %v879 = vunpack.c.h.b16 %v815
      %v880 = vpack.c.b16 %v850, %v848
      %v881 = vpack.c.b16 %v851, %v849
      %v882 = vpack.c.b16 %v854, %v852
      %v883 = vpack.c.b16 %v855, %v853
      %v884 = vpack.c.b16 %v858, %v856
      %v885 = vpack.c.b16 %v859, %v857
      %v886 = vpack.c.b16 %v862, %v860
      %v887 = vpack.c.b16 %v863, %v861
      %v888 = vpack.c.b16 %v866, %v864
      %v889 = vpack.c.b16 %v867, %v865
      %v890 = vpack.c.b16 %v870, %v868
      %v891 = vpack.c.b16 %v871, %v869
      %v892 = vpack.c.b16 %v874, %v872
      %v893 = vpack.c.b16 %v875, %v873
      %v894 = vpack.c.b16 %v878, %v876
      %v895 = vpack.c.b16 %v879, %v877
      %912 = vmatprep.subr.bf16.mxu0 0
      %913 = vmatpush1.bf16.msra.mxu0 %v752
      %914 = vmatprep.subr.bf16.mxu0 0
      %915 = vmatpush1.bf16.msra.mxu0 %v753
      %916 = vmatprep.subr.bf16.mxu0 0
      %917 = vmatpush1.bf16.msra.mxu0 %v754
      %918 = vmatprep.subr.bf16.mxu0 0
      %919 = vmatpush1.bf16.msra.mxu0 %v755
      %920 = vmatprep.subr.bf16.mxu0 0
      %921 = vmatpush1.bf16.msra.mxu0 %v756
      %922 = vmatprep.subr.bf16.mxu0 0
      %923 = vmatpush1.bf16.msra.mxu0 %v757
      %924 = vmatprep.subr.bf16.mxu0 0
      %925 = vmatpush1.bf16.msra.mxu0 %v758
      %926 = vmatprep.subr.bf16.mxu0 0
      %927 = vmatpush1.bf16.msra.mxu0 %v759
      %928 = vmatprep.subr.bf16.mxu0 0
      %929 = vmatpush1.bf16.msra.mxu0 %v760
      %930 = vmatprep.subr.bf16.mxu0 0
      %931 = vmatpush1.bf16.msra.mxu0 %v761
      %932 = vmatprep.subr.bf16.mxu0 0
      %933 = vmatpush1.bf16.msra.mxu0 %v762
      %934 = vmatprep.subr.bf16.mxu0 0
      %935 = vmatpush1.bf16.msra.mxu0 %v763
      %936 = vmatprep.subr.bf16.mxu0 0
      %937 = vmatpush1.bf16.msra.mxu0 %v764
      %938 = vmatprep.subr.bf16.mxu0 0
      %939 = vmatpush1.bf16.msra.mxu0 %v765
      %940 = vmatprep.subr.bf16.mxu0 0
      %941 = vmatpush1.bf16.msra.mxu0 %v766
      %942 = vmatprep.subr.bf16.mxu0 0
      %943 = vmatpush1.bf16.msra.mxu0 %v767
      %944 = vmatprep.mubr.bf16.mxu0 %v881
      %945 = vmatmul.mubr.bf16.gmra.mrb[0].mxu0 %v880
      %v946 = vpop.f32.mrb[0].mxu0
      %v947 = vadd.f32 0.0, %v946
      %v948 = vpop.f32.mrb[0].mxu0
      %v949 = vpop.f32.mrb[0].mxu0
      %v950 = vadd.f32 0.0, %v949
      %v951 = vpop.f32.mrb[0].mxu0
      %952 = vmatprep.mubr.bf16.mxu0 %v883
      %953 = vmatmul.mubr.bf16.gmra.mrb[0].mxu0 %v882
      %v954 = vpop.f32.mrb[0].mxu0
      %v955 = vadd.f32 0.0, %v954
      %v956 = vpop.f32.mrb[0].mxu0
      %v957 = vpop.f32.mrb[0].mxu0
      %v958 = vadd.f32 0.0, %v957
      %v959 = vpop.f32.mrb[0].mxu0
      %960 = vmatprep.mubr.bf16.mxu0 %v885
      %961 = vmatmul.mubr.bf16.gmra.mrb[0].mxu0 %v884
      %v962 = vpop.f32.mrb[0].mxu0
      %v963 = vadd.f32 0.0, %v962
      %v964 = vpop.f32.mrb[0].mxu0
      %v965 = vpop.f32.mrb[0].mxu0
      %v966 = vadd.f32 0.0, %v965
      %v967 = vpop.f32.mrb[0].mxu0
      %968 = vmatprep.mubr.bf16.mxu0 %v887
      %969 = vmatmul.mubr.bf16.gmra.mrb[0].mxu0 %v886
      %v970 = vpop.f32.mrb[0].mxu0
      %v971 = vadd.f32 0.0, %v970
      %v972 = vpop.f32.mrb[0].mxu0
      %v973 = vpop.f32.mrb[0].mxu0
      %v974 = vadd.f32 0.0, %v973
      %v975 = vpop.f32.mrb[0].mxu0
      %976 = vmatprep.mubr.bf16.mxu0 %v889
      %977 = vmatmul.mubr.bf16.gmra.mrb[0].mxu0 %v888
      %v978 = vpop.f32.mrb[0].mxu0
      %v979 = vadd.f32 0.0, %v978
      %v980 = vpop.f32.mrb[0].mxu0
      %v981 = vpop.f32.mrb[0].mxu0
      %v982 = vadd.f32 0.0, %v981
      %v983 = vpop.f32.mrb[0].mxu0
      %984 = vmatprep.mubr.bf16.mxu0 %v891
      %985 = vmatmul.mubr.bf16.gmra.mrb[0].mxu0 %v890
      %v986 = vpop.f32.mrb[0].mxu0
      %v987 = vadd.f32 0.0, %v986
      %v988 = vpop.f32.mrb[0].mxu0
      %v989 = vpop.f32.mrb[0].mxu0
      %v990 = vadd.f32 0.0, %v989
      %v991 = vpop.f32.mrb[0].mxu0
      %992 = vmatprep.mubr.bf16.mxu0 %v893
      %993 = vmatmul.mubr.bf16.gmra.mrb[0].mxu0 %v892
      %v994 = vpop.f32.mrb[0].mxu0
      %v995 = vadd.f32 0.0, %v994
      %v996 = vpop.f32.mrb[0].mxu0
      %v997 = vpop.f32.mrb[0].mxu0
      %v998 = vadd.f32 0.0, %v997
      %v999 = vpop.f32.mrb[0].mxu0
      %1000 = vmatprep.mubr.bf16.mxu0 %v895
      %1001 = vmatmul.mubr.bf16.gmra.mrb[0].mxu0 %v894
      %v1002 = vpop.f32.mrb[0].mxu0
      %v1003 = vadd.f32 0.0, %v1002
      %v1004 = vpop.f32.mrb[0].mxu0
      %v1005 = vpop.f32.mrb[0].mxu0
      %v1006 = vadd.f32 0.0, %v1005
      %v1007 = vpop.f32.mrb[0].mxu0
      %1008 = vdwg.mxu0
      %v1009 = vadd.f32 %v816, %v947
      %v1010 = vadd.f32 %v817, %v950
      %v1011 = vadd.f32 %v818, %v955
      %v1012 = vadd.f32 %v819, %v958
      %v1013 = vadd.f32 %v820, %v963
      %v1014 = vadd.f32 %v821, %v966
      %v1015 = vadd.f32 %v822, %v971
      %v1016 = vadd.f32 %v823, %v974
      %v1017 = vadd.f32 %v824, %v979
      %v1018 = vadd.f32 %v825, %v982
      %v1019 = vadd.f32 %v826, %v987
      %v1020 = vadd.f32 %v827, %v990
      %v1021 = vadd.f32 %v828, %v995
      %v1022 = vadd.f32 %v829, %v998
      %v1023 = vadd.f32 %v830, %v1003
      %v1024 = vadd.f32 %v831, %v1006
      %1025 = vst [vmem:[#allocation2] sm:$0xff] %v1009
      %1026 = vst [vmem:[#allocation2 + $0x8] sm:$0xff] %v1010
      %1027 = vst [vmem:[#allocation2 + $0x10] sm:$0xff] %v1011
      %1028 = vst [vmem:[#allocation2 + $0x18] sm:$0xff] %v1012
      %1029 = vst [vmem:[#allocation2 + $0x20] sm:$0xff] %v1013
      %1030 = vst [vmem:[#allocation2 + $0x28] sm:$0xff] %v1014
      %1031 = vst [vmem:[#allocation2 + $0x30] sm:$0xff] %v1015
      %1032 = vst [vmem:[#allocation2 + $0x38] sm:$0xff] %v1016
      %1033 = vst [vmem:[#allocation2 + $0x40] sm:$0xff] %v1017
      %1034 = vst [vmem:[#allocation2 + $0x48] sm:$0xff] %v1018
      %1035 = vst [vmem:[#allocation2 + $0x50] sm:$0xff] %v1019
      %1036 = vst [vmem:[#allocation2 + $0x58] sm:$0xff] %v1020
      %1037 = vst [vmem:[#allocation2 + $0x60] sm:$0xff] %v1021
      %1038 = vst [vmem:[#allocation2 + $0x68] sm:$0xff] %v1022
      %1039 = vst [vmem:[#allocation2 + $0x70] sm:$0xff] %v1023
      %1040 = vst [vmem:[#allocation2 + $0x78] sm:$0xff] %v1024
      // Predicated region
      $region49: #{mxmnet_forward.15} parent=43 // pred_check
        %p1041 = pneg %p372
      $region50: #{mxmnet_forward.15} parent=43 // pred_check_branch
        %1043 = sbr.rel (%p1041) target = $region52
      $region51: #{mxmnet_forward.15} parent=43 // pred_region
        %v1044 = vld [vmem:[#allocation2] sm:$0xff]
        %v1045 = vld [vmem:[#allocation2 + $0x8] sm:$0xff]
        %v1046 = vld [vmem:[#allocation2 + $0x10] sm:$0xff]
        %v1047 = vld [vmem:[#allocation2 + $0x18] sm:$0xff]
        %v1048 = vld [vmem:[#allocation2 + $0x20] sm:$0xff]
        %v1049 = vld [vmem:[#allocation2 + $0x28] sm:$0xff]
        %v1050 = vld [vmem:[#allocation2 + $0x30] sm:$0xff]
        %v1051 = vld [vmem:[#allocation2 + $0x38] sm:$0xff]
        %v1052 = vld [vmem:[#allocation2 + $0x40] sm:$0xff]
        %v1053 = vld [vmem:[#allocation2 + $0x48] sm:$0xff]
        %v1054 = vld [vmem:[#allocation2 + $0x50] sm:$0xff]
        %v1055 = vld [vmem:[#allocation2 + $0x58] sm:$0xff]
        %v1056 = vld [vmem:[#allocation2 + $0x60] sm:$0xff]
        %v1057 = vld [vmem:[#allocation2 + $0x68] sm:$0xff]
        %v1058 = vld [vmem:[#allocation2 + $0x70] sm:$0xff]
        %v1059 = vld [vmem:[#allocation2 + $0x78] sm:$0xff]
        %v1060 = vld [vmem:[%s363] sm:$0xf]
        %v1061 = vld [vmem:[%s363 + $0x4] sm:$0xf]
        %v1062 = vld [vmem:[%s363 + $0x8] sm:$0xf]
        %v1063 = vld [vmem:[%s363 + $0xc] sm:$0xf]
        %v1064 = vld [vmem:[%s363 + $0x10] sm:$0xf]
        %v1065 = vld [vmem:[%s363 + $0x14] sm:$0xf]
        %v1066 = vld [vmem:[%s363 + $0x18] sm:$0xf]
        %v1067 = vld [vmem:[%s363 + $0x1c] sm:$0xf]
        %v1068 = vld [vmem:[%s363 + $0x20] sm:$0xf]
        %v1069 = vld [vmem:[%s363 + $0x24] sm:$0xf]
        %v1070 = vld [vmem:[%s363 + $0x28] sm:$0xf]
        %v1071 = vld [vmem:[%s363 + $0x2c] sm:$0xf]
        %v1072 = vld [vmem:[%s363 + $0x30] sm:$0xf]
        %v1073 = vld [vmem:[%s363 + $0x34] sm:$0xf]
        %v1074 = vld [vmem:[%s363 + $0x38] sm:$0xf]
        %v1075 = vld [vmem:[%s363 + $0x3c] sm:$0xf]
        %v1076 = vunpack.c.l.bf16 %v1060
        %v1077 = vunpack.c.l.bf16 %v1061
        %v1078 = vunpack.c.l.bf16 %v1062
        %v1079 = vunpack.c.l.bf16 %v1063
        %v1080 = vunpack.c.l.bf16 %v1064
        %v1081 = vunpack.c.l.bf16 %v1065
        %v1082 = vunpack.c.l.bf16 %v1066
        %v1083 = vunpack.c.l.bf16 %v1067
        %v1084 = vunpack.c.l.bf16 %v1068
        %v1085 = vunpack.c.l.bf16 %v1069
        %v1086 = vunpack.c.l.bf16 %v1070
        %v1087 = vunpack.c.l.bf16 %v1071
        %v1088 = vunpack.c.l.bf16 %v1072
        %v1089 = vunpack.c.l.bf16 %v1073
        %v1090 = vunpack.c.l.bf16 %v1074
        %v1091 = vunpack.c.l.bf16 %v1075
        %v1092 = vadd.f32 %v1044, %v1076
        %v1093 = vadd.f32 %v1045, %v1077
        %v1094 = vadd.f32 %v1046, %v1078
        %v1095 = vadd.f32 %v1047, %v1079
        %v1096 = vadd.f32 %v1048, %v1080
        %v1097 = vadd.f32 %v1049, %v1081
        %v1098 = vadd.f32 %v1050, %v1082
        %v1099 = vadd.f32 %v1051, %v1083
        %v1100 = vadd.f32 %v1052, %v1084
        %v1101 = vadd.f32 %v1053, %v1085
        %v1102 = vadd.f32 %v1054, %v1086
        %v1103 = vadd.f32 %v1055, %v1087
        %v1104 = vadd.f32 %v1056, %v1088
        %v1105 = vadd.f32 %v1057, %v1089
        %v1106 = vadd.f32 %v1058, %v1090
        %v1107 = vadd.f32 %v1059, %v1091
        %v1108 = vpack.c.bf16 %v1093, %v1092
        %v1109 = vpack.c.bf16 %v1095, %v1094
        %v1110 = vpack.c.bf16 %v1097, %v1096
        %v1111 = vpack.c.bf16 %v1099, %v1098
        %v1112 = vpack.c.bf16 %v1101, %v1100
        %v1113 = vpack.c.bf16 %v1103, %v1102
        %v1114 = vpack.c.bf16 %v1105, %v1104
        %v1115 = vpack.c.bf16 %v1107, %v1106
        %v1124 = vunpack.c.l.b16 %v1108
        %v1125 = vunpack.c.h.b16 %v1108
        %v1126 = vunpack.c.l.b16 %v1109
        %v1127 = vunpack.c.h.b16 %v1109
        %v1128 = vunpack.c.l.b16 %v1110
        %v1129 = vunpack.c.h.b16 %v1110
        %v1130 = vunpack.c.l.b16 %v1111
        %v1131 = vunpack.c.h.b16 %v1111
        %v1132 = vunpack.c.l.b16 %v1112
        %v1133 = vunpack.c.h.b16 %v1112
        %v1134 = vunpack.c.l.b16 %v1113
        %v1135 = vunpack.c.h.b16 %v1113
        %v1136 = vunpack.c.l.b16 %v1114
        %v1137 = vunpack.c.h.b16 %v1114
        %v1138 = vunpack.c.l.b16 %v1115
        %v1139 = vunpack.c.h.b16 %v1115
        %v1140 = vpack.c.b16 %v1124, %v1124
        %v1141 = vpack.c.b16 %v1125, %v1125
        %v1142 = vpack.c.b16 %v1126, %v1126
        %v1143 = vpack.c.b16 %v1127, %v1127
        %v1144 = vpack.c.b16 %v1128, %v1128
        %v1145 = vpack.c.b16 %v1129, %v1129
        %v1146 = vpack.c.b16 %v1130, %v1130
        %v1147 = vpack.c.b16 %v1131, %v1131
        %v1148 = vpack.c.b16 %v1132, %v1132
        %v1149 = vpack.c.b16 %v1133, %v1133
        %v1150 = vpack.c.b16 %v1134, %v1134
        %v1151 = vpack.c.b16 %v1135, %v1135
        %v1152 = vpack.c.b16 %v1136, %v1136
        %v1153 = vpack.c.b16 %v1137, %v1137
        %v1154 = vpack.c.b16 %v1138, %v1138
        %v1155 = vpack.c.b16 %v1139, %v1139
        %1172 = vst [vmem:[%s369] sm:$0xf] %v1140
        %1173 = vst [vmem:[%s369 + $0x4] sm:$0xf] %v1141
        %1174 = vst [vmem:[%s369 + $0x8] sm:$0xf] %v1142
        %1175 = vst [vmem:[%s369 + $0xc] sm:$0xf] %v1143
        %1176 = vst [vmem:[%s369 + $0x10] sm:$0xf] %v1144
        %1177 = vst [vmem:[%s369 + $0x14] sm:$0xf] %v1145
        %1178 = vst [vmem:[%s369 + $0x18] sm:$0xf] %v1146
        %1179 = vst [vmem:[%s369 + $0x1c] sm:$0xf] %v1147
        %1180 = vst [vmem:[%s369 + $0x20] sm:$0xf] %v1148
        %1181 = vst [vmem:[%s369 + $0x24] sm:$0xf] %v1149
        %1182 = vst [vmem:[%s369 + $0x28] sm:$0xf] %v1150
        %1183 = vst [vmem:[%s369 + $0x2c] sm:$0xf] %v1151
        %1184 = vst [vmem:[%s369 + $0x30] sm:$0xf] %v1152
        %1185 = vst [vmem:[%s369 + $0x34] sm:$0xf] %v1153
        %1186 = vst [vmem:[%s369 + $0x38] sm:$0xf] %v1154
        %1187 = vst [vmem:[%s369 + $0x3c] sm:$0xf] %v1155
      $region52: #{mxmnet_forward.15} parent=43 // pred_fallthru
        _
      %s1188 = smul.u32 16, %s21
      %p1189 = scmp.lt.s32.totalorder %s1188, 31
      %s1190 = scalar_select %p1189, %s1188, 31
      %s1191 = smul.addr %s1190, 4
      %s1192 = scalar_lea.vmem %s6, %s1191
      // Predicated region
      $region53: #{mxmnet_forward.15} parent=43 // pred_check
        %p1193 = pneg %p197
      $region54: #{mxmnet_forward.15} parent=43 // pred_check_branch
        %1195 = sbr.rel (%p1193) target = $region56
      $region55: #{mxmnet_forward.15} parent=43 // pred_region
        %s1196 = smul.u32 16, %s21
      $region56: #{mxmnet_forward.15} parent=43 // pred_fallthru
        _
    $region44: #{mxmnet_forward.15} parent=5 // pred_fallthru
      _
    %p1197 = scmp.le.s32.totalorder 2, %s12
    // Predicated region
    $region57: #{mxmnet_forward.15} parent=5 // pred_check
      %p1198 = pneg %p1197
    $region58: #{mxmnet_forward.15} parent=5 // pred_check_branch
      %1200 = sbr.rel (%p1198) target = $region60
    $region59: #{mxmnet_forward.15} parent=5 // pred_region
      %s1201 = ssub.s32 %s12, 2
      // Predicated region
      $region61: #{mxmnet_forward.15} parent=59 // pred_check
        %p1202 = pneg %p203
      $region62: #{mxmnet_forward.15} parent=59 // pred_check_branch
        %1204 = sbr.rel (%p1202) target = $region64
      $region63: #{mxmnet_forward.15} parent=59 // pred_region
        %s1205 = smul.u32 16, %s23
        %p1206 = scmp.lt.s32.totalorder %s1205, 31
        %s1207 = scalar_select %p1206, %s1205, 31
        %s1208 = smul.addr %s1207, 4
        %s1209 = scalar_lea.vmem %s6, %s1208
      $region64: #{mxmnet_forward.15} parent=59 // pred_fallthru
        _
    $region60: #{mxmnet_forward.15} parent=5 // pred_fallthru
      _
  $region6: #{mxmnet_forward.15} parent=0 // loop_footer
    %s16 = sadd.s32 1, %s12
  $region7: #{mxmnet_forward.15} parent=0 // loop_footer_branch
    %11 = sbr.rel target = $region3
  $region8: #{mxmnet_forward.15} parent=0 // loop_exit
    _

// kernel: mxmnet_forward.17
$region0: #{mxmnet_forward.17}
  #allocation0 [shape = 'u32[]', space=smem, size = 0x4, offset = 0x4, fixed_abs, tag = 'smem constant byte address 0x4 - core index']
  #allocation1 [shape = 'u32[144,128]{1,0:T(1,128)}', space=vmem, size = 0x12000, scoped, tag = 'internal scratch']
  %s0 = inlined_call_operand.vmem [shape: bf16[256,128], index: 0, kind: input, shape index: {}]
  %s1 = inlined_call_operand.vmem [shape: bf16[128,128], index: 1, kind: input, shape index: {}]
  %s2 = inlined_call_operand.vmem [shape: f32[1,128], index: 2, kind: input, shape index: {}]
  %s3 = inlined_call_operand.vmem [shape: f32[1,128], index: 3, kind: input, shape index: {}]
  %s4 = inlined_call_operand.vmem [shape: f32[256,1], index: 4, kind: input, shape index: {}, may-alias: {4,5}]
  %s5 = inlined_call_operand.vmem [shape: f32[256,1], index: 5, kind: output, shape index: {}, may-alias: {4,5}]
  %s6 = sld [smem:[#allocation0]]
  $region53: #{mxmnet_forward.17} parent=0
    _
  %s8 = ssub.s32 1, %s6
  %s9 = scalar_select 0, %s8, %s6
  loop: start=0, step=1, limit=4
  $region2: #{mxmnet_forward.17} parent=0 // loop_pre_header
    _
  $region3: #{mxmnet_forward.17} parent=0 // loop_header
    %s11 = sphi 0, %s15
    %p12 = scmp.ge.s32.totalorder %s11, 4
    %s21 = sphi 0, %s23
    %s24 = sphi 0, %s21
    %s25 = sphi 0, %s24
    %s41 = sphi 0, %s25
    %s45 = sphi 0, %s45
    %s47 = sphi 0, %s45
    %s48 = sphi 0, %s47
    %s62 = sphi 0, %s48
    %s66 = sphi 0, %s66
    %s68 = sphi 0, %s66
    %s69 = sphi 0, %s68
    %s83 = sphi 0, %s69
    %s87 = sphi 0, %s87
    %s89 = sphi 0, %s87
    %s90 = sphi 0, %s89
    %s104 = sphi 0, %s90
    %s110 = sphi 0, %s112
    %s113 = sphi 0, %s110
    %s114 = sphi 0, %s113
    %s130 = sphi 0, %s114
    %s136 = sphi 0, %s138
    %s139 = sphi 0, %s136
    %s140 = sphi 0, %s139
    %s156 = sphi 0, %s140
  $region4: #{mxmnet_forward.17} parent=0 // loop_header_branch
    %14 = sbr.rel (%p12) target = $region8
  $region5: #{mxmnet_forward.17} parent=0 // loop_body
    %s16 = ssub.s32 %s11, 1
    %s17 = ssub.s32 %s11, 2
    %s18 = sadd.s32 %s11, 1
    %s19 = ssub.s32 %s11, %s18
    %p20 = scmp.eq.s32.totalorder %s19, 0
    %s22 = sadd.s32 %s21, 1
    %s23 = scalar_select %p20, %s21, %s22
    %p26 = pneg %p20
    %p27 = scmp.eq.s32.totalorder %s11, 1
    %p28 = por %p26, %p27
    %p29 = scmp.ne.s32.totalorder %s21, %s24
    %p30 = scmp.eq.s32.totalorder %s11, 0
    %p31 = por %p29, %p30
    %p32 = scmp.ne.s32.totalorder %s21, %s24
    %p33 = scmp.eq.s32.totalorder %s16, 1
    %p34 = por %p32, %p33
    %p35 = scmp.ne.s32.totalorder %s24, %s25
    %p36 = scmp.eq.s32.totalorder %s16, 0
    %p37 = por %p35, %p36
    %p38 = scmp.ne.s32.totalorder %s24, %s25
    %p39 = scmp.eq.s32.totalorder %s17, 1
    %p40 = por %p38, %p39
    %p42 = scmp.ne.s32.totalorder %s25, %s41
    %p43 = scmp.eq.s32.totalorder %s17, 0
    %p44 = por %p42, %p43
    %s46 = sadd.s32 %s45, 1
    %p49 = scmp.eq.s32.totalorder %s11, 1
    %p50 = scmp.ne.s32.totalorder %s45, %s47
    %p51 = scmp.eq.s32.totalorder %s11, 0
    %p52 = por %p50, %p51
    %p53 = scmp.ne.s32.totalorder %s45, %s47
    %p54 = scmp.eq.s32.totalorder %s16, 1
    %p55 = por %p53, %p54
    %p56 = scmp.ne.s32.totalorder %s47, %s48
    %p57 = scmp.eq.s32.totalorder %s16, 0
    %p58 = por %p56, %p57
    %p59 = scmp.ne.s32.totalorder %s47, %s48
    %p60 = scmp.eq.s32.totalorder %s17, 1
    %p61 = por %p59, %p60
    %p63 = scmp.ne.s32.totalorder %s48, %s62
    %p64 = scmp.eq.s32.totalorder %s17, 0
    %p65 = por %p63, %p64
    %s67 = sadd.s32 %s66, 1
    %p70 = scmp.eq.s32.totalorder %s11, 1
    %p71 = scmp.ne.s32.totalorder %s66, %s68
    %p72 = scmp.eq.s32.totalorder %s11, 0
    %p73 = por %p71, %p72
    %p74 = scmp.ne.s32.totalorder %s66, %s68
    %p75 = scmp.eq.s32.totalorder %s16, 1
    %p76 = por %p74, %p75
    %p77 = scmp.ne.s32.totalorder %s68, %s69
    %p78 = scmp.eq.s32.totalorder %s16, 0
    %p79 = por %p77, %p78
    %p80 = scmp.ne.s32.totalorder %s68, %s69
    %p81 = scmp.eq.s32.totalorder %s17, 1
    %p82 = por %p80, %p81
    %p84 = scmp.ne.s32.totalorder %s69, %s83
    %p85 = scmp.eq.s32.totalorder %s17, 0
    %p86 = por %p84, %p85
    %s88 = sadd.s32 %s87, 1
    %p91 = scmp.eq.s32.totalorder %s11, 1
    %p92 = scmp.ne.s32.totalorder %s87, %s89
    %p93 = scmp.eq.s32.totalorder %s11, 0
    %p94 = por %p92, %p93
    %p95 = scmp.ne.s32.totalorder %s87, %s89
    %p96 = scmp.eq.s32.totalorder %s16, 1
    %p97 = por %p95, %p96
    %p98 = scmp.ne.s32.totalorder %s89, %s90
    %p99 = scmp.eq.s32.totalorder %s16, 0
    %p100 = por %p98, %p99
    %p101 = scmp.ne.s32.totalorder %s89, %s90
    %p102 = scmp.eq.s32.totalorder %s17, 1
    %p103 = por %p101, %p102
    %p105 = scmp.ne.s32.totalorder %s90, %s104
    %p106 = scmp.eq.s32.totalorder %s17, 0
    %p107 = por %p105, %p106
    %s108 = ssub.s32 %s11, %s18
    %p109 = scmp.eq.s32.totalorder %s108, 0
    %s111 = sadd.s32 %s110, 1
    %s112 = scalar_select %p109, %s110, %s111
    %p115 = pneg %p109
    %p116 = scmp.eq.s32.totalorder %s11, 1
    %p117 = por %p115, %p116
    %p118 = scmp.ne.s32.totalorder %s110, %s113
    %p119 = scmp.eq.s32.totalorder %s11, 0
    %p120 = por %p118, %p119
    %p121 = scmp.ne.s32.totalorder %s110, %s113
    %p122 = scmp.eq.s32.totalorder %s16, 1
    %p123 = por %p121, %p122
    %p124 = scmp.ne.s32.totalorder %s113, %s114
    %p125 = scmp.eq.s32.totalorder %s16, 0
    %p126 = por %p124, %p125
    %p127 = scmp.ne.s32.totalorder %s113, %s114
    %p128 = scmp.eq.s32.totalorder %s17, 1
    %p129 = por %p127, %p128
    %p131 = scmp.ne.s32.totalorder %s114, %s130
    %p132 = scmp.eq.s32.totalorder %s17, 0
    %p133 = por %p131, %p132
    %s134 = ssub.s32 %s11, %s18
    %p135 = scmp.eq.s32.totalorder %s134, 0
    %s137 = sadd.s32 %s136, 1
    %s138 = scalar_select %p135, %s136, %s137
    %p141 = pneg %p135
    %p142 = scmp.eq.s32.totalorder %s11, 1
    %p143 = por %p141, %p142
    %p144 = scmp.ne.s32.totalorder %s136, %s139
    %p145 = scmp.eq.s32.totalorder %s11, 0
    %p146 = por %p144, %p145
    %p147 = scmp.ne.s32.totalorder %s136, %s139
    %p148 = scmp.eq.s32.totalorder %s16, 1
    %p149 = por %p147, %p148
    %p150 = scmp.ne.s32.totalorder %s139, %s140
    %p151 = scmp.eq.s32.totalorder %s16, 0
    %p152 = por %p150, %p151
    %p153 = scmp.ne.s32.totalorder %s139, %s140
    %p154 = scmp.eq.s32.totalorder %s17, 1
    %p155 = por %p153, %p154
    %p157 = scmp.ne.s32.totalorder %s140, %s156
    %p158 = scmp.eq.s32.totalorder %s17, 0
    %p159 = por %p157, %p158
    %p160 = scmp.le.s32.totalorder 1, %s11
    %p161 = scmp.lt.s32.totalorder %s11, 3
    %p162 = pnand %p160, %p161
    %p163 = pneg %p162
    // Predicated region
    $region9: #{mxmnet_forward.17} parent=5 // pred_check
      _
    $region10: #{mxmnet_forward.17} parent=5 // pred_check_branch
      %165 = sbr.rel (%p162) target = $region12
    $region11: #{mxmnet_forward.17} parent=5 // pred_region
      %s166 = ssub.s32 %s11, 1
      // Predicated region
      $region13: #{mxmnet_forward.17} parent=11 // pred_check
        %p167 = pneg %p58
      $region14: #{mxmnet_forward.17} parent=11 // pred_check_branch
        %169 = sbr.rel (%p167) target = $region16
      $region15: #{mxmnet_forward.17} parent=11 // pred_region
        _
      $region16: #{mxmnet_forward.17} parent=11 // pred_fallthru
        _
      // Predicated region
      $region17: #{mxmnet_forward.17} parent=11 // pred_check
        %p170 = pneg %p79
      $region18: #{mxmnet_forward.17} parent=11 // pred_check_branch
        %172 = sbr.rel (%p170) target = $region20
      $region19: #{mxmnet_forward.17} parent=11 // pred_region
        _
      $region20: #{mxmnet_forward.17} parent=11 // pred_fallthru
        _
      // Predicated region
      $region21: #{mxmnet_forward.17} parent=11 // pred_check
        %p173 = pneg %p100
      $region22: #{mxmnet_forward.17} parent=11 // pred_check_branch
        %175 = sbr.rel (%p173) target = $region24
      $region23: #{mxmnet_forward.17} parent=11 // pred_region
        _
      $region24: #{mxmnet_forward.17} parent=11 // pred_fallthru
        _
    $region12: #{mxmnet_forward.17} parent=5 // pred_fallthru
      _
    %p176 = scmp.lt.s32.totalorder %s11, 2
    // Predicated region
    $region25: #{mxmnet_forward.17} parent=5 // pred_check
      %p177 = pneg %p176
    $region26: #{mxmnet_forward.17} parent=5 // pred_check_branch
      %179 = sbr.rel (%p177) target = $region28
    $region27: #{mxmnet_forward.17} parent=5 // pred_region
      // Predicated region
      $region29: #{mxmnet_forward.17} parent=27 // pred_check
        %p180 = pneg %p31
      $region30: #{mxmnet_forward.17} parent=27 // pred_check_branch
        %182 = sbr.rel (%p180) target = $region32
      $region31: #{mxmnet_forward.17} parent=27 // pred_region
        %s183 = smul.u32 16, %s11
        %p184 = scmp.lt.s32.totalorder %s183, 31
        %s185 = scalar_select %p184, %s183, 31
        %s186 = smul.addr %s185, 4
        %s187 = scalar_lea.vmem %s0, %s186
        %s188 = smul.u32 16, %s11
      $region32: #{mxmnet_forward.17} parent=27 // pred_fallthru
        _
      // Predicated region
      $region33: #{mxmnet_forward.17} parent=27 // pred_check
        %p189 = pneg %p120
      $region34: #{mxmnet_forward.17} parent=27 // pred_check_branch
        %191 = sbr.rel (%p189) target = $region36
      $region35: #{mxmnet_forward.17} parent=27 // pred_region
        %s192 = smul.u32 16, %s11
        %p193 = scmp.lt.s32.totalorder %s192, 31
        %s194 = scalar_select %p193, %s192, 31
        %s195 = smul.addr %s194, 8
        %s196 = scalar_lea.vmem %s4, %s195
        %s197 = smul.u32 16, %s11
      $region36: #{mxmnet_forward.17} parent=27 // pred_fallthru
        _
    $region28: #{mxmnet_forward.17} parent=5 // pred_fallthru
      _
    %p198 = scmp.le.s32.totalorder 1, %s11
    %p199 = scmp.lt.s32.totalorder %s11, 3
    %p200 = pnand %p198, %p199
    %p201 = pneg %p200
    // Predicated region
    $region37: #{mxmnet_forward.17} parent=5 // pred_check
      _
    $region38: #{mxmnet_forward.17} parent=5 // pred_check_branch
      %203 = sbr.rel (%p200) target = $region40
    $region39: #{mxmnet_forward.17} parent=5 // pred_region
      %s204 = ssub.s32 %s11, 1
      %s205 = smul.u32 16, %s16
      %p206 = scmp.lt.s32.totalorder %s205, 31
      %s207 = scalar_select %p206, %s205, 31
      %s208 = smul.addr %s207, 4
      %s209 = scalar_lea.vmem %s0, %s208
      %p210 = pneg %p37
      %p211 = pneg %p34
      %p212 = pneg %p58
      %p213 = pneg %p55
      %p214 = pneg %p79
      %p215 = pneg %p76
      %p216 = pneg %p100
      %p217 = pneg %p97
      %s218 = smul.u32 16, %s16
      %p219 = scmp.lt.s32.totalorder %s218, 31
      %s220 = scalar_select %p219, %s218, 31
      %s221 = smul.addr %s220, 8
      %s222 = scalar_lea.vmem %s4, %s221
      %p223 = pneg %p126
      %p224 = pneg %p123
      %p225 = pneg %p152
      %p226 = pneg %p149
      %s227 = smul.u32 16, %s16
      %p228 = scmp.lt.s32.totalorder %s227, 31
      %s229 = scalar_select %p228, %s227, 31
      %s230 = smul.addr %s229, 8
      %s231 = scalar_lea.vmem %s5, %s230
      %s232 = smul.u32 16, %s16
      %p233 = scmp.lt.s32.totalorder %s232, 31
      %s234 = scalar_select %p233, %s232, 31
      %s235 = smul.addr %s234, 4
      %s236 = scalar_lea.vmem %s0, %s235
      %s237 = smul.u32 16, %s16
      %s238 = smul.u32 16, %s16
      %p239 = scmp.lt.s32.totalorder %s238, 31
      %s240 = scalar_select %p239, %s238, 31
      %s241 = smul.addr %s240, 8
      %s242 = scalar_lea.vmem %s4, %s241
      %s243 = smul.u32 16, %s16
      %s244 = smul.u32 16, %s16
      %p245 = scmp.lt.s32.totalorder %s244, 31
      %s246 = scalar_select %p245, %s244, 31
      %s247 = smul.addr %s246, 8
      %s248 = scalar_lea.vmem %s5, %s247
      %s249 = smul.u32 16, %s16
      %v251 = vld [vmem:[%s236] sm:$0xf]
      %v252 = vld [vmem:[%s236 + $0x4] sm:$0xf]
      %v253 = vld [vmem:[%s236 + $0x8] sm:$0xf]
      %v254 = vld [vmem:[%s236 + $0xc] sm:$0xf]
      %v255 = vld [vmem:[%s236 + $0x10] sm:$0xf]
      %v256 = vld [vmem:[%s236 + $0x14] sm:$0xf]
      %v257 = vld [vmem:[%s236 + $0x18] sm:$0xf]
      %v258 = vld [vmem:[%s236 + $0x1c] sm:$0xf]
      %v259 = vld [vmem:[%s236 + $0x20] sm:$0xf]
      %v260 = vld [vmem:[%s236 + $0x24] sm:$0xf]
      %v261 = vld [vmem:[%s236 + $0x28] sm:$0xf]
      %v262 = vld [vmem:[%s236 + $0x2c] sm:$0xf]
      %v263 = vld [vmem:[%s236 + $0x30] sm:$0xf]
      %v264 = vld [vmem:[%s236 + $0x34] sm:$0xf]
      %v265 = vld [vmem:[%s236 + $0x38] sm:$0xf]
      %v266 = vld [vmem:[%s236 + $0x3c] sm:$0xf]
      %v267 = vld [vmem:[%s1] sm:$0xf]
      %v268 = vld [vmem:[%s1 + $0x4] sm:$0xf]
      %v269 = vld [vmem:[%s1 + $0x8] sm:$0xf]
      %v270 = vld [vmem:[%s1 + $0xc] sm:$0xf]
      %v271 = vld [vmem:[%s1 + $0x10] sm:$0xf]
      %v272 = vld [vmem:[%s1 + $0x14] sm:$0xf]
      %v273 = vld [vmem:[%s1 + $0x18] sm:$0xf]
      %v274 = vld [vmem:[%s1 + $0x1c] sm:$0xf]
      %v275 = vld [vmem:[%s1 + $0x20] sm:$0xf]
      %v276 = vld [vmem:[%s1 + $0x24] sm:$0xf]
      %v277 = vld [vmem:[%s1 + $0x28] sm:$0xf]
      %v278 = vld [vmem:[%s1 + $0x2c] sm:$0xf]
      %v279 = vld [vmem:[%s1 + $0x30] sm:$0xf]
      %v280 = vld [vmem:[%s1 + $0x34] sm:$0xf]
      %v281 = vld [vmem:[%s1 + $0x38] sm:$0xf]
      %v282 = vld [vmem:[%s1 + $0x3c] sm:$0xf]
      %v283 = vld [vmem:[%s2] sm:$0x1]
      %v285 = vlaneseq
      %v286 = vshrl.u32 %v285, 7
      %v287 = vsub.s32 0, %v286
      %v288 = vrot.slane %v283, %v287
      %v306 = vunpack.c.l.b16 %v251
      %v307 = vunpack.c.l.b16 %v252
      %v308 = vunpack.c.l.b16 %v253
      %v309 = vunpack.c.l.b16 %v254
      %v310 = vunpack.c.l.b16 %v255
      %v311 = vunpack.c.l.b16 %v256
      %v312 = vunpack.c.l.b16 %v257
      %v313 = vunpack.c.l.b16 %v258
      %v314 = vunpack.c.l.b16 %v259
      %v315 = vunpack.c.l.b16 %v260
      %v316 = vunpack.c.l.b16 %v261
      %v317 = vunpack.c.l.b16 %v262
      %v318 = vunpack.c.l.b16 %v263
      %v319 = vunpack.c.l.b16 %v264
      %v320 = vunpack.c.l.b16 %v265
      %v321 = vunpack.c.l.b16 %v266
      %v322 = vpack.c.b16 %v307, %v306
      %v323 = vpack.c.b16 %v309, %v308
      %v324 = vpack.c.b16 %v311, %v310
      %v325 = vpack.c.b16 %v313, %v312
      %v326 = vpack.c.b16 %v315, %v314
      %v327 = vpack.c.b16 %v317, %v316
      %v328 = vpack.c.b16 %v319, %v318
      %v329 = vpack.c.b16 %v321, %v320
      %v354 = vunpack.c.l.b16 %v267
      %v355 = vunpack.c.l.b16 %v268
      %v356 = vunpack.c.l.b16 %v269
      %v357 = vunpack.c.l.b16 %v270
      %v358 = vunpack.c.l.b16 %v271
      %v359 = vunpack.c.l.b16 %v272
      %v360 = vunpack.c.l.b16 %v273
      %v361 = vunpack.c.l.b16 %v274
      %v362 = vunpack.c.l.b16 %v275
      %v363 = vunpack.c.l.b16 %v276
      %v364 = vunpack.c.l.b16 %v277
      %v365 = vunpack.c.l.b16 %v278
      %v366 = vunpack.c.l.b16 %v279
      %v367 = vunpack.c.l.b16 %v280
      %v368 = vunpack.c.l.b16 %v281
      %v369 = vunpack.c.l.b16 %v282
      %v370 = vpack.c.b16 %v355, %v354
      %v371 = vpack.c.b16 %v357, %v356
      %v372 = vpack.c.b16 %v359, %v358
      %v373 = vpack.c.b16 %v361, %v360
      %v374 = vpack.c.b16 %v363, %v362
      %v375 = vpack.c.b16 %v365, %v364
      %v376 = vpack.c.b16 %v367, %v366
      %v377 = vpack.c.b16 %v369, %v368
      %386 = vmatprep.subr.bf16.mxu0 0
      %387 = vmatpush1.bf16.msra.mxu0 %v370
      %388 = vmatprep.subr.bf16.mxu0 0
      %389 = vmatpush1.bf16.msra.mxu0 %v371
      %390 = vmatprep.subr.bf16.mxu0 0
      %391 = vmatpush1.bf16.msra.mxu0 %v372
      %392 = vmatprep.subr.bf16.mxu0 0
      %393 = vmatpush1.bf16.msra.mxu0 %v373
      %394 = vmatprep.subr.bf16.mxu0 0
      %395 = vmatpush1.bf16.msra.mxu0 %v374
      %396 = vmatprep.subr.bf16.mxu0 0
      %397 = vmatpush1.bf16.msra.mxu0 %v375
      %398 = vmatprep.subr.bf16.mxu0 0
      %399 = vmatpush1.bf16.msra.mxu0 %v376
      %400 = vmatprep.subr.bf16.mxu0 0
      %401 = vmatpush1.bf16.msra.mxu0 %v377
      %402 = vmatprep.subr.bf16.mxu0 0
      %403 = vmatpush1.bf16.msra.mxu0 0
      %404 = vmatprep.subr.bf16.mxu0 0
      %405 = vmatpush1.bf16.msra.mxu0 0
      %406 = vmatprep.subr.bf16.mxu0 0
      %407 = vmatpush1.bf16.msra.mxu0 0
      %408 = vmatprep.subr.bf16.mxu0 0
      %409 = vmatpush1.bf16.msra.mxu0 0
      %410 = vmatprep.subr.bf16.mxu0 0
      %411 = vmatpush1.bf16.msra.mxu0 0
      %412 = vmatprep.subr.bf16.mxu0 0
      %413 = vmatpush1.bf16.msra.mxu0 0
      %414 = vmatprep.subr.bf16.mxu0 0
      %415 = vmatpush1.bf16.msra.mxu0 0
      %416 = vmatprep.subr.bf16.mxu0 0
      %417 = vmatpush1.bf16.msra.mxu0 0
      %418 = vmatprep.mubr.bf16.mxu0 0
      %419 = vmatmul.mubr.bf16.gmra.mrb[0].mxu0 %v322
      %v420 = vpop.f32.mrb[0].mxu0
      %v421 = vadd.f32 %v288, %v420
      %v422 = vpop.f32.mrb[0].mxu0
      %v423 = vpop.f32.mrb[0].mxu0
      %v424 = vadd.f32 %v288, %v423
      %v425 = vpop.f32.mrb[0].mxu0
      %426 = vmatprep.mubr.bf16.mxu0 0
      %427 = vmatmul.mubr.bf16.gmra.mrb[0].mxu0 %v323
      %v428 = vpop.f32.mrb[0].mxu0
      %v429 = vadd.f32 %v288, %v428
      %v430 = vpop.f32.mrb[0].mxu0
      %v431 = vpop.f32.mrb[0].mxu0
      %v432 = vadd.f32 %v288, %v431
      %v433 = vpop.f32.mrb[0].mxu0
      %434 = vmatprep.mubr.bf16.mxu0 0
      %435 = vmatmul.mubr.bf16.gmra.mrb[0].mxu0 %v324
      %v436 = vpop.f32.mrb[0].mxu0
      %v437 = vadd.f32 %v288, %v436
      %v438 = vpop.f32.mrb[0].mxu0
      %v439 = vpop.f32.mrb[0].mxu0
      %v440 = vadd.f32 %v288, %v439
      %v441 = vpop.f32.mrb[0].mxu0
      %442 = vmatprep.mubr.bf16.mxu0 0
      %443 = vmatmul.mubr.bf16.gmra.mrb[0].mxu0 %v325
      %v444 = vpop.f32.mrb[0].mxu0
      %v445 = vadd.f32 %v288, %v444
      %v446 = vpop.f32.mrb[0].mxu0
      %v447 = vpop.f32.mrb[0].mxu0
      %v448 = vadd.f32 %v288, %v447
      %v449 = vpop.f32.mrb[0].mxu0
      %450 = vmatprep.mubr.bf16.mxu0 0
      %451 = vmatmul.mubr.bf16.gmra.mrb[0].mxu0 %v326
      %v452 = vpop.f32.mrb[0].mxu0
      %v453 = vadd.f32 %v288, %v452
      %v454 = vpop.f32.mrb[0].mxu0
      %v455 = vpop.f32.mrb[0].mxu0
      %v456 = vadd.f32 %v288, %v455
      %v457 = vpop.f32.mrb[0].mxu0
      %458 = vmatprep.mubr.bf16.mxu0 0
      %459 = vmatmul.mubr.bf16.gmra.mrb[0].mxu0 %v327
      %v460 = vpop.f32.mrb[0].mxu0
      %v461 = vadd.f32 %v288, %v460
      %v462 = vpop.f32.mrb[0].mxu0
      %v463 = vpop.f32.mrb[0].mxu0
      %v464 = vadd.f32 %v288, %v463
      %v465 = vpop.f32.mrb[0].mxu0
      %466 = vmatprep.mubr.bf16.mxu0 0
      %467 = vmatmul.mubr.bf16.gmra.mrb[0].mxu0 %v328
      %v468 = vpop.f32.mrb[0].mxu0
      %v469 = vadd.f32 %v288, %v468
      %v470 = vpop.f32.mrb[0].mxu0
      %v471 = vpop.f32.mrb[0].mxu0
      %v472 = vadd.f32 %v288, %v471
      %v473 = vpop.f32.mrb[0].mxu0
      %474 = vmatprep.mubr.bf16.mxu0 0
      %475 = vmatmul.mubr.bf16.gmra.mrb[0].mxu0 %v329
      %v476 = vpop.f32.mrb[0].mxu0
      %v477 = vadd.f32 %v288, %v476
      %v478 = vpop.f32.mrb[0].mxu0
      %v479 = vpop.f32.mrb[0].mxu0
      %v480 = vadd.f32 %v288, %v479
      %v481 = vpop.f32.mrb[0].mxu0
      %482 = vdwg.mxu0
      %v483 = vmax.f32 %v421, 0.0
      %v484 = vmax.f32 %v424, 0.0
      %v485 = vmax.f32 %v429, 0.0
      %v486 = vmax.f32 %v432, 0.0
      %v487 = vmax.f32 %v437, 0.0
      %v488 = vmax.f32 %v440, 0.0
      %v489 = vmax.f32 %v445, 0.0
      %v490 = vmax.f32 %v448, 0.0
      %v491 = vmax.f32 %v453, 0.0
      %v492 = vmax.f32 %v456, 0.0
      %v493 = vmax.f32 %v461, 0.0
      %v494 = vmax.f32 %v464, 0.0
      %v495 = vmax.f32 %v469, 0.0
      %v496 = vmax.f32 %v472, 0.0
      %v497 = vmax.f32 %v477, 0.0
      %v498 = vmax.f32 %v480, 0.0
      %v499 = vld [vmem:[%s3] sm:$0x1]
      %v501 = vlaneseq
      %v502 = vshrl.u32 %v501, 7
      %v503 = vsub.s32 0, %v502
      %v504 = vrot.slane %v499, %v503
      %v506 = vmul.f32 %v483, %v504
      %v507 = vmul.f32 %v484, %v504
      %v508 = vmul.f32 %v485, %v504
      %v509 = vmul.f32 %v486, %v504
      %v510 = vmul.f32 %v487, %v504
      %v511 = vmul.f32 %v488, %v504
      %v512 = vmul.f32 %v489, %v504
      %v513 = vmul.f32 %v490, %v504
      %v514 = vmul.f32 %v491, %v504
      %v515 = vmul.f32 %v492, %v504
      %v516 = vmul.f32 %v493, %v504
      %v517 = vmul.f32 %v494, %v504
      %v518 = vmul.f32 %v495, %v504
      %v519 = vmul.f32 %v496, %v504
      %v520 = vmul.f32 %v497, %v504
      %v521 = vmul.f32 %v498, %v504
      %522 = vadd.xlane.f32.xlu0 %v506
      %v523 = vpop.xlane.xlu0 %522
      %524 = vadd.xlane.f32.xlu0 %v507
      %v525 = vpop.xlane.xlu0 %524
      %526 = vadd.xlane.f32.xlu0 %v508
      %v527 = vpop.xlane.xlu0 %526
      %528 = vadd.xlane.f32.xlu0 %v509
      %v529 = vpop.xlane.xlu0 %528
      %530 = vadd.xlane.f32.xlu0 %v510
      %v531 = vpop.xlane.xlu0 %530
      %532 = vadd.xlane.f32.xlu0 %v511
      %v533 = vpop.xlane.xlu0 %532
      %534 = vadd.xlane.f32.xlu0 %v512
      %v535 = vpop.xlane.xlu0 %534
      %536 = vadd.xlane.f32.xlu0 %v513
      %v537 = vpop.xlane.xlu0 %536
      %538 = vadd.xlane.f32.xlu0 %v514
      %v539 = vpop.xlane.xlu0 %538
      %540 = vadd.xlane.f32.xlu0 %v515
      %v541 = vpop.xlane.xlu0 %540
      %542 = vadd.xlane.f32.xlu0 %v516
      %v543 = vpop.xlane.xlu0 %542
      %544 = vadd.xlane.f32.xlu0 %v517
      %v545 = vpop.xlane.xlu0 %544
      %546 = vadd.xlane.f32.xlu0 %v518
      %v547 = vpop.xlane.xlu0 %546
      %548 = vadd.xlane.f32.xlu0 %v519
      %v549 = vpop.xlane.xlu0 %548
      %550 = vadd.xlane.f32.xlu0 %v520
      %v551 = vpop.xlane.xlu0 %550
      %552 = vadd.xlane.f32.xlu0 %v521
      %v553 = vpop.xlane.xlu0 %552
      %v554 = vld [vmem:[%s242] sm:$0xff]
      %v555 = vld [vmem:[%s242 + $0x8] sm:$0xff]
      %v556 = vld [vmem:[%s242 + $0x10] sm:$0xff]
      %v557 = vld [vmem:[%s242 + $0x18] sm:$0xff]
      %v558 = vld [vmem:[%s242 + $0x20] sm:$0xff]
      %v559 = vld [vmem:[%s242 + $0x28] sm:$0xff]
      %v560 = vld [vmem:[%s242 + $0x30] sm:$0xff]
      %v561 = vld [vmem:[%s242 + $0x38] sm:$0xff]
      %v562 = vld [vmem:[%s242 + $0x40] sm:$0xff]
      %v563 = vld [vmem:[%s242 + $0x48] sm:$0xff]
      %v564 = vld [vmem:[%s242 + $0x50] sm:$0xff]
      %v565 = vld [vmem:[%s242 + $0x58] sm:$0xff]
      %v566 = vld [vmem:[%s242 + $0x60] sm:$0xff]
      %v567 = vld [vmem:[%s242 + $0x68] sm:$0xff]
      %v568 = vld [vmem:[%s242 + $0x70] sm:$0xff]
      %v569 = vld [vmem:[%s242 + $0x78] sm:$0xff]
      %v570 = vadd.f32 %v554, %v523
      %v571 = vadd.f32 %v555, %v525
      %v572 = vadd.f32 %v556, %v527
      %v573 = vadd.f32 %v557, %v529
      %v574 = vadd.f32 %v558, %v531
      %v575 = vadd.f32 %v559, %v533
      %v576 = vadd.f32 %v560, %v535
      %v577 = vadd.f32 %v561, %v537
      %v578 = vadd.f32 %v562, %v539
      %v579 = vadd.f32 %v563, %v541
      %v580 = vadd.f32 %v564, %v543
      %v581 = vadd.f32 %v565, %v545
      %v582 = vadd.f32 %v566, %v547
      %v583 = vadd.f32 %v567, %v549
      %v584 = vadd.f32 %v568, %v551
      %v585 = vadd.f32 %v569, %v553
      %vm586 = vcmask 7168
      %587 = vst.msk [vmem:[%s248] sm:$0xff] %vm586, %v570
      %588 = vst.msk [vmem:[%s248 + $0x8] sm:$0xff] %vm586, %v571
      %589 = vst.msk [vmem:[%s248 + $0x10] sm:$0xff] %vm586, %v572
      %590 = vst.msk [vmem:[%s248 + $0x18] sm:$0xff] %vm586, %v573
      %591 = vst.msk [vmem:[%s248 + $0x20] sm:$0xff] %vm586, %v574
      %592 = vst.msk [vmem:[%s248 + $0x28] sm:$0xff] %vm586, %v575
      %593 = vst.msk [vmem:[%s248 + $0x30] sm:$0xff] %vm586, %v576
      %594 = vst.msk [vmem:[%s248 + $0x38] sm:$0xff] %vm586, %v577
      %595 = vst.msk [vmem:[%s248 + $0x40] sm:$0xff] %vm586, %v578
      %596 = vst.msk [vmem:[%s248 + $0x48] sm:$0xff] %vm586, %v579
      %597 = vst.msk [vmem:[%s248 + $0x50] sm:$0xff] %vm586, %v580
      %598 = vst.msk [vmem:[%s248 + $0x58] sm:$0xff] %vm586, %v581
      %599 = vst.msk [vmem:[%s248 + $0x60] sm:$0xff] %vm586, %v582
      %600 = vst.msk [vmem:[%s248 + $0x68] sm:$0xff] %vm586, %v583
      %601 = vst.msk [vmem:[%s248 + $0x70] sm:$0xff] %vm586, %v584
      %602 = vst.msk [vmem:[%s248 + $0x78] sm:$0xff] %vm586, %v585
      %s603 = smul.u32 16, %s16
      %p604 = scmp.lt.s32.totalorder %s603, 31
      %s605 = scalar_select %p604, %s603, 31
      %s606 = smul.addr %s605, 8
      %s607 = scalar_lea.vmem %s5, %s606
      // Predicated region
      $region41: #{mxmnet_forward.17} parent=39 // pred_check
        %p608 = pneg %p149
      $region42: #{mxmnet_forward.17} parent=39 // pred_check_branch
        %610 = sbr.rel (%p608) target = $region44
      $region43: #{mxmnet_forward.17} parent=39 // pred_region
        %s611 = smul.u32 16, %s16
      $region44: #{mxmnet_forward.17} parent=39 // pred_fallthru
        _
    $region40: #{mxmnet_forward.17} parent=5 // pred_fallthru
      _
    %p612 = scmp.le.s32.totalorder 2, %s11
    // Predicated region
    $region45: #{mxmnet_forward.17} parent=5 // pred_check
      %p613 = pneg %p612
    $region46: #{mxmnet_forward.17} parent=5 // pred_check_branch
      %615 = sbr.rel (%p613) target = $region48
    $region47: #{mxmnet_forward.17} parent=5 // pred_region
      %s616 = ssub.s32 %s11, 2
      // Predicated region
      $region49: #{mxmnet_forward.17} parent=47 // pred_check
        %p617 = pneg %p155
      $region50: #{mxmnet_forward.17} parent=47 // pred_check_branch
        %619 = sbr.rel (%p617) target = $region52
      $region51: #{mxmnet_forward.17} parent=47 // pred_region
        %s620 = smul.u32 16, %s17
        %p621 = scmp.lt.s32.totalorder %s620, 31
        %s622 = scalar_select %p621, %s620, 31
        %s623 = smul.addr %s622, 8
        %s624 = scalar_lea.vmem %s5, %s623
      $region52: #{mxmnet_forward.17} parent=47 // pred_fallthru
        _
    $region48: #{mxmnet_forward.17} parent=5 // pred_fallthru
      _
  $region6: #{mxmnet_forward.17} parent=0 // loop_footer
    %s15 = sadd.s32 1, %s11
  $region7: #{mxmnet_forward.17} parent=0 // loop_footer_branch
    %10 = sbr.rel target = $region3
  $region8: #{mxmnet_forward.17} parent=0 // loop_exit
    _

</llo_original>
